<compile_context>
chip_gen: v7x
topology: tpu7x:2x2x1
jax: 0.10.0
libtpu: 0.0.40
codegen_flags: <defaults>
</compile_context>

<pallas_src>
import numpy as np
import jax
import jax.numpy as jnp
from jax import lax
from jax.experimental import pallas as pl
from jax.experimental.pallas import tpu as pltpu

_EPS = 1e-5


# ------------------------- banded-weight construction ----------------------- #
def _banded_conv_weight(w_hwio, lhs_wblocks, w_out, stride, col_offset):
    """Fold the kernel's dx taps (and column stride) into a block-banded matrix.

    Returns (kh, lhs_wblocks*Cin, w_out*Cout) so that a conv row-slab
    (H1, lhs_wblocks*Cin) @ banded[dy] gives the dy-contribution of the conv in
    the lane-dense (H1, w_out*Cout) layout.  Negative column taps are remapped
    to the last lhs column block, which the caller guarantees to be zero.
    """
    kh, kw, cin, cout = w_hwio.shape
    sel = np.zeros((w_out, kw, lhs_wblocks), np.float32)
    for j in range(w_out):
        for dx in range(kw):
            col = j * stride + dx + col_offset
            if col < 0:
                col = lhs_wblocks - 1          # spare all-zero column block
            sel[j, dx, col] = 1.0
    bw = jnp.einsum("jdp,ydco->ypcjo", jnp.asarray(sel),
                    w_hwio.astype(jnp.float32))
    return bw.reshape(kh, lhs_wblocks * cin, w_out * cout).astype(jnp.bfloat16)


# ------------------------------ Pallas kernel ------------------------------- #
def _make_block_kernel(stride, has_proj, Bt, H1, W1, planes):
    nW = W1 * planes
    wpad = (W1 + 2) * planes
    inv_n = 1.0 / float(H1 * nW)

    def kernel(*refs):
        idx = 0
        phase_refs = refs[idx:idx + stride]; idx += stride     # padded-x row phases (bf16)
        w1_ref, g1_ref, b1_ref, w2_ref, g2_ref, b2_ref = refs[idx:idx + 6]; idx += 6
        if has_proj:
            wsc_ref, gsc_ref, bsc_ref = refs[idx:idx + 3]; idx += 3
        else:
            xid_ref = refs[idx]; idx += 1                      # unpadded lane-dense x
        out_ref = refs[idx]
        pad_ref = refs[idx + 1]                                # bf16 VMEM scratch (conv2 input)

        def gnorm(acc, g_ref, b_ref):
            # GroupNorm(1, C) == LayerNorm over (C, H, W) per sample.  Single
            # pass stats in f32; clamp var >= 0 (E[x^2]-E[x]^2 can cancel).
            mean = jnp.sum(acc) * inv_n
            var = jnp.maximum(jnp.sum(acc * acc) * inv_n - mean * mean, 0.0)
            return (acc - mean) * lax.rsqrt(var + _EPS) * g_ref[...] + b_ref[...]

        # Zero only the scratch *frame* (top/bottom pad row + the two trailing
        # pad column blocks); the interior [1:H1+1, :nW] is fully overwritten
        # for every sample below, so no full-slab clear is needed.
        zrow = jnp.zeros((Bt, 1, wpad), pad_ref.dtype)
        pad_ref[:, 0:1, :] = zrow
        pad_ref[:, H1 + 1:H1 + 2, :] = zrow
        pad_ref[:, :, nW:] = jnp.zeros((Bt, H1 + 2, wpad - nW), pad_ref.dtype)

        # TODO(synk): fold the Bt samples into the matmul M dimension
        #   ((Bt*H1, K) LHS, one MXU push per conv) once the bf16 value reshape
        #   across the sublane tile is guaranteed relayout-free; Bt samples per
        #   grid step already amortize the per-step pipeline overhead that
        #   dominated at these shapes.
        for b in range(Bt):            # static unroll over samples of this block
            def slab(dy):
                # rows i*stride + dy of the padded input = contiguous slice of
                # row-phase dy % stride (already bf16; no extra cast).
                r, st = dy % stride, dy // stride
                return phase_refs[r][b, st:st + H1, :]

            # conv1: 3 row-shifted banded matmuls (bf16 MXU, f32 acc) + GN1 + ReLU
            acc1 = jnp.dot(slab(0), w1_ref[0], preferred_element_type=jnp.float32)
            for dy in (1, 2):
                acc1 = acc1 + jnp.dot(slab(dy), w1_ref[dy],
                                      preferred_element_type=jnp.float32)
            y1 = jnp.maximum(gnorm(acc1, g1_ref, b1_ref), 0.0)   # (H1, nW) f32

            # stage y1 (bf16) inside the zero frame; it never leaves VMEM
            pad_ref[b, 1:H1 + 1, 0:nW] = y1.astype(pad_ref.dtype)

            # conv2 (stride 1) + GN2
            acc2 = jnp.dot(pad_ref[b, 0:H1, :], w2_ref[0],
                           preferred_element_type=jnp.float32)
            for dy in (1, 2):
                acc2 = acc2 + jnp.dot(pad_ref[b, dy:dy + H1, :], w2_ref[dy],
                                      preferred_element_type=jnp.float32)
            y2 = gnorm(acc2, g2_ref, b2_ref)

            # shortcut, fused in the same kernel (no HBM round trip)
            if has_proj:
                r, st = 1 % stride, 1 // stride
                sc = gnorm(jnp.dot(phase_refs[r][b, st:st + H1, :], wsc_ref[...],
                                   preferred_element_type=jnp.float32),
                           gsc_ref, bsc_ref)
            else:
                # identity: unpadded lane-dense x, read at lane offset 0
                sc = xid_ref[b].astype(jnp.float32)

            out_ref[b] = jnp.maximum(y2 + sc, 0.0).astype(out_ref.dtype)

    return kernel


# --------------------------------- wrapper ---------------------------------- #
def basic_block_ln_pallas(x_nchw, params, stride, block_batch=None):
    B, Cin, H, W = x_nchw.shape
    planes = params["w1"].shape[-1]
    assert stride in (1, 2)
    H1 = (H - 1) // stride + 1
    W1 = (W - 1) // stride + 1
    has_proj = (stride != 1) or (Cin != planes)
    nW = W1 * planes
    wpad = (W1 + 2) * planes

    # Samples per grid step (amortizes the ~0.35us/step pipeline overhead).
    if block_batch is None:
        block_batch = max(d for d in range(1, min(B, 8) + 1) if B % d == 0)
    Bt = block_batch
    assert B % Bt == 0

    # bf16 activations end-to-end: NCHW -> NHWC -> pad 1 -> lane-dense
    # (rows, (W+2)*Cin).  Row phases make the stride-s row reads contiguous in
    # the kernel (total data == original input: no read amplification).
    x = jnp.transpose(x_nchw, (0, 2, 3, 1)).astype(jnp.bfloat16)
    xp2 = jnp.pad(x, ((0, 0), (1, 1), (1, 1), (0, 0))).reshape(
        B, H + 2, (W + 2) * Cin)
    phases = [xp2[:, r::stride, :] for r in range(stride)]

    w1b = _banded_conv_weight(params["w1"], W + 2, W1, stride, 0)
    w2b = _banded_conv_weight(params["w2"], W1 + 2, W1, 1, -1)
    tile = lambda p: jnp.tile(p.reshape(1, planes).astype(jnp.float32), (1, W1))
    g1, b1 = tile(params["g1"]), tile(params["b1"])
    g2, b2 = tile(params["g2"]), tile(params["b2"])

    args = list(phases) + [w1b, g1, b1, w2b, g2, b2]
    consts = [w1b, g1, b1, w2b, g2, b2]
    if has_proj:
        wscb = _banded_conv_weight(params["w_sc"], W + 2, W1, stride, 1)[0]
        gsc, bsc = tile(params["g_sc"]), tile(params["b_sc"])
        args += [wscb, gsc, bsc]
        consts += [wscb, gsc, bsc]
        xid = None
    else:
        xid = x.reshape(B, H, W * Cin)      # unpadded lane-dense identity input
        args += [xid]

    kernel = _make_block_kernel(stride, has_proj, Bt, H1, W1, planes)

    def build_and_call(weight_mode):
        # Per-block (grid-varying) activation specs: default double buffering.
        act_spec = lambda arr: pl.BlockSpec((Bt,) + arr.shape[1:],
                                            lambda g: (g, 0, 0))
        # Grid-invariant weights / gamma / beta: single-buffered when supported.
        wkw = {} if weight_mode is None else dict(pipeline_mode=weight_mode)

        def const_spec(arr):
            nd = arr.ndim
            return pl.BlockSpec(arr.shape, (lambda g, _nd=nd: (0,) * _nd), **wkw)

        in_specs = [act_spec(ph) for ph in phases]
        in_specs += [const_spec(a) for a in consts]
        if not has_proj:
            in_specs += [act_spec(xid)]

        # TODO(synk): for v5e, pack samples/row-groups along the lane dim when
        #   nW < 128 so the output store is an unmasked full-lane vst.
        return pl.pallas_call(
            kernel,
            out_shape=jax.ShapeDtypeStruct((B, H1, nW), jnp.bfloat16),
            grid=(B // Bt,),
            in_specs=in_specs,
            out_specs=pl.BlockSpec((Bt, H1, nW), lambda g: (g, 0, 0)),
            scratch_shapes=[pltpu.VMEM((Bt, H1 + 2, wpad), jnp.bfloat16)],
            compiler_params=pltpu.CompilerParams(
                dimension_semantics=("parallel",)),
        )(*args)

    try:
        out2d = build_and_call(pl.Buffered(1))
    except Exception:
        # This JAX build's pallas_call does not honor pipeline_mode on
        # BlockSpec; fall back to default double-buffered weights (semantics
        # are identical, only weight-side VMEM differs).
        out2d = build_and_call(None)

    # (B, H1, W1*planes) lane-dense bf16 slab -> NCHW at the model boundary.
    return jnp.transpose(out2d.reshape(B, H1, W1, planes), (0, 3, 1, 2))


# ------------------------------ initialization ------------------------------ #
def init_params(key, in_planes, planes, stride):
    ks = jax.random.split(key, 8)
    rn = lambda k, s, sc: (sc * jax.random.normal(k, s)).astype(jnp.float32)
    p = {
        "w1": rn(ks[0], (3, 3, in_planes, planes), 0.1),        # HWIO
        "g1": 1.0 + rn(ks[1], (1, planes), 0.1),
        "b1": rn(ks[2], (1, planes), 0.1),
        "w2": rn(ks[3], (3, 3, planes, planes), 0.1),
        "g2": 1.0 + rn(ks[4], (1, planes), 0.1),
        "b2": rn(ks[5], (1, planes), 0.1),
    }
    if stride != 1 or in_planes != planes:
        p["w_sc"] = rn(ks[6], (1, 1, in_planes, planes), 0.1)
        p["g_sc"] = jnp.ones((1, planes), jnp.float32)
        p["b_sc"] = jnp.zeros((1, planes), jnp.float32)
    return p


# --------------------------- pure-JAX f32 reference -------------------------- #
def _conv(x, w, stride, padding):
    return lax.conv_general_dilated(
        x, w, (stride, stride), padding,
        dimension_numbers=("NHWC", "HWIO", "NHWC"),
        precision=lax.Precision.HIGHEST)


def _gn1(x, gamma, beta):
    mean = jnp.mean(x, axis=(1, 2, 3), keepdims=True)
    var = jnp.mean(jnp.square(x - mean), axis=(1, 2, 3), keepdims=True)
    return ((x - mean) * lax.rsqrt(var + _EPS)
            * gamma.reshape(1, 1, 1, -1) + beta.reshape(1, 1, 1, -1))


def basic_block_ln_reference(x_nchw, params, stride):
    x = jnp.transpose(x_nchw, (0, 2, 3, 1)).astype(jnp.float32)
    Cin = x.shape[-1]
    planes = params["w1"].shape[-1]
    out = jax.nn.relu(_gn1(_conv(x, params["w1"], stride, ((1, 1), (1, 1))),
                           params["g1"], params["b1"]))
    out = _gn1(_conv(out, params["w2"], 1, ((1, 1), (1, 1))),
               params["g2"], params["b2"])
    if stride != 1 or Cin != planes:
        sc = _gn1(_conv(x, params["w_sc"], stride, ((0, 0), (0, 0))),
                  params["g_sc"], params["b_sc"])
    else:
        sc = x
    return jnp.transpose(jax.nn.relu(out + sc), (0, 3, 1, 2))


# ----------------------------------- main ------------------------------------ #
if __name__ == "__main__":
    key = jax.random.PRNGKey(0)
    configs = [
        dict(B=2, in_planes=4, planes=8, H=16, W=16, stride=2),  # projection shortcut
        dict(B=2, in_planes=8, planes=8, H=16, W=16, stride=1),  # identity shortcut
    ]
    for i, cfg in enumerate(configs):
        kx, kp = jax.random.split(jax.random.fold_in(key, i))
        x = jax.random.normal(
            kx, (cfg["B"], cfg["in_planes"], cfg["H"], cfg["W"]), jnp.float32)
        params = init_params(kp, cfg["in_planes"], cfg["planes"], cfg["stride"])

        out = jax.block_until_ready(
            basic_block_ln_pallas(x, params, cfg["stride"]))
        ref = basic_block_ln_reference(x, params, cfg["stride"])

        # Activations/weights traverse bf16 end-to-end (f32 MXU accumulation),
        # so compare against the strict-f32 reference with a relaxed tolerance.
        outf = out.astype(jnp.float32)
        if not jnp.allclose(outf, ref, atol=1e-1, rtol=5e-2):
            raise AssertionError(
                f"config {cfg}: max abs err = {jnp.max(jnp.abs(outf - ref))}")
    print("KERNEL_OK")
</pallas_src>

<mosaic_0001>
module attributes {stable_mosaic.version = 11 : i64} {
  func.func @kernel(%arg0: i32, %arg1: memref<2x9x72xbf16, #tpu.memory_space<vmem>>, %arg2: memref<2x9x72xbf16, #tpu.memory_space<vmem>>, %arg3: memref<3x72x64xbf16, #tpu.memory_space<vmem>>, %arg4: memref<1x64xf32, #tpu.memory_space<vmem>>, %arg5: memref<1x64xf32, #tpu.memory_space<vmem>>, %arg6: memref<3x80x64xbf16, #tpu.memory_space<vmem>>, %arg7: memref<1x64xf32, #tpu.memory_space<vmem>>, %arg8: memref<1x64xf32, #tpu.memory_space<vmem>>, %arg9: memref<72x64xbf16, #tpu.memory_space<vmem>>, %arg10: memref<1x64xf32, #tpu.memory_space<vmem>>, %arg11: memref<1x64xf32, #tpu.memory_space<vmem>>, %arg12: memref<2x8x64xbf16, #tpu.memory_space<vmem>>, %arg13: memref<2x10x80xbf16, #tpu.memory_space<vmem>>) attributes {dimension_semantics = [#tpu.dimension_semantics<parallel>], iteration_bounds = array<i64: 1>, scalar_prefetch = 0 : i64, scratch_operands = 1 : i64, tpu.core_type = #tpu.core_type<tc>, window_params = [{transform_indices = @transform_0, window_bounds = array<i64: 2, 9, 72>}, {transform_indices = @transform_1, window_bounds = array<i64: 2, 9, 72>}, {pipeline_mode = #tpu.pipeline_mode<synchronous>, transform_indices = @transform_2, window_bounds = array<i64: 3, 72, 64>}, {pipeline_mode = #tpu.pipeline_mode<synchronous>, transform_indices = @transform_3, window_bounds = array<i64: 1, 64>}, {pipeline_mode = #tpu.pipeline_mode<synchronous>, transform_indices = @transform_4, window_bounds = array<i64: 1, 64>}, {pipeline_mode = #tpu.pipeline_mode<synchronous>, transform_indices = @transform_5, window_bounds = array<i64: 3, 80, 64>}, {pipeline_mode = #tpu.pipeline_mode<synchronous>, transform_indices = @transform_6, window_bounds = array<i64: 1, 64>}, {pipeline_mode = #tpu.pipeline_mode<synchronous>, transform_indices = @transform_7, window_bounds = array<i64: 1, 64>}, {pipeline_mode = #tpu.pipeline_mode<synchronous>, transform_indices = @transform_8, window_bounds = array<i64: 72, 64>}, {pipeline_mode = #tpu.pipeline_mode<synchronous>, transform_indices = @transform_9, window_bounds = array<i64: 1, 64>}, {pipeline_mode = #tpu.pipeline_mode<synchronous>, transform_indices = @transform_10, window_bounds = array<i64: 1, 64>}, {transform_indices = @transform_11, window_bounds = array<i64: 2, 8, 64>}]} {
    %cst = arith.constant 0.000000e+00 : bf16
    %0 = vector.broadcast %cst : bf16 to vector<2x1x80xbf16>
    %c0 = arith.constant 0 : index
    %c0_0 = arith.constant 0 : index
    %c0_1 = arith.constant 0 : index
    %1 = vector.load %arg13[%c0, %c0_0, %c0_1] : memref<2x10x80xbf16, #tpu.memory_space<vmem>>, vector<2x1x80xbf16>
    tpu.vector_store %arg13[%c0, %c0_0, %c0_1], %0 {strides = array<i32>} : memref<2x10x80xbf16, #tpu.memory_space<vmem>>, vector<2x1x80xbf16>,
    %c0_2 = arith.constant 0 : index
    %c9 = arith.constant 9 : index
    %c0_3 = arith.constant 0 : index
    %2 = vector.load %arg13[%c0_2, %c9, %c0_3] : memref<2x10x80xbf16, #tpu.memory_space<vmem>>, vector<2x1x80xbf16>
    tpu.vector_store %arg13[%c0_2, %c9, %c0_3], %0 {strides = array<i32>} : memref<2x10x80xbf16, #tpu.memory_space<vmem>>, vector<2x1x80xbf16>,
    %cst_4 = arith.constant 0.000000e+00 : bf16
    %3 = vector.broadcast %cst_4 : bf16 to vector<2x10x16xbf16>
    %c0_5 = arith.constant 0 : index
    %c0_6 = arith.constant 0 : index
    %c64 = arith.constant 64 : index
    %4 = vector.load %arg13[%c0_5, %c0_6, %c64] : memref<2x10x80xbf16, #tpu.memory_space<vmem>>, vector<2x10x16xbf16>
    tpu.vector_store %arg13[%c0_5, %c0_6, %c64], %3 {strides = array<i32>} : memref<2x10x80xbf16, #tpu.memory_space<vmem>>, vector<2x10x16xbf16>,
    %c0_7 = arith.constant 0 : index
    %c0_8 = arith.constant 0 : index
    %c0_9 = arith.constant 0 : index
    %5 = vector.load %arg1[%c0_7, %c0_8, %c0_9] : memref<2x9x72xbf16, #tpu.memory_space<vmem>>, vector<1x8x72xbf16>
    %6 = vector.shape_cast %5 : vector<1x8x72xbf16> to vector<8x72xbf16>
    %c0_10 = arith.constant 0 : index
    %c0_11 = arith.constant 0 : index
    %c0_12 = arith.constant 0 : index
    %7 = vector.load %arg3[%c0_10, %c0_11, %c0_12] : memref<3x72x64xbf16, #tpu.memory_space<vmem>>, vector<1x72x64xbf16>
    %8 = vector.shape_cast %7 : vector<1x72x64xbf16> to vector<72x64xbf16>
    %cst_13 = arith.constant dense<0.000000e+00> : vector<8x64xf32>
    %9 = tpu.matmul %6, %8, %cst_13 {dimension_numbers = #tpu.dot_dimension_numbers<[1], [0], [0], [1], [0, 0, 1, 1], [], []>} : vector<8x72xbf16>, vector<72x64xbf16>, vector<8x64xf32> -> vector<8x64xf32>
    %c0_14 = arith.constant 0 : index
    %c0_15 = arith.constant 0 : index
    %c0_16 = arith.constant 0 : index
    %10 = vector.load %arg2[%c0_14, %c0_15, %c0_16] : memref<2x9x72xbf16, #tpu.memory_space<vmem>>, vector<1x8x72xbf16>
    %11 = vector.shape_cast %10 : vector<1x8x72xbf16> to vector<8x72xbf16>
    %c1 = arith.constant 1 : index
    %c0_17 = arith.constant 0 : index
    %c0_18 = arith.constant 0 : index
    %12 = vector.load %arg3[%c1, %c0_17, %c0_18] : memref<3x72x64xbf16, #tpu.memory_space<vmem>>, vector<1x72x64xbf16>
    %13 = vector.shape_cast %12 : vector<1x72x64xbf16> to vector<72x64xbf16>
    %cst_19 = arith.constant dense<0.000000e+00> : vector<8x64xf32>
    %14 = tpu.matmul %11, %13, %cst_19 {dimension_numbers = #tpu.dot_dimension_numbers<[1], [0], [0], [1], [0, 0, 1, 1], [], []>} : vector<8x72xbf16>, vector<72x64xbf16>, vector<8x64xf32> -> vector<8x64xf32>
    %15 = arith.addf %9, %14 : vector<8x64xf32>
    %c0_20 = arith.constant 0 : index
    %c1_21 = arith.constant 1 : index
    %c0_22 = arith.constant 0 : index
    %16 = vector.load %arg1[%c0_20, %c1_21, %c0_22] : memref<2x9x72xbf16, #tpu.memory_space<vmem>>, vector<1x8x72xbf16>
    %17 = vector.shape_cast %16 : vector<1x8x72xbf16> to vector<8x72xbf16>
    %c2 = arith.constant 2 : index
    %c0_23 = arith.constant 0 : index
    %c0_24 = arith.constant 0 : index
    %18 = vector.load %arg3[%c2, %c0_23, %c0_24] : memref<3x72x64xbf16, #tpu.memory_space<vmem>>, vector<1x72x64xbf16>
    %19 = vector.shape_cast %18 : vector<1x72x64xbf16> to vector<72x64xbf16>
    %cst_25 = arith.constant dense<0.000000e+00> : vector<8x64xf32>
    %20 = tpu.matmul %17, %19, %cst_25 {dimension_numbers = #tpu.dot_dimension_numbers<[1], [0], [0], [1], [0, 0, 1, 1], [], []>} : vector<8x72xbf16>, vector<72x64xbf16>, vector<8x64xf32> -> vector<8x64xf32>
    %21 = arith.addf %15, %20 : vector<8x64xf32>
    %22 = vector.shape_cast %21 : vector<8x64xf32> to vector<1x8x64xf32>
    %cst_26 = arith.constant dense<0.000000e+00> : vector<1xf32>
    %23 = vector.multi_reduction <add>, %22, %cst_26 [1, 2] : vector<1x8x64xf32> to vector<1xf32>
    %24 = vector.shape_cast %23 : vector<1xf32> to vector<1x1x1xf32>
    %25 = vector.extract %24[0, 0, 0] : f32 from vector<1x1x1xf32>
    %cst_27 = arith.constant 0.001953125 : f32
    %26 = arith.mulf %25, %cst_27 : f32
    %27 = arith.mulf %21, %21 : vector<8x64xf32>
    %28 = vector.shape_cast %27 : vector<8x64xf32> to vector<1x8x64xf32>
    %cst_28 = arith.constant dense<0.000000e+00> : vector<1xf32>
    %29 = vector.multi_reduction <add>, %28, %cst_28 [1, 2] : vector<1x8x64xf32> to vector<1xf32>
    %30 = vector.shape_cast %29 : vector<1xf32> to vector<1x1x1xf32>
    %31 = vector.extract %30[0, 0, 0] : f32 from vector<1x1x1xf32>
    %cst_29 = arith.constant 0.001953125 : f32
    %32 = arith.mulf %31, %cst_29 : f32
    %33 = arith.mulf %26, %26 : f32
    %34 = arith.subf %32, %33 : f32
    %cst_30 = arith.constant 0.000000e+00 : f32
    %35 = arith.maximumf %34, %cst_30 : f32
    %36 = vector.broadcast %26 : f32 to vector<8x64xf32>
    %37 = arith.subf %21, %36 : vector<8x64xf32>
    %cst_31 = arith.constant 9.99999974E-6 : f32
    %38 = arith.addf %35, %cst_31 : f32
    %39 = math.rsqrt %38 : f32
    %40 = vector.broadcast %39 : f32 to vector<8x64xf32>
    %41 = arith.mulf %37, %40 : vector<8x64xf32>
    %c0_32 = arith.constant 0 : index
    %c0_33 = arith.constant 0 : index
    %42 = vector.load %arg4[%c0_32, %c0_33] : memref<1x64xf32, #tpu.memory_space<vmem>>, vector<1x64xf32>
    %43 = vector.broadcast %42 : vector<1x64xf32> to vector<8x64xf32>
    %44 = arith.mulf %41, %43 : vector<8x64xf32>
    %c0_34 = arith.constant 0 : index
    %c0_35 = arith.constant 0 : index
    %45 = vector.load %arg5[%c0_34, %c0_35] : memref<1x64xf32, #tpu.memory_space<vmem>>, vector<1x64xf32>
    %46 = vector.broadcast %45 : vector<1x64xf32> to vector<8x64xf32>
    %47 = arith.addf %44, %46 : vector<8x64xf32>
    %cst_36 = arith.constant 0.000000e+00 : f32
    %48 = vector.broadcast %cst_36 : f32 to vector<8x64xf32>
    %49 = arith.maximumf %47, %48 : vector<8x64xf32>
    %50 = arith.truncf %49 : vector<8x64xf32> to vector<8x64xbf16>
    %c0_37 = arith.constant 0 : index
    %c1_38 = arith.constant 1 : index
    %c0_39 = arith.constant 0 : index
    %51 = vector.load %arg13[%c0_37, %c1_38, %c0_39] : memref<2x10x80xbf16, #tpu.memory_space<vmem>>, vector<1x8x64xbf16>
    %52 = vector.shape_cast %51 : vector<1x8x64xbf16> to vector<8x64xbf16>
    %53 = vector.shape_cast %50 : vector<8x64xbf16> to vector<1x8x64xbf16>
    tpu.vector_store %arg13[%c0_37, %c1_38, %c0_39], %53 {strides = array<i32>} : memref<2x10x80xbf16, #tpu.memory_space<vmem>>, vector<1x8x64xbf16>,
    %c0_40 = arith.constant 0 : index
    %c0_41 = arith.constant 0 : index
    %c0_42 = arith.constant 0 : index
    %54 = vector.load %arg13[%c0_40, %c0_41, %c0_42] : memref<2x10x80xbf16, #tpu.memory_space<vmem>>, vector<1x8x80xbf16>
    %55 = vector.shape_cast %54 : vector<1x8x80xbf16> to vector<8x80xbf16>
    %c0_43 = arith.constant 0 : index
    %c0_44 = arith.constant 0 : index
    %c0_45 = arith.constant 0 : index
    %56 = vector.load %arg6[%c0_43, %c0_44, %c0_45] : memref<3x80x64xbf16, #tpu.memory_space<vmem>>, vector<1x80x64xbf16>
    %57 = vector.shape_cast %56 : vector<1x80x64xbf16> to vector<80x64xbf16>
    %cst_46 = arith.constant dense<0.000000e+00> : vector<8x64xf32>
    %58 = tpu.matmul %55, %57, %cst_46 {dimension_numbers = #tpu.dot_dimension_numbers<[1], [0], [0], [1], [0, 0, 1, 1], [], []>} : vector<8x80xbf16>, vector<80x64xbf16>, vector<8x64xf32> -> vector<8x64xf32>
    %c0_47 = arith.constant 0 : index
    %c1_48 = arith.constant 1 : index
    %c0_49 = arith.constant 0 : index
    %59 = vector.load %arg13[%c0_47, %c1_48, %c0_49] : memref<2x10x80xbf16, #tpu.memory_space<vmem>>, vector<1x8x80xbf16>
    %60 = vector.shape_cast %59 : vector<1x8x80xbf16> to vector<8x80xbf16>
    %c1_50 = arith.constant 1 : index
    %c0_51 = arith.constant 0 : index
    %c0_52 = arith.constant 0 : index
    %61 = vector.load %arg6[%c1_50, %c0_51, %c0_52] : memref<3x80x64xbf16, #tpu.memory_space<vmem>>, vector<1x80x64xbf16>
    %62 = vector.shape_cast %61 : vector<1x80x64xbf16> to vector<80x64xbf16>
    %cst_53 = arith.constant dense<0.000000e+00> : vector<8x64xf32>
    %63 = tpu.matmul %60, %62, %cst_53 {dimension_numbers = #tpu.dot_dimension_numbers<[1], [0], [0], [1], [0, 0, 1, 1], [], []>} : vector<8x80xbf16>, vector<80x64xbf16>, vector<8x64xf32> -> vector<8x64xf32>
    %64 = arith.addf %58, %63 : vector<8x64xf32>
    %c0_54 = arith.constant 0 : index
    %c2_55 = arith.constant 2 : index
    %c0_56 = arith.constant 0 : index
    %65 = vector.load %arg13[%c0_54, %c2_55, %c0_56] : memref<2x10x80xbf16, #tpu.memory_space<vmem>>, vector<1x8x80xbf16>
    %66 = vector.shape_cast %65 : vector<1x8x80xbf16> to vector<8x80xbf16>
    %c2_57 = arith.constant 2 : index
    %c0_58 = arith.constant 0 : index
    %c0_59 = arith.constant 0 : index
    %67 = vector.load %arg6[%c2_57, %c0_58, %c0_59] : memref<3x80x64xbf16, #tpu.memory_space<vmem>>, vector<1x80x64xbf16>
    %68 = vector.shape_cast %67 : vector<1x80x64xbf16> to vector<80x64xbf16>
    %cst_60 = arith.constant dense<0.000000e+00> : vector<8x64xf32>
    %69 = tpu.matmul %66, %68, %cst_60 {dimension_numbers = #tpu.dot_dimension_numbers<[1], [0], [0], [1], [0, 0, 1, 1], [], []>} : vector<8x80xbf16>, vector<80x64xbf16>, vector<8x64xf32> -> vector<8x64xf32>
    %70 = arith.addf %64, %69 : vector<8x64xf32>
    %71 = vector.shape_cast %70 : vector<8x64xf32> to vector<1x8x64xf32>
    %cst_61 = arith.constant dense<0.000000e+00> : vector<1xf32>
    %72 = vector.multi_reduction <add>, %71, %cst_61 [1, 2] : vector<1x8x64xf32> to vector<1xf32>
    %73 = vector.shape_cast %72 : vector<1xf32> to vector<1x1x1xf32>
    %74 = vector.extract %73[0, 0, 0] : f32 from vector<1x1x1xf32>
    %cst_62 = arith.constant 0.001953125 : f32
    %75 = arith.mulf %74, %cst_62 : f32
    %76 = arith.mulf %70, %70 : vector<8x64xf32>
    %77 = vector.shape_cast %76 : vector<8x64xf32> to vector<1x8x64xf32>
    %cst_63 = arith.constant dense<0.000000e+00> : vector<1xf32>
    %78 = vector.multi_reduction <add>, %77, %cst_63 [1, 2] : vector<1x8x64xf32> to vector<1xf32>
    %79 = vector.shape_cast %78 : vector<1xf32> to vector<1x1x1xf32>
    %80 = vector.extract %79[0, 0, 0] : f32 from vector<1x1x1xf32>
    %cst_64 = arith.constant 0.001953125 : f32
    %81 = arith.mulf %80, %cst_64 : f32
    %82 = arith.mulf %75, %75 : f32
    %83 = arith.subf %81, %82 : f32
    %cst_65 = arith.constant 0.000000e+00 : f32
    %84 = arith.maximumf %83, %cst_65 : f32
    %85 = vector.broadcast %75 : f32 to vector<8x64xf32>
    %86 = arith.subf %70, %85 : vector<8x64xf32>
    %cst_66 = arith.constant 9.99999974E-6 : f32
    %87 = arith.addf %84, %cst_66 : f32
    %88 = math.rsqrt %87 : f32
    %89 = vector.broadcast %88 : f32 to vector<8x64xf32>
    %90 = arith.mulf %86, %89 : vector<8x64xf32>
    %c0_67 = arith.constant 0 : index
    %c0_68 = arith.constant 0 : index
    %91 = vector.load %arg7[%c0_67, %c0_68] : memref<1x64xf32, #tpu.memory_space<vmem>>, vector<1x64xf32>
    %92 = vector.broadcast %91 : vector<1x64xf32> to vector<8x64xf32>
    %93 = arith.mulf %90, %92 : vector<8x64xf32>
    %c0_69 = arith.constant 0 : index
    %c0_70 = arith.constant 0 : index
    %94 = vector.load %arg8[%c0_69, %c0_70] : memref<1x64xf32, #tpu.memory_space<vmem>>, vector<1x64xf32>
    %95 = vector.broadcast %94 : vector<1x64xf32> to vector<8x64xf32>
    %96 = arith.addf %93, %95 : vector<8x64xf32>
    %c0_71 = arith.constant 0 : index
    %c0_72 = arith.constant 0 : index
    %c0_73 = arith.constant 0 : index
    %97 = vector.load %arg2[%c0_71, %c0_72, %c0_73] : memref<2x9x72xbf16, #tpu.memory_space<vmem>>, vector<1x8x72xbf16>
    %98 = vector.shape_cast %97 : vector<1x8x72xbf16> to vector<8x72xbf16>
    %c0_74 = arith.constant 0 : index
    %c0_75 = arith.constant 0 : index
    %99 = vector.load %arg9[%c0_74, %c0_75] : memref<72x64xbf16, #tpu.memory_space<vmem>>, vector<72x64xbf16>
    %cst_76 = arith.constant dense<0.000000e+00> : vector<8x64xf32>
    %100 = tpu.matmul %98, %99, %cst_76 {dimension_numbers = #tpu.dot_dimension_numbers<[1], [0], [0], [1], [0, 0, 1, 1], [], []>} : vector<8x72xbf16>, vector<72x64xbf16>, vector<8x64xf32> -> vector<8x64xf32>
    %101 = vector.shape_cast %100 : vector<8x64xf32> to vector<1x8x64xf32>
    %cst_77 = arith.constant dense<0.000000e+00> : vector<1xf32>
    %102 = vector.multi_reduction <add>, %101, %cst_77 [1, 2] : vector<1x8x64xf32> to vector<1xf32>
    %103 = vector.shape_cast %102 : vector<1xf32> to vector<1x1x1xf32>
    %104 = vector.extract %103[0, 0, 0] : f32 from vector<1x1x1xf32>
    %cst_78 = arith.constant 0.001953125 : f32
    %105 = arith.mulf %104, %cst_78 : f32
    %106 = arith.mulf %100, %100 : vector<8x64xf32>
    %107 = vector.shape_cast %106 : vector<8x64xf32> to vector<1x8x64xf32>
    %cst_79 = arith.constant dense<0.000000e+00> : vector<1xf32>
    %108 = vector.multi_reduction <add>, %107, %cst_79 [1, 2] : vector<1x8x64xf32> to vector<1xf32>
    %109 = vector.shape_cast %108 : vector<1xf32> to vector<1x1x1xf32>
    %110 = vector.extract %109[0, 0, 0] : f32 from vector<1x1x1xf32>
    %cst_80 = arith.constant 0.001953125 : f32
    %111 = arith.mulf %110, %cst_80 : f32
    %112 = arith.mulf %105, %105 : f32
    %113 = arith.subf %111, %112 : f32
    %cst_81 = arith.constant 0.000000e+00 : f32
    %114 = arith.maximumf %113, %cst_81 : f32
    %115 = vector.broadcast %105 : f32 to vector<8x64xf32>
    %116 = arith.subf %100, %115 : vector<8x64xf32>
    %cst_82 = arith.constant 9.99999974E-6 : f32
    %117 = arith.addf %114, %cst_82 : f32
    %118 = math.rsqrt %117 : f32
    %119 = vector.broadcast %118 : f32 to vector<8x64xf32>
    %120 = arith.mulf %116, %119 : vector<8x64xf32>
    %c0_83 = arith.constant 0 : index
    %c0_84 = arith.constant 0 : index
    %121 = vector.load %arg10[%c0_83, %c0_84] : memref<1x64xf32, #tpu.memory_space<vmem>>, vector<1x64xf32>
    %122 = vector.broadcast %121 : vector<1x64xf32> to vector<8x64xf32>
    %123 = arith.mulf %120, %122 : vector<8x64xf32>
    %c0_85 = arith.constant 0 : index
    %c0_86 = arith.constant 0 : index
    %124 = vector.load %arg11[%c0_85, %c0_86] : memref<1x64xf32, #tpu.memory_space<vmem>>, vector<1x64xf32>
    %125 = vector.broadcast %124 : vector<1x64xf32> to vector<8x64xf32>
    %126 = arith.addf %123, %125 : vector<8x64xf32>
    %127 = arith.addf %96, %126 : vector<8x64xf32>
    %cst_87 = arith.constant 0.000000e+00 : f32
    %128 = vector.broadcast %cst_87 : f32 to vector<8x64xf32>
    %129 = arith.maximumf %127, %128 : vector<8x64xf32>
    %130 = arith.truncf %129 : vector<8x64xf32> to vector<8x64xbf16>
    %c0_88 = arith.constant 0 : index
    %c0_89 = arith.constant 0 : index
    %c0_90 = arith.constant 0 : index
    %131 = vector.load %arg12[%c0_88, %c0_89, %c0_90] : memref<2x8x64xbf16, #tpu.memory_space<vmem>>, vector<1x8x64xbf16>
    %132 = vector.shape_cast %131 : vector<1x8x64xbf16> to vector<8x64xbf16>
    %133 = vector.shape_cast %130 : vector<8x64xbf16> to vector<1x8x64xbf16>
    tpu.vector_store %arg12[%c0_88, %c0_89, %c0_90], %133 {strides = array<i32>} : memref<2x8x64xbf16, #tpu.memory_space<vmem>>, vector<1x8x64xbf16>,
    %c1_91 = arith.constant 1 : index
    %c0_92 = arith.constant 0 : index
    %c0_93 = arith.constant 0 : index
    %134 = vector.load %arg1[%c1_91, %c0_92, %c0_93] : memref<2x9x72xbf16, #tpu.memory_space<vmem>>, vector<1x8x72xbf16>
    %135 = vector.shape_cast %134 : vector<1x8x72xbf16> to vector<8x72xbf16>
    %c0_94 = arith.constant 0 : index
    %c0_95 = arith.constant 0 : index
    %c0_96 = arith.constant 0 : index
    %136 = vector.load %arg3[%c0_94, %c0_95, %c0_96] : memref<3x72x64xbf16, #tpu.memory_space<vmem>>, vector<1x72x64xbf16>
    %137 = vector.shape_cast %136 : vector<1x72x64xbf16> to vector<72x64xbf16>
    %cst_97 = arith.constant dense<0.000000e+00> : vector<8x64xf32>
    %138 = tpu.matmul %135, %137, %cst_97 {dimension_numbers = #tpu.dot_dimension_numbers<[1], [0], [0], [1], [0, 0, 1, 1], [], []>} : vector<8x72xbf16>, vector<72x64xbf16>, vector<8x64xf32> -> vector<8x64xf32>
    %c1_98 = arith.constant 1 : index
    %c0_99 = arith.constant 0 : index
    %c0_100 = arith.constant 0 : index
    %139 = vector.load %arg2[%c1_98, %c0_99, %c0_100] : memref<2x9x72xbf16, #tpu.memory_space<vmem>>, vector<1x8x72xbf16>
    %140 = vector.shape_cast %139 : vector<1x8x72xbf16> to vector<8x72xbf16>
    %c1_101 = arith.constant 1 : index
    %c0_102 = arith.constant 0 : index
    %c0_103 = arith.constant 0 : index
    %141 = vector.load %arg3[%c1_101, %c0_102, %c0_103] : memref<3x72x64xbf16, #tpu.memory_space<vmem>>, vector<1x72x64xbf16>
    %142 = vector.shape_cast %141 : vector<1x72x64xbf16> to vector<72x64xbf16>
    %cst_104 = arith.constant dense<0.000000e+00> : vector<8x64xf32>
    %143 = tpu.matmul %140, %142, %cst_104 {dimension_numbers = #tpu.dot_dimension_numbers<[1], [0], [0], [1], [0, 0, 1, 1], [], []>} : vector<8x72xbf16>, vector<72x64xbf16>, vector<8x64xf32> -> vector<8x64xf32>
    %144 = arith.addf %138, %143 : vector<8x64xf32>
    %c1_105 = arith.constant 1 : index
    %c1_106 = arith.constant 1 : index
    %c0_107 = arith.constant 0 : index
    %145 = vector.load %arg1[%c1_105, %c1_106, %c0_107] : memref<2x9x72xbf16, #tpu.memory_space<vmem>>, vector<1x8x72xbf16>
    %146 = vector.shape_cast %145 : vector<1x8x72xbf16> to vector<8x72xbf16>
    %c2_108 = arith.constant 2 : index
    %c0_109 = arith.constant 0 : index
    %c0_110 = arith.constant 0 : index
    %147 = vector.load %arg3[%c2_108, %c0_109, %c0_110] : memref<3x72x64xbf16, #tpu.memory_space<vmem>>, vector<1x72x64xbf16>
    %148 = vector.shape_cast %147 : vector<1x72x64xbf16> to vector<72x64xbf16>
    %cst_111 = arith.constant dense<0.000000e+00> : vector<8x64xf32>
    %149 = tpu.matmul %146, %148, %cst_111 {dimension_numbers = #tpu.dot_dimension_numbers<[1], [0], [0], [1], [0, 0, 1, 1], [], []>} : vector<8x72xbf16>, vector<72x64xbf16>, vector<8x64xf32> -> vector<8x64xf32>
    %150 = arith.addf %144, %149 : vector<8x64xf32>
    %151 = vector.shape_cast %150 : vector<8x64xf32> to vector<1x8x64xf32>
    %cst_112 = arith.constant dense<0.000000e+00> : vector<1xf32>
    %152 = vector.multi_reduction <add>, %151, %cst_112 [1, 2] : vector<1x8x64xf32> to vector<1xf32>
    %153 = vector.shape_cast %152 : vector<1xf32> to vector<1x1x1xf32>
    %154 = vector.extract %153[0, 0, 0] : f32 from vector<1x1x1xf32>
    %cst_113 = arith.constant 0.001953125 : f32
    %155 = arith.mulf %154, %cst_113 : f32
    %156 = arith.mulf %150, %150 : vector<8x64xf32>
    %157 = vector.shape_cast %156 : vector<8x64xf32> to vector<1x8x64xf32>
    %cst_114 = arith.constant dense<0.000000e+00> : vector<1xf32>
    %158 = vector.multi_reduction <add>, %157, %cst_114 [1, 2] : vector<1x8x64xf32> to vector<1xf32>
    %159 = vector.shape_cast %158 : vector<1xf32> to vector<1x1x1xf32>
    %160 = vector.extract %159[0, 0, 0] : f32 from vector<1x1x1xf32>
    %cst_115 = arith.constant 0.001953125 : f32
    %161 = arith.mulf %160, %cst_115 : f32
    %162 = arith.mulf %155, %155 : f32
    %163 = arith.subf %161, %162 : f32
    %cst_116 = arith.constant 0.000000e+00 : f32
    %164 = arith.maximumf %163, %cst_116 : f32
    %165 = vector.broadcast %155 : f32 to vector<8x64xf32>
    %166 = arith.subf %150, %165 : vector<8x64xf32>
    %cst_117 = arith.constant 9.99999974E-6 : f32
    %167 = arith.addf %164, %cst_117 : f32
    %168 = math.rsqrt %167 : f32
    %169 = vector.broadcast %168 : f32 to vector<8x64xf32>
    %170 = arith.mulf %166, %169 : vector<8x64xf32>
    %c0_118 = arith.constant 0 : index
    %c0_119 = arith.constant 0 : index
    %171 = vector.load %arg4[%c0_118, %c0_119] : memref<1x64xf32, #tpu.memory_space<vmem>>, vector<1x64xf32>
    %172 = vector.broadcast %171 : vector<1x64xf32> to vector<8x64xf32>
    %173 = arith.mulf %170, %172 : vector<8x64xf32>
    %c0_120 = arith.constant 0 : index
    %c0_121 = arith.constant 0 : index
    %174 = vector.load %arg5[%c0_120, %c0_121] : memref<1x64xf32, #tpu.memory_space<vmem>>, vector<1x64xf32>
    %175 = vector.broadcast %174 : vector<1x64xf32> to vector<8x64xf32>
    %176 = arith.addf %173, %175 : vector<8x64xf32>
    %cst_122 = arith.constant 0.000000e+00 : f32
    %177 = vector.broadcast %cst_122 : f32 to vector<8x64xf32>
    %178 = arith.maximumf %176, %177 : vector<8x64xf32>
    %179 = arith.truncf %178 : vector<8x64xf32> to vector<8x64xbf16>
    %c1_123 = arith.constant 1 : index
    %c1_124 = arith.constant 1 : index
    %c0_125 = arith.constant 0 : index
    %180 = vector.load %arg13[%c1_123, %c1_124, %c0_125] : memref<2x10x80xbf16, #tpu.memory_space<vmem>>, vector<1x8x64xbf16>
    %181 = vector.shape_cast %180 : vector<1x8x64xbf16> to vector<8x64xbf16>
    %182 = vector.shape_cast %179 : vector<8x64xbf16> to vector<1x8x64xbf16>
    tpu.vector_store %arg13[%c1_123, %c1_124, %c0_125], %182 {strides = array<i32>} : memref<2x10x80xbf16, #tpu.memory_space<vmem>>, vector<1x8x64xbf16>,
    %c1_126 = arith.constant 1 : index
    %c0_127 = arith.constant 0 : index
    %c0_128 = arith.constant 0 : index
    %183 = vector.load %arg13[%c1_126, %c0_127, %c0_128] : memref<2x10x80xbf16, #tpu.memory_space<vmem>>, vector<1x8x80xbf16>
    %184 = vector.shape_cast %183 : vector<1x8x80xbf16> to vector<8x80xbf16>
    %c0_129 = arith.constant 0 : index
    %c0_130 = arith.constant 0 : index
    %c0_131 = arith.constant 0 : index
    %185 = vector.load %arg6[%c0_129, %c0_130, %c0_131] : memref<3x80x64xbf16, #tpu.memory_space<vmem>>, vector<1x80x64xbf16>
    %186 = vector.shape_cast %185 : vector<1x80x64xbf16> to vector<80x64xbf16>
    %cst_132 = arith.constant dense<0.000000e+00> : vector<8x64xf32>
    %187 = tpu.matmul %184, %186, %cst_132 {dimension_numbers = #tpu.dot_dimension_numbers<[1], [0], [0], [1], [0, 0, 1, 1], [], []>} : vector<8x80xbf16>, vector<80x64xbf16>, vector<8x64xf32> -> vector<8x64xf32>
    %c1_133 = arith.constant 1 : index
    %c1_134 = arith.constant 1 : index
    %c0_135 = arith.constant 0 : index
    %188 = vector.load %arg13[%c1_133, %c1_134, %c0_135] : memref<2x10x80xbf16, #tpu.memory_space<vmem>>, vector<1x8x80xbf16>
    %189 = vector.shape_cast %188 : vector<1x8x80xbf16> to vector<8x80xbf16>
    %c1_136 = arith.constant 1 : index
    %c0_137 = arith.constant 0 : index
    %c0_138 = arith.constant 0 : index
    %190 = vector.load %arg6[%c1_136, %c0_137, %c0_138] : memref<3x80x64xbf16, #tpu.memory_space<vmem>>, vector<1x80x64xbf16>
    %191 = vector.shape_cast %190 : vector<1x80x64xbf16> to vector<80x64xbf16>
    %cst_139 = arith.constant dense<0.000000e+00> : vector<8x64xf32>
    %192 = tpu.matmul %189, %191, %cst_139 {dimension_numbers = #tpu.dot_dimension_numbers<[1], [0], [0], [1], [0, 0, 1, 1], [], []>} : vector<8x80xbf16>, vector<80x64xbf16>, vector<8x64xf32> -> vector<8x64xf32>
    %193 = arith.addf %187, %192 : vector<8x64xf32>
    %c1_140 = arith.constant 1 : index
    %c2_141 = arith.constant 2 : index
    %c0_142 = arith.constant 0 : index
    %194 = vector.load %arg13[%c1_140, %c2_141, %c0_142] : memref<2x10x80xbf16, #tpu.memory_space<vmem>>, vector<1x8x80xbf16>
    %195 = vector.shape_cast %194 : vector<1x8x80xbf16> to vector<8x80xbf16>
    %c2_143 = arith.constant 2 : index
    %c0_144 = arith.constant 0 : index
    %c0_145 = arith.constant 0 : index
    %196 = vector.load %arg6[%c2_143, %c0_144, %c0_145] : memref<3x80x64xbf16, #tpu.memory_space<vmem>>, vector<1x80x64xbf16>
    %197 = vector.shape_cast %196 : vector<1x80x64xbf16> to vector<80x64xbf16>
    %cst_146 = arith.constant dense<0.000000e+00> : vector<8x64xf32>
    %198 = tpu.matmul %195, %197, %cst_146 {dimension_numbers = #tpu.dot_dimension_numbers<[1], [0], [0], [1], [0, 0, 1, 1], [], []>} : vector<8x80xbf16>, vector<80x64xbf16>, vector<8x64xf32> -> vector<8x64xf32>
    %199 = arith.addf %193, %198 : vector<8x64xf32>
    %200 = vector.shape_cast %199 : vector<8x64xf32> to vector<1x8x64xf32>
    %cst_147 = arith.constant dense<0.000000e+00> : vector<1xf32>
    %201 = vector.multi_reduction <add>, %200, %cst_147 [1, 2] : vector<1x8x64xf32> to vector<1xf32>
    %202 = vector.shape_cast %201 : vector<1xf32> to vector<1x1x1xf32>
    %203 = vector.extract %202[0, 0, 0] : f32 from vector<1x1x1xf32>
    %cst_148 = arith.constant 0.001953125 : f32
    %204 = arith.mulf %203, %cst_148 : f32
    %205 = arith.mulf %199, %199 : vector<8x64xf32>
    %206 = vector.shape_cast %205 : vector<8x64xf32> to vector<1x8x64xf32>
    %cst_149 = arith.constant dense<0.000000e+00> : vector<1xf32>
    %207 = vector.multi_reduction <add>, %206, %cst_149 [1, 2] : vector<1x8x64xf32> to vector<1xf32>
    %208 = vector.shape_cast %207 : vector<1xf32> to vector<1x1x1xf32>
    %209 = vector.extract %208[0, 0, 0] : f32 from vector<1x1x1xf32>
    %cst_150 = arith.constant 0.001953125 : f32
    %210 = arith.mulf %209, %cst_150 : f32
    %211 = arith.mulf %204, %204 : f32
    %212 = arith.subf %210, %211 : f32
    %cst_151 = arith.constant 0.000000e+00 : f32
    %213 = arith.maximumf %212, %cst_151 : f32
    %214 = vector.broadcast %204 : f32 to vector<8x64xf32>
    %215 = arith.subf %199, %214 : vector<8x64xf32>
    %cst_152 = arith.constant 9.99999974E-6 : f32
    %216 = arith.addf %213, %cst_152 : f32
    %217 = math.rsqrt %216 : f32
    %218 = vector.broadcast %217 : f32 to vector<8x64xf32>
    %219 = arith.mulf %215, %218 : vector<8x64xf32>
    %c0_153 = arith.constant 0 : index
    %c0_154 = arith.constant 0 : index
    %220 = vector.load %arg7[%c0_153, %c0_154] : memref<1x64xf32, #tpu.memory_space<vmem>>, vector<1x64xf32>
    %221 = vector.broadcast %220 : vector<1x64xf32> to vector<8x64xf32>
    %222 = arith.mulf %219, %221 : vector<8x64xf32>
    %c0_155 = arith.constant 0 : index
    %c0_156 = arith.constant 0 : index
    %223 = vector.load %arg8[%c0_155, %c0_156] : memref<1x64xf32, #tpu.memory_space<vmem>>, vector<1x64xf32>
    %224 = vector.broadcast %223 : vector<1x64xf32> to vector<8x64xf32>
    %225 = arith.addf %222, %224 : vector<8x64xf32>
    %c1_157 = arith.constant 1 : index
    %c0_158 = arith.constant 0 : index
    %c0_159 = arith.constant 0 : index
    %226 = vector.load %arg2[%c1_157, %c0_158, %c0_159] : memref<2x9x72xbf16, #tpu.memory_space<vmem>>, vector<1x8x72xbf16>
    %227 = vector.shape_cast %226 : vector<1x8x72xbf16> to vector<8x72xbf16>
    %c0_160 = arith.constant 0 : index
    %c0_161 = arith.constant 0 : index
    %228 = vector.load %arg9[%c0_160, %c0_161] : memref<72x64xbf16, #tpu.memory_space<vmem>>, vector<72x64xbf16>
    %cst_162 = arith.constant dense<0.000000e+00> : vector<8x64xf32>
    %229 = tpu.matmul %227, %228, %cst_162 {dimension_numbers = #tpu.dot_dimension_numbers<[1], [0], [0], [1], [0, 0, 1, 1], [], []>} : vector<8x72xbf16>, vector<72x64xbf16>, vector<8x64xf32> -> vector<8x64xf32>
    %230 = vector.shape_cast %229 : vector<8x64xf32> to vector<1x8x64xf32>
    %cst_163 = arith.constant dense<0.000000e+00> : vector<1xf32>
    %231 = vector.multi_reduction <add>, %230, %cst_163 [1, 2] : vector<1x8x64xf32> to vector<1xf32>
    %232 = vector.shape_cast %231 : vector<1xf32> to vector<1x1x1xf32>
    %233 = vector.extract %232[0, 0, 0] : f32 from vector<1x1x1xf32>
    %cst_164 = arith.constant 0.001953125 : f32
    %234 = arith.mulf %233, %cst_164 : f32
    %235 = arith.mulf %229, %229 : vector<8x64xf32>
    %236 = vector.shape_cast %235 : vector<8x64xf32> to vector<1x8x64xf32>
    %cst_165 = arith.constant dense<0.000000e+00> : vector<1xf32>
    %237 = vector.multi_reduction <add>, %236, %cst_165 [1, 2] : vector<1x8x64xf32> to vector<1xf32>
    %238 = vector.shape_cast %237 : vector<1xf32> to vector<1x1x1xf32>
    %239 = vector.extract %238[0, 0, 0] : f32 from vector<1x1x1xf32>
    %cst_166 = arith.constant 0.001953125 : f32
    %240 = arith.mulf %239, %cst_166 : f32
    %241 = arith.mulf %234, %234 : f32
    %242 = arith.subf %240, %241 : f32
    %cst_167 = arith.constant 0.000000e+00 : f32
    %243 = arith.maximumf %242, %cst_167 : f32
    %244 = vector.broadcast %234 : f32 to vector<8x64xf32>
    %245 = arith.subf %229, %244 : vector<8x64xf32>
    %cst_168 = arith.constant 9.99999974E-6 : f32
    %246 = arith.addf %243, %cst_168 : f32
    %247 = math.rsqrt %246 : f32
    %248 = vector.broadcast %247 : f32 to vector<8x64xf32>
    %249 = arith.mulf %245, %248 : vector<8x64xf32>
    %c0_169 = arith.constant 0 : index
    %c0_170 = arith.constant 0 : index
    %250 = vector.load %arg10[%c0_169, %c0_170] : memref<1x64xf32, #tpu.memory_space<vmem>>, vector<1x64xf32>
    %251 = vector.broadcast %250 : vector<1x64xf32> to vector<8x64xf32>
    %252 = arith.mulf %249, %251 : vector<8x64xf32>
    %c0_171 = arith.constant 0 : index
    %c0_172 = arith.constant 0 : index
    %253 = vector.load %arg11[%c0_171, %c0_172] : memref<1x64xf32, #tpu.memory_space<vmem>>, vector<1x64xf32>
    %254 = vector.broadcast %253 : vector<1x64xf32> to vector<8x64xf32>
    %255 = arith.addf %252, %254 : vector<8x64xf32>
    %256 = arith.addf %225, %255 : vector<8x64xf32>
    %cst_173 = arith.constant 0.000000e+00 : f32
    %257 = vector.broadcast %cst_173 : f32 to vector<8x64xf32>
    %258 = arith.maximumf %256, %257 : vector<8x64xf32>
    %259 = arith.truncf %258 : vector<8x64xf32> to vector<8x64xbf16>
    %c1_174 = arith.constant 1 : index
    %c0_175 = arith.constant 0 : index
    %c0_176 = arith.constant 0 : index
    %260 = vector.load %arg12[%c1_174, %c0_175, %c0_176] : memref<2x8x64xbf16, #tpu.memory_space<vmem>>, vector<1x8x64xbf16>
    %261 = vector.shape_cast %260 : vector<1x8x64xbf16> to vector<8x64xbf16>
    %262 = vector.shape_cast %259 : vector<8x64xbf16> to vector<1x8x64xbf16>
    tpu.vector_store %arg12[%c1_174, %c0_175, %c0_176], %262 {strides = array<i32>} : memref<2x8x64xbf16, #tpu.memory_space<vmem>>, vector<1x8x64xbf16>,
    return
  }
  func.func @transform_0(%arg0: i32) -> (i32, i32, i32) {
    %c0_i32 = arith.constant 0 : i32
    %c0_i32_0 = arith.constant 0 : i32
    %c0_i32_1 = arith.constant 0 : i32
    return %arg0, %c0_i32, %c0_i32_0 : i32, i32, i32
  }
  func.func @transform_1(%arg0: i32) -> (i32, i32, i32) {
    %c0_i32 = arith.constant 0 : i32
    %c0_i32_0 = arith.constant 0 : i32
    %c0_i32_1 = arith.constant 0 : i32
    return %arg0, %c0_i32, %c0_i32_0 : i32, i32, i32
  }
  func.func @transform_2(%arg0: i32) -> (i32, i32, i32) {
    %c0_i32 = arith.constant 0 : i32
    %c0_i32_0 = arith.constant 0 : i32
    %c0_i32_1 = arith.constant 0 : i32
    %c0_i32_2 = arith.constant 0 : i32
    return %c0_i32, %c0_i32_0, %c0_i32_1 : i32, i32, i32
  }
  func.func @transform_3(%arg0: i32) -> (i32, i32) {
    %c0_i32 = arith.constant 0 : i32
    %c0_i32_0 = arith.constant 0 : i32
    %c0_i32_1 = arith.constant 0 : i32
    return %c0_i32, %c0_i32_0 : i32, i32
  }
  func.func @transform_4(%arg0: i32) -> (i32, i32) {
    %c0_i32 = arith.constant 0 : i32
    %c0_i32_0 = arith.constant 0 : i32
    %c0_i32_1 = arith.constant 0 : i32
    return %c0_i32, %c0_i32_0 : i32, i32
  }
  func.func @transform_5(%arg0: i32) -> (i32, i32, i32) {
    %c0_i32 = arith.constant 0 : i32
    %c0_i32_0 = arith.constant 0 : i32
    %c0_i32_1 = arith.constant 0 : i32
    %c0_i32_2 = arith.constant 0 : i32
    return %c0_i32, %c0_i32_0, %c0_i32_1 : i32, i32, i32
  }
  func.func @transform_6(%arg0: i32) -> (i32, i32) {
    %c0_i32 = arith.constant 0 : i32
    %c0_i32_0 = arith.constant 0 : i32
    %c0_i32_1 = arith.constant 0 : i32
    return %c0_i32, %c0_i32_0 : i32, i32
  }
  func.func @transform_7(%arg0: i32) -> (i32, i32) {
    %c0_i32 = arith.constant 0 : i32
    %c0_i32_0 = arith.constant 0 : i32
    %c0_i32_1 = arith.constant 0 : i32
    return %c0_i32, %c0_i32_0 : i32, i32
  }
  func.func @transform_8(%arg0: i32) -> (i32, i32) {
    %c0_i32 = arith.constant 0 : i32
    %c0_i32_0 = arith.constant 0 : i32
    %c0_i32_1 = arith.constant 0 : i32
    return %c0_i32, %c0_i32_0 : i32, i32
  }
  func.func @transform_9(%arg0: i32) -> (i32, i32) {
    %c0_i32 = arith.constant 0 : i32
    %c0_i32_0 = arith.constant 0 : i32
    %c0_i32_1 = arith.constant 0 : i32
    return %c0_i32, %c0_i32_0 : i32, i32
  }
  func.func @transform_10(%arg0: i32) -> (i32, i32) {
    %c0_i32 = arith.constant 0 : i32
    %c0_i32_0 = arith.constant 0 : i32
    %c0_i32_1 = arith.constant 0 : i32
    return %c0_i32, %c0_i32_0 : i32, i32
  }
  func.func @transform_11(%arg0: i32) -> (i32, i32, i32) {
    %c0_i32 = arith.constant 0 : i32
    %c0_i32_0 = arith.constant 0 : i32
    %c0_i32_1 = arith.constant 0 : i32
    return %arg0, %c0_i32, %c0_i32_0 : i32, i32, i32
  }
}

module attributes {stable_mosaic.version = 11 : i64} {
  func.func @kernel(%arg0: i32, %arg1: memref<2x9x72xbf16, #tpu.memory_space<vmem>>, %arg2: memref<2x9x72xbf16, #tpu.memory_space<vmem>>, %arg3: memref<3x72x64xbf16, #tpu.memory_space<vmem>>, %arg4: memref<1x64xf32, #tpu.memory_space<vmem>>, %arg5: memref<1x64xf32, #tpu.memory_space<vmem>>, %arg6: memref<3x80x64xbf16, #tpu.memory_space<vmem>>, %arg7: memref<1x64xf32, #tpu.memory_space<vmem>>, %arg8: memref<1x64xf32, #tpu.memory_space<vmem>>, %arg9: memref<72x64xbf16, #tpu.memory_space<vmem>>, %arg10: memref<1x64xf32, #tpu.memory_space<vmem>>, %arg11: memref<1x64xf32, #tpu.memory_space<vmem>>, %arg12: memref<2x8x64xbf16, #tpu.memory_space<vmem>>, %arg13: memref<2x10x80xbf16, #tpu.memory_space<vmem>>) attributes {dimension_semantics = [#tpu.dimension_semantics<parallel>], iteration_bounds = array<i64: 1>, scalar_prefetch = 0 : i64, scratch_operands = 1 : i64, tpu.core_type = #tpu.core_type<tc>, window_params = [{transform_indices = @transform_0, window_bounds = array<i64: 2, 9, 72>}, {transform_indices = @transform_1, window_bounds = array<i64: 2, 9, 72>}, {pipeline_mode = #tpu.pipeline_mode<synchronous>, transform_indices = @transform_2, window_bounds = array<i64: 3, 72, 64>}, {pipeline_mode = #tpu.pipeline_mode<synchronous>, transform_indices = @transform_3, window_bounds = array<i64: 1, 64>}, {pipeline_mode = #tpu.pipeline_mode<synchronous>, transform_indices = @transform_4, window_bounds = array<i64: 1, 64>}, {pipeline_mode = #tpu.pipeline_mode<synchronous>, transform_indices = @transform_5, window_bounds = array<i64: 3, 80, 64>}, {pipeline_mode = #tpu.pipeline_mode<synchronous>, transform_indices = @transform_6, window_bounds = array<i64: 1, 64>}, {pipeline_mode = #tpu.pipeline_mode<synchronous>, transform_indices = @transform_7, window_bounds = array<i64: 1, 64>}, {pipeline_mode = #tpu.pipeline_mode<synchronous>, transform_indices = @transform_8, window_bounds = array<i64: 72, 64>}, {pipeline_mode = #tpu.pipeline_mode<synchronous>, transform_indices = @transform_9, window_bounds = array<i64: 1, 64>}, {pipeline_mode = #tpu.pipeline_mode<synchronous>, transform_indices = @transform_10, window_bounds = array<i64: 1, 64>}, {transform_indices = @transform_11, window_bounds = array<i64: 2, 8, 64>}]} {
    %cst = arith.constant 0.000000e+00 : bf16
    %0 = vector.broadcast %cst : bf16 to vector<2x1x80xbf16>
    %c0 = arith.constant 0 : index
    %c0_0 = arith.constant 0 : index
    %c0_1 = arith.constant 0 : index
    %1 = vector.load %arg13[%c0, %c0_0, %c0_1] : memref<2x10x80xbf16, #tpu.memory_space<vmem>>, vector<2x1x80xbf16>
    tpu.vector_store %arg13[%c0, %c0_0, %c0_1], %0 {strides = array<i32>} : memref<2x10x80xbf16, #tpu.memory_space<vmem>>, vector<2x1x80xbf16>,
    %c0_2 = arith.constant 0 : index
    %c9 = arith.constant 9 : index
    %c0_3 = arith.constant 0 : index
    %2 = vector.load %arg13[%c0_2, %c9, %c0_3] : memref<2x10x80xbf16, #tpu.memory_space<vmem>>, vector<2x1x80xbf16>
    tpu.vector_store %arg13[%c0_2, %c9, %c0_3], %0 {strides = array<i32>} : memref<2x10x80xbf16, #tpu.memory_space<vmem>>, vector<2x1x80xbf16>,
    %cst_4 = arith.constant 0.000000e+00 : bf16
    %3 = vector.broadcast %cst_4 : bf16 to vector<2x10x16xbf16>
    %c0_5 = arith.constant 0 : index
    %c0_6 = arith.constant 0 : index
    %c64 = arith.constant 64 : index
    %4 = vector.load %arg13[%c0_5, %c0_6, %c64] : memref<2x10x80xbf16, #tpu.memory_space<vmem>>, vector<2x10x16xbf16>
    tpu.vector_store %arg13[%c0_5, %c0_6, %c64], %3 {strides = array<i32>} : memref<2x10x80xbf16, #tpu.memory_space<vmem>>, vector<2x10x16xbf16>,
    %c0_7 = arith.constant 0 : index
    %c0_8 = arith.constant 0 : index
    %c0_9 = arith.constant 0 : index
    %5 = vector.load %arg1[%c0_7, %c0_8, %c0_9] : memref<2x9x72xbf16, #tpu.memory_space<vmem>>, vector<1x8x72xbf16>
    %6 = vector.shape_cast %5 : vector<1x8x72xbf16> to vector<8x72xbf16>
    %c0_10 = arith.constant 0 : index
    %c0_11 = arith.constant 0 : index
    %c0_12 = arith.constant 0 : index
    %7 = vector.load %arg3[%c0_10, %c0_11, %c0_12] : memref<3x72x64xbf16, #tpu.memory_space<vmem>>, vector<1x72x64xbf16>
    %8 = vector.shape_cast %7 : vector<1x72x64xbf16> to vector<72x64xbf16>
    %cst_13 = arith.constant dense<0.000000e+00> : vector<8x64xf32>
    %9 = tpu.matmul %6, %8, %cst_13 {dimension_numbers = #tpu.dot_dimension_numbers<[1], [0], [0], [1], [0, 0, 1, 1], [], []>} : vector<8x72xbf16>, vector<72x64xbf16>, vector<8x64xf32> -> vector<8x64xf32>
    %c0_14 = arith.constant 0 : index
    %c0_15 = arith.constant 0 : index
    %c0_16 = arith.constant 0 : index
    %10 = vector.load %arg2[%c0_14, %c0_15, %c0_16] : memref<2x9x72xbf16, #tpu.memory_space<vmem>>, vector<1x8x72xbf16>
    %11 = vector.shape_cast %10 : vector<1x8x72xbf16> to vector<8x72xbf16>
    %c1 = arith.constant 1 : index
    %c0_17 = arith.constant 0 : index
    %c0_18 = arith.constant 0 : index
    %12 = vector.load %arg3[%c1, %c0_17, %c0_18] : memref<3x72x64xbf16, #tpu.memory_space<vmem>>, vector<1x72x64xbf16>
    %13 = vector.shape_cast %12 : vector<1x72x64xbf16> to vector<72x64xbf16>
    %cst_19 = arith.constant dense<0.000000e+00> : vector<8x64xf32>
    %14 = tpu.matmul %11, %13, %cst_19 {dimension_numbers = #tpu.dot_dimension_numbers<[1], [0], [0], [1], [0, 0, 1, 1], [], []>} : vector<8x72xbf16>, vector<72x64xbf16>, vector<8x64xf32> -> vector<8x64xf32>
    %15 = arith.addf %9, %14 : vector<8x64xf32>
    %c0_20 = arith.constant 0 : index
    %c1_21 = arith.constant 1 : index
    %c0_22 = arith.constant 0 : index
    %16 = vector.load %arg1[%c0_20, %c1_21, %c0_22] : memref<2x9x72xbf16, #tpu.memory_space<vmem>>, vector<1x8x72xbf16>
    %17 = vector.shape_cast %16 : vector<1x8x72xbf16> to vector<8x72xbf16>
    %c2 = arith.constant 2 : index
    %c0_23 = arith.constant 0 : index
    %c0_24 = arith.constant 0 : index
    %18 = vector.load %arg3[%c2, %c0_23, %c0_24] : memref<3x72x64xbf16, #tpu.memory_space<vmem>>, vector<1x72x64xbf16>
    %19 = vector.shape_cast %18 : vector<1x72x64xbf16> to vector<72x64xbf16>
    %cst_25 = arith.constant dense<0.000000e+00> : vector<8x64xf32>
    %20 = tpu.matmul %17, %19, %cst_25 {dimension_numbers = #tpu.dot_dimension_numbers<[1], [0], [0], [1], [0, 0, 1, 1], [], []>} : vector<8x72xbf16>, vector<72x64xbf16>, vector<8x64xf32> -> vector<8x64xf32>
    %21 = arith.addf %15, %20 : vector<8x64xf32>
    %22 = vector.shape_cast %21 : vector<8x64xf32> to vector<1x8x64xf32>
    %cst_26 = arith.constant dense<0.000000e+00> : vector<1xf32>
    %23 = vector.multi_reduction <add>, %22, %cst_26 [1, 2] : vector<1x8x64xf32> to vector<1xf32>
    %24 = vector.shape_cast %23 : vector<1xf32> to vector<1x1x1xf32>
    %25 = vector.extract %24[0, 0, 0] : f32 from vector<1x1x1xf32>
    %cst_27 = arith.constant 0.001953125 : f32
    %26 = arith.mulf %25, %cst_27 : f32
    %27 = arith.mulf %21, %21 : vector<8x64xf32>
    %28 = vector.shape_cast %27 : vector<8x64xf32> to vector<1x8x64xf32>
    %cst_28 = arith.constant dense<0.000000e+00> : vector<1xf32>
    %29 = vector.multi_reduction <add>, %28, %cst_28 [1, 2] : vector<1x8x64xf32> to vector<1xf32>
    %30 = vector.shape_cast %29 : vector<1xf32> to vector<1x1x1xf32>
    %31 = vector.extract %30[0, 0, 0] : f32 from vector<1x1x1xf32>
    %cst_29 = arith.constant 0.001953125 : f32
    %32 = arith.mulf %31, %cst_29 : f32
    %33 = arith.mulf %26, %26 : f32
    %34 = arith.subf %32, %33 : f32
    %cst_30 = arith.constant 0.000000e+00 : f32
    %35 = arith.maximumf %34, %cst_30 : f32
    %36 = vector.broadcast %26 : f32 to vector<8x64xf32>
    %37 = arith.subf %21, %36 : vector<8x64xf32>
    %cst_31 = arith.constant 9.99999974E-6 : f32
    %38 = arith.addf %35, %cst_31 : f32
    %39 = math.rsqrt %38 : f32
    %40 = vector.broadcast %39 : f32 to vector<8x64xf32>
    %41 = arith.mulf %37, %40 : vector<8x64xf32>
    %c0_32 = arith.constant 0 : index
    %c0_33 = arith.constant 0 : index
    %42 = vector.load %arg4[%c0_32, %c0_33] : memref<1x64xf32, #tpu.memory_space<vmem>>, vector<1x64xf32>
    %43 = vector.broadcast %42 : vector<1x64xf32> to vector<8x64xf32>
    %44 = arith.mulf %41, %43 : vector<8x64xf32>
    %c0_34 = arith.constant 0 : index
    %c0_35 = arith.constant 0 : index
    %45 = vector.load %arg5[%c0_34, %c0_35] : memref<1x64xf32, #tpu.memory_space<vmem>>, vector<1x64xf32>
    %46 = vector.broadcast %45 : vector<1x64xf32> to vector<8x64xf32>
    %47 = arith.addf %44, %46 : vector<8x64xf32>
    %cst_36 = arith.constant 0.000000e+00 : f32
    %48 = vector.broadcast %cst_36 : f32 to vector<8x64xf32>
    %49 = arith.maximumf %47, %48 : vector<8x64xf32>
    %50 = arith.truncf %49 : vector<8x64xf32> to vector<8x64xbf16>
    %c0_37 = arith.constant 0 : index
    %c1_38 = arith.constant 1 : index
    %c0_39 = arith.constant 0 : index
    %51 = vector.load %arg13[%c0_37, %c1_38, %c0_39] : memref<2x10x80xbf16, #tpu.memory_space<vmem>>, vector<1x8x64xbf16>
    %52 = vector.shape_cast %51 : vector<1x8x64xbf16> to vector<8x64xbf16>
    %53 = vector.shape_cast %50 : vector<8x64xbf16> to vector<1x8x64xbf16>
    tpu.vector_store %arg13[%c0_37, %c1_38, %c0_39], %53 {strides = array<i32>} : memref<2x10x80xbf16, #tpu.memory_space<vmem>>, vector<1x8x64xbf16>,
    %c0_40 = arith.constant 0 : index
    %c0_41 = arith.constant 0 : index
    %c0_42 = arith.constant 0 : index
    %54 = vector.load %arg13[%c0_40, %c0_41, %c0_42] : memref<2x10x80xbf16, #tpu.memory_space<vmem>>, vector<1x8x80xbf16>
    %55 = vector.shape_cast %54 : vector<1x8x80xbf16> to vector<8x80xbf16>
    %c0_43 = arith.constant 0 : index
    %c0_44 = arith.constant 0 : index
    %c0_45 = arith.constant 0 : index
    %56 = vector.load %arg6[%c0_43, %c0_44, %c0_45] : memref<3x80x64xbf16, #tpu.memory_space<vmem>>, vector<1x80x64xbf16>
    %57 = vector.shape_cast %56 : vector<1x80x64xbf16> to vector<80x64xbf16>
    %cst_46 = arith.constant dense<0.000000e+00> : vector<8x64xf32>
    %58 = tpu.matmul %55, %57, %cst_46 {dimension_numbers = #tpu.dot_dimension_numbers<[1], [0], [0], [1], [0, 0, 1, 1], [], []>} : vector<8x80xbf16>, vector<80x64xbf16>, vector<8x64xf32> -> vector<8x64xf32>
    %c0_47 = arith.constant 0 : index
    %c1_48 = arith.constant 1 : index
    %c0_49 = arith.constant 0 : index
    %59 = vector.load %arg13[%c0_47, %c1_48, %c0_49] : memref<2x10x80xbf16, #tpu.memory_space<vmem>>, vector<1x8x80xbf16>
    %60 = vector.shape_cast %59 : vector<1x8x80xbf16> to vector<8x80xbf16>
    %c1_50 = arith.constant 1 : index
    %c0_51 = arith.constant 0 : index
    %c0_52 = arith.constant 0 : index
    %61 = vector.load %arg6[%c1_50, %c0_51, %c0_52] : memref<3x80x64xbf16, #tpu.memory_space<vmem>>, vector<1x80x64xbf16>
    %62 = vector.shape_cast %61 : vector<1x80x64xbf16> to vector<80x64xbf16>
    %cst_53 = arith.constant dense<0.000000e+00> : vector<8x64xf32>
    %63 = tpu.matmul %60, %62, %cst_53 {dimension_numbers = #tpu.dot_dimension_numbers<[1], [0], [0], [1], [0, 0, 1, 1], [], []>} : vector<8x80xbf16>, vector<80x64xbf16>, vector<8x64xf32> -> vector<8x64xf32>
    %64 = arith.addf %58, %63 : vector<8x64xf32>
    %c0_54 = arith.constant 0 : index
    %c2_55 = arith.constant 2 : index
    %c0_56 = arith.constant 0 : index
    %65 = vector.load %arg13[%c0_54, %c2_55, %c0_56] : memref<2x10x80xbf16, #tpu.memory_space<vmem>>, vector<1x8x80xbf16>
    %66 = vector.shape_cast %65 : vector<1x8x80xbf16> to vector<8x80xbf16>
    %c2_57 = arith.constant 2 : index
    %c0_58 = arith.constant 0 : index
    %c0_59 = arith.constant 0 : index
    %67 = vector.load %arg6[%c2_57, %c0_58, %c0_59] : memref<3x80x64xbf16, #tpu.memory_space<vmem>>, vector<1x80x64xbf16>
    %68 = vector.shape_cast %67 : vector<1x80x64xbf16> to vector<80x64xbf16>
    %cst_60 = arith.constant dense<0.000000e+00> : vector<8x64xf32>
    %69 = tpu.matmul %66, %68, %cst_60 {dimension_numbers = #tpu.dot_dimension_numbers<[1], [0], [0], [1], [0, 0, 1, 1], [], []>} : vector<8x80xbf16>, vector<80x64xbf16>, vector<8x64xf32> -> vector<8x64xf32>
    %70 = arith.addf %64, %69 : vector<8x64xf32>
    %71 = vector.shape_cast %70 : vector<8x64xf32> to vector<1x8x64xf32>
    %cst_61 = arith.constant dense<0.000000e+00> : vector<1xf32>
    %72 = vector.multi_reduction <add>, %71, %cst_61 [1, 2] : vector<1x8x64xf32> to vector<1xf32>
    %73 = vector.shape_cast %72 : vector<1xf32> to vector<1x1x1xf32>
    %74 = vector.extract %73[0, 0, 0] : f32 from vector<1x1x1xf32>
    %cst_62 = arith.constant 0.001953125 : f32
    %75 = arith.mulf %74, %cst_62 : f32
    %76 = arith.mulf %70, %70 : vector<8x64xf32>
    %77 = vector.shape_cast %76 : vector<8x64xf32> to vector<1x8x64xf32>
    %cst_63 = arith.constant dense<0.000000e+00> : vector<1xf32>
    %78 = vector.multi_reduction <add>, %77, %cst_63 [1, 2] : vector<1x8x64xf32> to vector<1xf32>
    %79 = vector.shape_cast %78 : vector<1xf32> to vector<1x1x1xf32>
    %80 = vector.extract %79[0, 0, 0] : f32 from vector<1x1x1xf32>
    %cst_64 = arith.constant 0.001953125 : f32
    %81 = arith.mulf %80, %cst_64 : f32
    %82 = arith.mulf %75, %75 : f32
    %83 = arith.subf %81, %82 : f32
    %cst_65 = arith.constant 0.000000e+00 : f32
    %84 = arith.maximumf %83, %cst_65 : f32
    %85 = vector.broadcast %75 : f32 to vector<8x64xf32>
    %86 = arith.subf %70, %85 : vector<8x64xf32>
    %cst_66 = arith.constant 9.99999974E-6 : f32
    %87 = arith.addf %84, %cst_66 : f32
    %88 = math.rsqrt %87 : f32
    %89 = vector.broadcast %88 : f32 to vector<8x64xf32>
    %90 = arith.mulf %86, %89 : vector<8x64xf32>
    %c0_67 = arith.constant 0 : index
    %c0_68 = arith.constant 0 : index
    %91 = vector.load %arg7[%c0_67, %c0_68] : memref<1x64xf32, #tpu.memory_space<vmem>>, vector<1x64xf32>
    %92 = vector.broadcast %91 : vector<1x64xf32> to vector<8x64xf32>
    %93 = arith.mulf %90, %92 : vector<8x64xf32>
    %c0_69 = arith.constant 0 : index
    %c0_70 = arith.constant 0 : index
    %94 = vector.load %arg8[%c0_69, %c0_70] : memref<1x64xf32, #tpu.memory_space<vmem>>, vector<1x64xf32>
    %95 = vector.broadcast %94 : vector<1x64xf32> to vector<8x64xf32>
    %96 = arith.addf %93, %95 : vector<8x64xf32>
    %c0_71 = arith.constant 0 : index
    %c0_72 = arith.constant 0 : index
    %c0_73 = arith.constant 0 : index
    %97 = vector.load %arg2[%c0_71, %c0_72, %c0_73] : memref<2x9x72xbf16, #tpu.memory_space<vmem>>, vector<1x8x72xbf16>
    %98 = vector.shape_cast %97 : vector<1x8x72xbf16> to vector<8x72xbf16>
    %c0_74 = arith.constant 0 : index
    %c0_75 = arith.constant 0 : index
    %99 = vector.load %arg9[%c0_74, %c0_75] : memref<72x64xbf16, #tpu.memory_space<vmem>>, vector<72x64xbf16>
    %cst_76 = arith.constant dense<0.000000e+00> : vector<8x64xf32>
    %100 = tpu.matmul %98, %99, %cst_76 {dimension_numbers = #tpu.dot_dimension_numbers<[1], [0], [0], [1], [0, 0, 1, 1], [], []>} : vector<8x72xbf16>, vector<72x64xbf16>, vector<8x64xf32> -> vector<8x64xf32>
    %101 = vector.shape_cast %100 : vector<8x64xf32> to vector<1x8x64xf32>
    %cst_77 = arith.constant dense<0.000000e+00> : vector<1xf32>
    %102 = vector.multi_reduction <add>, %101, %cst_77 [1, 2] : vector<1x8x64xf32> to vector<1xf32>
    %103 = vector.shape_cast %102 : vector<1xf32> to vector<1x1x1xf32>
    %104 = vector.extract %103[0, 0, 0] : f32 from vector<1x1x1xf32>
    %cst_78 = arith.constant 0.001953125 : f32
    %105 = arith.mulf %104, %cst_78 : f32
    %106 = arith.mulf %100, %100 : vector<8x64xf32>
    %107 = vector.shape_cast %106 : vector<8x64xf32> to vector<1x8x64xf32>
    %cst_79 = arith.constant dense<0.000000e+00> : vector<1xf32>
    %108 = vector.multi_reduction <add>, %107, %cst_79 [1, 2] : vector<1x8x64xf32> to vector<1xf32>
    %109 = vector.shape_cast %108 : vector<1xf32> to vector<1x1x1xf32>
    %110 = vector.extract %109[0, 0, 0] : f32 from vector<1x1x1xf32>
    %cst_80 = arith.constant 0.001953125 : f32
    %111 = arith.mulf %110, %cst_80 : f32
    %112 = arith.mulf %105, %105 : f32
    %113 = arith.subf %111, %112 : f32
    %cst_81 = arith.constant 0.000000e+00 : f32
    %114 = arith.maximumf %113, %cst_81 : f32
    %115 = vector.broadcast %105 : f32 to vector<8x64xf32>
    %116 = arith.subf %100, %115 : vector<8x64xf32>
    %cst_82 = arith.constant 9.99999974E-6 : f32
    %117 = arith.addf %114, %cst_82 : f32
    %118 = math.rsqrt %117 : f32
    %119 = vector.broadcast %118 : f32 to vector<8x64xf32>
    %120 = arith.mulf %116, %119 : vector<8x64xf32>
    %c0_83 = arith.constant 0 : index
    %c0_84 = arith.constant 0 : index
    %121 = vector.load %arg10[%c0_83, %c0_84] : memref<1x64xf32, #tpu.memory_space<vmem>>, vector<1x64xf32>
    %122 = vector.broadcast %121 : vector<1x64xf32> to vector<8x64xf32>
    %123 = arith.mulf %120, %122 : vector<8x64xf32>
    %c0_85 = arith.constant 0 : index
    %c0_86 = arith.constant 0 : index
    %124 = vector.load %arg11[%c0_85, %c0_86] : memref<1x64xf32, #tpu.memory_space<vmem>>, vector<1x64xf32>
    %125 = vector.broadcast %124 : vector<1x64xf32> to vector<8x64xf32>
    %126 = arith.addf %123, %125 : vector<8x64xf32>
    %127 = arith.addf %96, %126 : vector<8x64xf32>
    %cst_87 = arith.constant 0.000000e+00 : f32
    %128 = vector.broadcast %cst_87 : f32 to vector<8x64xf32>
    %129 = arith.maximumf %127, %128 : vector<8x64xf32>
    %130 = arith.truncf %129 : vector<8x64xf32> to vector<8x64xbf16>
    %c0_88 = arith.constant 0 : index
    %c0_89 = arith.constant 0 : index
    %c0_90 = arith.constant 0 : index
    %131 = vector.load %arg12[%c0_88, %c0_89, %c0_90] : memref<2x8x64xbf16, #tpu.memory_space<vmem>>, vector<1x8x64xbf16>
    %132 = vector.shape_cast %131 : vector<1x8x64xbf16> to vector<8x64xbf16>
    %133 = vector.shape_cast %130 : vector<8x64xbf16> to vector<1x8x64xbf16>
    tpu.vector_store %arg12[%c0_88, %c0_89, %c0_90], %133 {strides = array<i32>} : memref<2x8x64xbf16, #tpu.memory_space<vmem>>, vector<1x8x64xbf16>,
    %c1_91 = arith.constant 1 : index
    %c0_92 = arith.constant 0 : index
    %c0_93 = arith.constant 0 : index
    %134 = vector.load %arg1[%c1_91, %c0_92, %c0_93] : memref<2x9x72xbf16, #tpu.memory_space<vmem>>, vector<1x8x72xbf16>
    %135 = vector.shape_cast %134 : vector<1x8x72xbf16> to vector<8x72xbf16>
    %c0_94 = arith.constant 0 : index
    %c0_95 = arith.constant 0 : index
    %c0_96 = arith.constant 0 : index
    %136 = vector.load %arg3[%c0_94, %c0_95, %c0_96] : memref<3x72x64xbf16, #tpu.memory_space<vmem>>, vector<1x72x64xbf16>
    %137 = vector.shape_cast %136 : vector<1x72x64xbf16> to vector<72x64xbf16>
    %cst_97 = arith.constant dense<0.000000e+00> : vector<8x64xf32>
    %138 = tpu.matmul %135, %137, %cst_97 {dimension_numbers = #tpu.dot_dimension_numbers<[1], [0], [0], [1], [0, 0, 1, 1], [], []>} : vector<8x72xbf16>, vector<72x64xbf16>, vector<8x64xf32> -> vector<8x64xf32>
    %c1_98 = arith.constant 1 : index
    %c0_99 = arith.constant 0 : index
    %c0_100 = arith.constant 0 : index
    %139 = vector.load %arg2[%c1_98, %c0_99, %c0_100] : memref<2x9x72xbf16, #tpu.memory_space<vmem>>, vector<1x8x72xbf16>
    %140 = vector.shape_cast %139 : vector<1x8x72xbf16> to vector<8x72xbf16>
    %c1_101 = arith.constant 1 : index
    %c0_102 = arith.constant 0 : index
    %c0_103 = arith.constant 0 : index
    %141 = vector.load %arg3[%c1_101, %c0_102, %c0_103] : memref<3x72x64xbf16, #tpu.memory_space<vmem>>, vector<1x72x64xbf16>
    %142 = vector.shape_cast %141 : vector<1x72x64xbf16> to vector<72x64xbf16>
    %cst_104 = arith.constant dense<0.000000e+00> : vector<8x64xf32>
    %143 = tpu.matmul %140, %142, %cst_104 {dimension_numbers = #tpu.dot_dimension_numbers<[1], [0], [0], [1], [0, 0, 1, 1], [], []>} : vector<8x72xbf16>, vector<72x64xbf16>, vector<8x64xf32> -> vector<8x64xf32>
    %144 = arith.addf %138, %143 : vector<8x64xf32>
    %c1_105 = arith.constant 1 : index
    %c1_106 = arith.constant 1 : index
    %c0_107 = arith.constant 0 : index
    %145 = vector.load %arg1[%c1_105, %c1_106, %c0_107] : memref<2x9x72xbf16, #tpu.memory_space<vmem>>, vector<1x8x72xbf16>
    %146 = vector.shape_cast %145 : vector<1x8x72xbf16> to vector<8x72xbf16>
    %c2_108 = arith.constant 2 : index
    %c0_109 = arith.constant 0 : index
    %c0_110 = arith.constant 0 : index
    %147 = vector.load %arg3[%c2_108, %c0_109, %c0_110] : memref<3x72x64xbf16, #tpu.memory_space<vmem>>, vector<1x72x64xbf16>
    %148 = vector.shape_cast %147 : vector<1x72x64xbf16> to vector<72x64xbf16>
    %cst_111 = arith.constant dense<0.000000e+00> : vector<8x64xf32>
    %149 = tpu.matmul %146, %148, %cst_111 {dimension_numbers = #tpu.dot_dimension_numbers<[1], [0], [0], [1], [0, 0, 1, 1], [], []>} : vector<8x72xbf16>, vector<72x64xbf16>, vector<8x64xf32> -> vector<8x64xf32>
    %150 = arith.addf %144, %149 : vector<8x64xf32>
    %151 = vector.shape_cast %150 : vector<8x64xf32> to vector<1x8x64xf32>
    %cst_112 = arith.constant dense<0.000000e+00> : vector<1xf32>
    %152 = vector.multi_reduction <add>, %151, %cst_112 [1, 2] : vector<1x8x64xf32> to vector<1xf32>
    %153 = vector.shape_cast %152 : vector<1xf32> to vector<1x1x1xf32>
    %154 = vector.extract %153[0, 0, 0] : f32 from vector<1x1x1xf32>
    %cst_113 = arith.constant 0.001953125 : f32
    %155 = arith.mulf %154, %cst_113 : f32
    %156 = arith.mulf %150, %150 : vector<8x64xf32>
    %157 = vector.shape_cast %156 : vector<8x64xf32> to vector<1x8x64xf32>
    %cst_114 = arith.constant dense<0.000000e+00> : vector<1xf32>
    %158 = vector.multi_reduction <add>, %157, %cst_114 [1, 2] : vector<1x8x64xf32> to vector<1xf32>
    %159 = vector.shape_cast %158 : vector<1xf32> to vector<1x1x1xf32>
    %160 = vector.extract %159[0, 0, 0] : f32 from vector<1x1x1xf32>
    %cst_115 = arith.constant 0.001953125 : f32
    %161 = arith.mulf %160, %cst_115 : f32
    %162 = arith.mulf %155, %155 : f32
    %163 = arith.subf %161, %162 : f32
    %cst_116 = arith.constant 0.000000e+00 : f32
    %164 = arith.maximumf %163, %cst_116 : f32
    %165 = vector.broadcast %155 : f32 to vector<8x64xf32>
    %166 = arith.subf %150, %165 : vector<8x64xf32>
    %cst_117 = arith.constant 9.99999974E-6 : f32
    %167 = arith.addf %164, %cst_117 : f32
    %168 = math.rsqrt %167 : f32
    %169 = vector.broadcast %168 : f32 to vector<8x64xf32>
    %170 = arith.mulf %166, %169 : vector<8x64xf32>
    %c0_118 = arith.constant 0 : index
    %c0_119 = arith.constant 0 : index
    %171 = vector.load %arg4[%c0_118, %c0_119] : memref<1x64xf32, #tpu.memory_space<vmem>>, vector<1x64xf32>
    %172 = vector.broadcast %171 : vector<1x64xf32> to vector<8x64xf32>
    %173 = arith.mulf %170, %172 : vector<8x64xf32>
    %c0_120 = arith.constant 0 : index
    %c0_121 = arith.constant 0 : index
    %174 = vector.load %arg5[%c0_120, %c0_121] : memref<1x64xf32, #tpu.memory_space<vmem>>, vector<1x64xf32>
    %175 = vector.broadcast %174 : vector<1x64xf32> to vector<8x64xf32>
    %176 = arith.addf %173, %175 : vector<8x64xf32>
    %cst_122 = arith.constant 0.000000e+00 : f32
    %177 = vector.broadcast %cst_122 : f32 to vector<8x64xf32>
    %178 = arith.maximumf %176, %177 : vector<8x64xf32>
    %179 = arith.truncf %178 : vector<8x64xf32> to vector<8x64xbf16>
    %c1_123 = arith.constant 1 : index
    %c1_124 = arith.constant 1 : index
    %c0_125 = arith.constant 0 : index
    %180 = vector.load %arg13[%c1_123, %c1_124, %c0_125] : memref<2x10x80xbf16, #tpu.memory_space<vmem>>, vector<1x8x64xbf16>
    %181 = vector.shape_cast %180 : vector<1x8x64xbf16> to vector<8x64xbf16>
    %182 = vector.shape_cast %179 : vector<8x64xbf16> to vector<1x8x64xbf16>
    tpu.vector_store %arg13[%c1_123, %c1_124, %c0_125], %182 {strides = array<i32>} : memref<2x10x80xbf16, #tpu.memory_space<vmem>>, vector<1x8x64xbf16>,
    %c1_126 = arith.constant 1 : index
    %c0_127 = arith.constant 0 : index
    %c0_128 = arith.constant 0 : index
    %183 = vector.load %arg13[%c1_126, %c0_127, %c0_128] : memref<2x10x80xbf16, #tpu.memory_space<vmem>>, vector<1x8x80xbf16>
    %184 = vector.shape_cast %183 : vector<1x8x80xbf16> to vector<8x80xbf16>
    %c0_129 = arith.constant 0 : index
    %c0_130 = arith.constant 0 : index
    %c0_131 = arith.constant 0 : index
    %185 = vector.load %arg6[%c0_129, %c0_130, %c0_131] : memref<3x80x64xbf16, #tpu.memory_space<vmem>>, vector<1x80x64xbf16>
    %186 = vector.shape_cast %185 : vector<1x80x64xbf16> to vector<80x64xbf16>
    %cst_132 = arith.constant dense<0.000000e+00> : vector<8x64xf32>
    %187 = tpu.matmul %184, %186, %cst_132 {dimension_numbers = #tpu.dot_dimension_numbers<[1], [0], [0], [1], [0, 0, 1, 1], [], []>} : vector<8x80xbf16>, vector<80x64xbf16>, vector<8x64xf32> -> vector<8x64xf32>
    %c1_133 = arith.constant 1 : index
    %c1_134 = arith.constant 1 : index
    %c0_135 = arith.constant 0 : index
    %188 = vector.load %arg13[%c1_133, %c1_134, %c0_135] : memref<2x10x80xbf16, #tpu.memory_space<vmem>>, vector<1x8x80xbf16>
    %189 = vector.shape_cast %188 : vector<1x8x80xbf16> to vector<8x80xbf16>
    %c1_136 = arith.constant 1 : index
    %c0_137 = arith.constant 0 : index
    %c0_138 = arith.constant 0 : index
    %190 = vector.load %arg6[%c1_136, %c0_137, %c0_138] : memref<3x80x64xbf16, #tpu.memory_space<vmem>>, vector<1x80x64xbf16>
    %191 = vector.shape_cast %190 : vector<1x80x64xbf16> to vector<80x64xbf16>
    %cst_139 = arith.constant dense<0.000000e+00> : vector<8x64xf32>
    %192 = tpu.matmul %189, %191, %cst_139 {dimension_numbers = #tpu.dot_dimension_numbers<[1], [0], [0], [1], [0, 0, 1, 1], [], []>} : vector<8x80xbf16>, vector<80x64xbf16>, vector<8x64xf32> -> vector<8x64xf32>
    %193 = arith.addf %187, %192 : vector<8x64xf32>
    %c1_140 = arith.constant 1 : index
    %c2_141 = arith.constant 2 : index
    %c0_142 = arith.constant 0 : index
    %194 = vector.load %arg13[%c1_140, %c2_141, %c0_142] : memref<2x10x80xbf16, #tpu.memory_space<vmem>>, vector<1x8x80xbf16>
    %195 = vector.shape_cast %194 : vector<1x8x80xbf16> to vector<8x80xbf16>
    %c2_143 = arith.constant 2 : index
    %c0_144 = arith.constant 0 : index
    %c0_145 = arith.constant 0 : index
    %196 = vector.load %arg6[%c2_143, %c0_144, %c0_145] : memref<3x80x64xbf16, #tpu.memory_space<vmem>>, vector<1x80x64xbf16>
    %197 = vector.shape_cast %196 : vector<1x80x64xbf16> to vector<80x64xbf16>
    %cst_146 = arith.constant dense<0.000000e+00> : vector<8x64xf32>
    %198 = tpu.matmul %195, %197, %cst_146 {dimension_numbers = #tpu.dot_dimension_numbers<[1], [0], [0], [1], [0, 0, 1, 1], [], []>} : vector<8x80xbf16>, vector<80x64xbf16>, vector<8x64xf32> -> vector<8x64xf32>
    %199 = arith.addf %193, %198 : vector<8x64xf32>
    %200 = vector.shape_cast %199 : vector<8x64xf32> to vector<1x8x64xf32>
    %cst_147 = arith.constant dense<0.000000e+00> : vector<1xf32>
    %201 = vector.multi_reduction <add>, %200, %cst_147 [1, 2] : vector<1x8x64xf32> to vector<1xf32>
    %202 = vector.shape_cast %201 : vector<1xf32> to vector<1x1x1xf32>
    %203 = vector.extract %202[0, 0, 0] : f32 from vector<1x1x1xf32>
    %cst_148 = arith.constant 0.001953125 : f32
    %204 = arith.mulf %203, %cst_148 : f32
    %205 = arith.mulf %199, %199 : vector<8x64xf32>
    %206 = vector.shape_cast %205 : vector<8x64xf32> to vector<1x8x64xf32>
    %cst_149 = arith.constant dense<0.000000e+00> : vector<1xf32>
    %207 = vector.multi_reduction <add>, %206, %cst_149 [1, 2] : vector<1x8x64xf32> to vector<1xf32>
    %208 = vector.shape_cast %207 : vector<1xf32> to vector<1x1x1xf32>
    %209 = vector.extract %208[0, 0, 0] : f32 from vector<1x1x1xf32>
    %cst_150 = arith.constant 0.001953125 : f32
    %210 = arith.mulf %209, %cst_150 : f32
    %211 = arith.mulf %204, %204 : f32
    %212 = arith.subf %210, %211 : f32
    %cst_151 = arith.constant 0.000000e+00 : f32
    %213 = arith.maximumf %212, %cst_151 : f32
    %214 = vector.broadcast %204 : f32 to vector<8x64xf32>
    %215 = arith.subf %199, %214 : vector<8x64xf32>
    %cst_152 = arith.constant 9.99999974E-6 : f32
    %216 = arith.addf %213, %cst_152 : f32
    %217 = math.rsqrt %216 : f32
    %218 = vector.broadcast %217 : f32 to vector<8x64xf32>
    %219 = arith.mulf %215, %218 : vector<8x64xf32>
    %c0_153 = arith.constant 0 : index
    %c0_154 = arith.constant 0 : index
    %220 = vector.load %arg7[%c0_153, %c0_154] : memref<1x64xf32, #tpu.memory_space<vmem>>, vector<1x64xf32>
    %221 = vector.broadcast %220 : vector<1x64xf32> to vector<8x64xf32>
    %222 = arith.mulf %219, %221 : vector<8x64xf32>
    %c0_155 = arith.constant 0 : index
    %c0_156 = arith.constant 0 : index
    %223 = vector.load %arg8[%c0_155, %c0_156] : memref<1x64xf32, #tpu.memory_space<vmem>>, vector<1x64xf32>
    %224 = vector.broadcast %223 : vector<1x64xf32> to vector<8x64xf32>
    %225 = arith.addf %222, %224 : vector<8x64xf32>
    %c1_157 = arith.constant 1 : index
    %c0_158 = arith.constant 0 : index
    %c0_159 = arith.constant 0 : index
    %226 = vector.load %arg2[%c1_157, %c0_158, %c0_159] : memref<2x9x72xbf16, #tpu.memory_space<vmem>>, vector<1x8x72xbf16>
    %227 = vector.shape_cast %226 : vector<1x8x72xbf16> to vector<8x72xbf16>
    %c0_160 = arith.constant 0 : index
    %c0_161 = arith.constant 0 : index
    %228 = vector.load %arg9[%c0_160, %c0_161] : memref<72x64xbf16, #tpu.memory_space<vmem>>, vector<72x64xbf16>
    %cst_162 = arith.constant dense<0.000000e+00> : vector<8x64xf32>
    %229 = tpu.matmul %227, %228, %cst_162 {dimension_numbers = #tpu.dot_dimension_numbers<[1], [0], [0], [1], [0, 0, 1, 1], [], []>} : vector<8x72xbf16>, vector<72x64xbf16>, vector<8x64xf32> -> vector<8x64xf32>
    %230 = vector.shape_cast %229 : vector<8x64xf32> to vector<1x8x64xf32>
    %cst_163 = arith.constant dense<0.000000e+00> : vector<1xf32>
    %231 = vector.multi_reduction <add>, %230, %cst_163 [1, 2] : vector<1x8x64xf32> to vector<1xf32>
    %232 = vector.shape_cast %231 : vector<1xf32> to vector<1x1x1xf32>
    %233 = vector.extract %232[0, 0, 0] : f32 from vector<1x1x1xf32>
    %cst_164 = arith.constant 0.001953125 : f32
    %234 = arith.mulf %233, %cst_164 : f32
    %235 = arith.mulf %229, %229 : vector<8x64xf32>
    %236 = vector.shape_cast %235 : vector<8x64xf32> to vector<1x8x64xf32>
    %cst_165 = arith.constant dense<0.000000e+00> : vector<1xf32>
    %237 = vector.multi_reduction <add>, %236, %cst_165 [1, 2] : vector<1x8x64xf32> to vector<1xf32>
    %238 = vector.shape_cast %237 : vector<1xf32> to vector<1x1x1xf32>
    %239 = vector.extract %238[0, 0, 0] : f32 from vector<1x1x1xf32>
    %cst_166 = arith.constant 0.001953125 : f32
    %240 = arith.mulf %239, %cst_166 : f32
    %241 = arith.mulf %234, %234 : f32
    %242 = arith.subf %240, %241 : f32
    %cst_167 = arith.constant 0.000000e+00 : f32
    %243 = arith.maximumf %242, %cst_167 : f32
    %244 = vector.broadcast %234 : f32 to vector<8x64xf32>
    %245 = arith.subf %229, %244 : vector<8x64xf32>
    %cst_168 = arith.constant 9.99999974E-6 : f32
    %246 = arith.addf %243, %cst_168 : f32
    %247 = math.rsqrt %246 : f32
    %248 = vector.broadcast %247 : f32 to vector<8x64xf32>
    %249 = arith.mulf %245, %248 : vector<8x64xf32>
    %c0_169 = arith.constant 0 : index
    %c0_170 = arith.constant 0 : index
    %250 = vector.load %arg10[%c0_169, %c0_170] : memref<1x64xf32, #tpu.memory_space<vmem>>, vector<1x64xf32>
    %251 = vector.broadcast %250 : vector<1x64xf32> to vector<8x64xf32>
    %252 = arith.mulf %249, %251 : vector<8x64xf32>
    %c0_171 = arith.constant 0 : index
    %c0_172 = arith.constant 0 : index
    %253 = vector.load %arg11[%c0_171, %c0_172] : memref<1x64xf32, #tpu.memory_space<vmem>>, vector<1x64xf32>
    %254 = vector.broadcast %253 : vector<1x64xf32> to vector<8x64xf32>
    %255 = arith.addf %252, %254 : vector<8x64xf32>
    %256 = arith.addf %225, %255 : vector<8x64xf32>
    %cst_173 = arith.constant 0.000000e+00 : f32
    %257 = vector.broadcast %cst_173 : f32 to vector<8x64xf32>
    %258 = arith.maximumf %256, %257 : vector<8x64xf32>
    %259 = arith.truncf %258 : vector<8x64xf32> to vector<8x64xbf16>
    %c1_174 = arith.constant 1 : index
    %c0_175 = arith.constant 0 : index
    %c0_176 = arith.constant 0 : index
    %260 = vector.load %arg12[%c1_174, %c0_175, %c0_176] : memref<2x8x64xbf16, #tpu.memory_space<vmem>>, vector<1x8x64xbf16>
    %261 = vector.shape_cast %260 : vector<1x8x64xbf16> to vector<8x64xbf16>
    %262 = vector.shape_cast %259 : vector<8x64xbf16> to vector<1x8x64xbf16>
    tpu.vector_store %arg12[%c1_174, %c0_175, %c0_176], %262 {strides = array<i32>} : memref<2x8x64xbf16, #tpu.memory_space<vmem>>, vector<1x8x64xbf16>,
    return
  }
  func.func @transform_0(%arg0: i32) -> (i32, i32, i32) {
    %c0_i32 = arith.constant 0 : i32
    %c0_i32_0 = arith.constant 0 : i32
    %c0_i32_1 = arith.constant 0 : i32
    return %arg0, %c0_i32, %c0_i32_0 : i32, i32, i32
  }
  func.func @transform_1(%arg0: i32) -> (i32, i32, i32) {
    %c0_i32 = arith.constant 0 : i32
    %c0_i32_0 = arith.constant 0 : i32
    %c0_i32_1 = arith.constant 0 : i32
    return %arg0, %c0_i32, %c0_i32_0 : i32, i32, i32
  }
  func.func @transform_2(%arg0: i32) -> (i32, i32, i32) {
    %c0_i32 = arith.constant 0 : i32
    %c0_i32_0 = arith.constant 0 : i32
    %c0_i32_1 = arith.constant 0 : i32
    %c0_i32_2 = arith.constant 0 : i32
    return %c0_i32, %c0_i32_0, %c0_i32_1 : i32, i32, i32
  }
  func.func @transform_3(%arg0: i32) -> (i32, i32) {
    %c0_i32 = arith.constant 0 : i32
    %c0_i32_0 = arith.constant 0 : i32
    %c0_i32_1 = arith.constant 0 : i32
    return %c0_i32, %c0_i32_0 : i32, i32
  }
  func.func @transform_4(%arg0: i32) -> (i32, i32) {
    %c0_i32 = arith.constant 0 : i32
    %c0_i32_0 = arith.constant 0 : i32
    %c0_i32_1 = arith.constant 0 : i32
    return %c0_i32, %c0_i32_0 : i32, i32
  }
  func.func @transform_5(%arg0: i32) -> (i32, i32, i32) {
    %c0_i32 = arith.constant 0 : i32
    %c0_i32_0 = arith.constant 0 : i32
    %c0_i32_1 = arith.constant 0 : i32
    %c0_i32_2 = arith.constant 0 : i32
    return %c0_i32, %c0_i32_0, %c0_i32_1 : i32, i32, i32
  }
  func.func @transform_6(%arg0: i32) -> (i32, i32) {
    %c0_i32 = arith.constant 0 : i32
    %c0_i32_0 = arith.constant 0 : i32
    %c0_i32_1 = arith.constant 0 : i32
    return %c0_i32, %c0_i32_0 : i32, i32
  }
  func.func @transform_7(%arg0: i32) -> (i32, i32) {
    %c0_i32 = arith.constant 0 : i32
    %c0_i32_0 = arith.constant 0 : i32
    %c0_i32_1 = arith.constant 0 : i32
    return %c0_i32, %c0_i32_0 : i32, i32
  }
  func.func @transform_8(%arg0: i32) -> (i32, i32) {
    %c0_i32 = arith.constant 0 : i32
    %c0_i32_0 = arith.constant 0 : i32
    %c0_i32_1 = arith.constant 0 : i32
    return %c0_i32, %c0_i32_0 : i32, i32
  }
  func.func @transform_9(%arg0: i32) -> (i32, i32) {
    %c0_i32 = arith.constant 0 : i32
    %c0_i32_0 = arith.constant 0 : i32
    %c0_i32_1 = arith.constant 0 : i32
    return %c0_i32, %c0_i32_0 : i32, i32
  }
  func.func @transform_10(%arg0: i32) -> (i32, i32) {
    %c0_i32 = arith.constant 0 : i32
    %c0_i32_0 = arith.constant 0 : i32
    %c0_i32_1 = arith.constant 0 : i32
    return %c0_i32, %c0_i32_0 : i32, i32
  }
  func.func @transform_11(%arg0: i32) -> (i32, i32, i32) {
    %c0_i32 = arith.constant 0 : i32
    %c0_i32_0 = arith.constant 0 : i32
    %c0_i32_1 = arith.constant 0 : i32
    return %arg0, %c0_i32, %c0_i32_0 : i32, i32, i32
  }
}

</mosaic_0001>

<llo_original>
// kernel: tpu_custom_call.1
$region0: #{tpu_custom_call.1}
  #allocation0 [shape = 'u32[]', space=smem, size = 0x4, offset = 0x4, fixed_abs, tag = 'smem constant byte address 0x4 - core index']
  #allocation1 [shape = 'u32[144,128]{1,0:T(1,128)}', space=vmem, size = 0x12000, scoped, tag = 'internal scratch']
  #allocation2 [shape = 'bf16[2,10,80]{2,1,0:T(8,128)(2,1)}', space=vmem, size = 0x2000, scoped, tag = 'scratch operand']
  %s0 = inlined_call_operand.vmem [shape: bf16[2,9,72], index: 0, kind: input, shape index: {}]
  %s1 = inlined_call_operand.vmem [shape: bf16[2,9,72], index: 1, kind: input, shape index: {}]
  %s2 = inlined_call_operand.vmem [shape: bf16[3,72,64], index: 2, kind: input, shape index: {}]
  %s3 = inlined_call_operand.vmem [shape: f32[1,64], index: 3, kind: input, shape index: {}]
  %s4 = inlined_call_operand.vmem [shape: f32[1,64], index: 4, kind: input, shape index: {}]
  %s5 = inlined_call_operand.vmem [shape: bf16[3,80,64], index: 5, kind: input, shape index: {}]
  %s6 = inlined_call_operand.vmem [shape: f32[1,64], index: 6, kind: input, shape index: {}]
  %s7 = inlined_call_operand.vmem [shape: f32[1,64], index: 7, kind: input, shape index: {}]
  %s8 = inlined_call_operand.vmem [shape: bf16[72,64], index: 8, kind: input, shape index: {}]
  %s9 = inlined_call_operand.vmem [shape: f32[1,64], index: 9, kind: input, shape index: {}]
  %s10 = inlined_call_operand.vmem [shape: f32[1,64], index: 10, kind: input, shape index: {}]
  %s11 = inlined_call_operand.hbm [shape: bf16[2,8,64], index: 11, kind: output, shape index: {}]
  %s12 = sld [smem:[#allocation0]]
  $region54: #{tpu_custom_call.1} parent=0
    _
  %s14 = ssub.s32 1, %s12
  %s15 = scalar_select 0, %s14, %s12
  $region1: #{tpu_custom_call.1} parent=0
    #allocation3 [shape = 'u8[4096]{0}', space=vmem, size = 0x1000, scoped, tag = 'output window, operand 0, single buffered']
    #allocation4 [shape = 's32[1]{0}', space=sflag, size = 0x4, scoped, tag = 'scoped memory for tpu_custom_call.1']
    %16 = vsyncpa [#allocation4], 0
    // Predicated region
    $region2: #{tpu_custom_call.1} parent=1 // pred_check
      _
    $region3: #{tpu_custom_call.1} parent=1 // pred_check_branch
      %18 = sbr.rel (0) target = $region5
    $region4: #{tpu_custom_call.1} parent=1 // pred_region
      _
    $region5: #{tpu_custom_call.1} parent=1 // pred_fallthru
      _
    // Predicated region
    $region6: #{tpu_custom_call.1} parent=1 // pred_check
      _
    $region7: #{tpu_custom_call.1} parent=1 // pred_check_branch
      %20 = sbr.rel (0) target = $region9
    $region8: #{tpu_custom_call.1} parent=1 // pred_region
      _
    $region9: #{tpu_custom_call.1} parent=1 // pred_fallthru
      _
    // Predicated region
    $region10: #{tpu_custom_call.1} parent=1 // pred_check
      _
    $region11: #{tpu_custom_call.1} parent=1 // pred_check_branch
      %22 = sbr.rel (0) target = $region13
    $region12: #{tpu_custom_call.1} parent=1 // pred_region
      _
    $region13: #{tpu_custom_call.1} parent=1 // pred_fallthru
      _
    // Predicated region
    $region14: #{tpu_custom_call.1} parent=1 // pred_check
      _
    $region15: #{tpu_custom_call.1} parent=1 // pred_check_branch
      %24 = sbr.rel (0) target = $region17
    $region16: #{tpu_custom_call.1} parent=1 // pred_region
      _
    $region17: #{tpu_custom_call.1} parent=1 // pred_fallthru
      _
    // Predicated region
    $region18: #{tpu_custom_call.1} parent=1 // pred_check
      _
    $region19: #{tpu_custom_call.1} parent=1 // pred_check_branch
      %26 = sbr.rel (0) target = $region21
    $region20: #{tpu_custom_call.1} parent=1 // pred_region
      _
    $region21: #{tpu_custom_call.1} parent=1 // pred_fallthru
      _
    // Predicated region
    $region22: #{tpu_custom_call.1} parent=1 // pred_check
      _
    $region23: #{tpu_custom_call.1} parent=1 // pred_check_branch
      %28 = sbr.rel (0) target = $region25
    $region24: #{tpu_custom_call.1} parent=1 // pred_region
      _
    $region25: #{tpu_custom_call.1} parent=1 // pred_fallthru
      _
    // Predicated region
    $region26: #{tpu_custom_call.1} parent=1 // pred_check
      _
    $region27: #{tpu_custom_call.1} parent=1 // pred_check_branch
      %30 = sbr.rel (0) target = $region29
    $region28: #{tpu_custom_call.1} parent=1 // pred_region
      _
    $region29: #{tpu_custom_call.1} parent=1 // pred_fallthru
      _
    // Predicated region
    $region30: #{tpu_custom_call.1} parent=1 // pred_check
      _
    $region31: #{tpu_custom_call.1} parent=1 // pred_check_branch
      %32 = sbr.rel (0) target = $region33
    $region32: #{tpu_custom_call.1} parent=1 // pred_region
      _
    $region33: #{tpu_custom_call.1} parent=1 // pred_fallthru
      _
    // Predicated region
    $region34: #{tpu_custom_call.1} parent=1 // pred_check
      _
    $region35: #{tpu_custom_call.1} parent=1 // pred_check_branch
      %34 = sbr.rel (0) target = $region37
    $region36: #{tpu_custom_call.1} parent=1 // pred_region
      _
    $region37: #{tpu_custom_call.1} parent=1 // pred_fallthru
      _
    // Predicated region
    $region38: #{tpu_custom_call.1} parent=1 // pred_check
      _
    $region39: #{tpu_custom_call.1} parent=1 // pred_check_branch
      %36 = sbr.rel (0) target = $region41
    $region40: #{tpu_custom_call.1} parent=1 // pred_region
      _
    $region41: #{tpu_custom_call.1} parent=1 // pred_fallthru
      _
    // Predicated region
    $region42: #{tpu_custom_call.1} parent=1 // pred_check
      _
    $region43: #{tpu_custom_call.1} parent=1 // pred_check_branch
      %38 = sbr.rel (0) target = $region45
    $region44: #{tpu_custom_call.1} parent=1 // pred_region
      _
    $region45: #{tpu_custom_call.1} parent=1 // pred_fallthru
      _
    %vm40 = vcmask 647168
    %vm41 = vsmask.f32 256
    %vm42 = vmand %vm40, %vm41
    %v43 = vld [vmem:[#allocation2] sm:$0x1]
    %v44 = vsel %vm42, 0, %v43
    %45 = vst [vmem:[#allocation2] sm:$0x1] %v44
    %v46 = vld [vmem:[#allocation2 + $0x8] sm:$0x1]
    %v47 = vsel %vm42, 0, %v46
    %48 = vst [vmem:[#allocation2 + $0x8] sm:$0x1] %v47
    %vm49 = vsmask.f32 7938
    %vm50 = vmand %vm40, %vm49
    %v51 = vld [vmem:[#allocation2 + $0x4] sm:$0x1]
    %v52 = vsel %vm50, 0, %v51
    %53 = vst [vmem:[#allocation2 + $0x4] sm:$0x1] %v52
    %v54 = vld [vmem:[#allocation2 + $0xc] sm:$0x1]
    %v55 = vsel %vm50, 0, %v54
    %56 = vst [vmem:[#allocation2 + $0xc] sm:$0x1] %v55
    %vm57 = vcmask 650752
    %58 = vst.msk [vmem:[#allocation2] sm:$0xf] %vm57, 0
    %vm59 = vcmask 647680
    %60 = vst.msk [vmem:[#allocation2 + $0x4] sm:$0x1] %vm59, 0
    %61 = vst.msk [vmem:[#allocation2 + $0x8] sm:$0xf] %vm57, 0
    %62 = vst.msk [vmem:[#allocation2 + $0xc] sm:$0x1] %vm59, 0
    %v63 = vld [vmem:[%s0] sm:$0xf]
    %v64 = vld [vmem:[%s2] sm:$0xf]
    %v65 = vld [vmem:[%s2 + $0x4] sm:$0xf]
    %v66 = vld [vmem:[%s2 + $0x8] sm:$0xf]
    %v67 = vld [vmem:[%s2 + $0xc] sm:$0xf]
    %v68 = vld [vmem:[%s2 + $0x10] sm:$0xf]
    %v69 = vld [vmem:[%s2 + $0x14] sm:$0xf]
    %v70 = vld [vmem:[%s2 + $0x18] sm:$0xf]
    %v71 = vld [vmem:[%s2 + $0x1c] sm:$0xf]
    %v72 = vld [vmem:[%s2 + $0x20] sm:$0xf]
    %v73 = vld [vmem:[%s1] sm:$0xf]
    %s74 = scalar_lea.vmem %s2, 36
    %v75 = vld [vmem:[%s74] sm:$0xf]
    %v76 = vld [vmem:[%s74 + $0x4] sm:$0xf]
    %v77 = vld [vmem:[%s74 + $0x8] sm:$0xf]
    %v78 = vld [vmem:[%s74 + $0xc] sm:$0xf]
    %v79 = vld [vmem:[%s74 + $0x10] sm:$0xf]
    %v80 = vld [vmem:[%s74 + $0x14] sm:$0xf]
    %v81 = vld [vmem:[%s74 + $0x18] sm:$0xf]
    %v82 = vld [vmem:[%s74 + $0x1c] sm:$0xf]
    %v83 = vld [vmem:[%s74 + $0x20] sm:$0xf]
    %v93 = vunpack.c.l.b16 %v75
    %v94 = vunpack.c.l.b16 %v76
    %v95 = vunpack.c.l.b16 %v77
    %v96 = vunpack.c.l.b16 %v78
    %v97 = vunpack.c.l.b16 %v79
    %v98 = vunpack.c.l.b16 %v80
    %v99 = vunpack.c.l.b16 %v81
    %v100 = vunpack.c.l.b16 %v82
    %v101 = vunpack.c.l.b16 %v83
    %v102 = vpack.c.b16 %v94, %v93
    %v103 = vpack.c.b16 %v96, %v95
    %v104 = vpack.c.b16 %v98, %v97
    %v105 = vpack.c.b16 %v100, %v99
    %v106 = vpack.c.b16 %v101, %v101
    %vm111 = vcmask 588800
    %v113 = vsel %vm111, %v73, 0
    %vm115 = vcmask 1043456
    %v117 = vsel %vm115, %v106, 0
    %119 = vmatprep.subr.bf16.mxu0 0
    %120 = vmatpush1.bf16.msra.mxu0 %v102
    %121 = vmatprep.subr.bf16.mxu0 0
    %122 = vmatpush1.bf16.msra.mxu0 %v103
    %123 = vmatprep.subr.bf16.mxu0 0
    %124 = vmatpush1.bf16.msra.mxu0 %v104
    %125 = vmatprep.subr.bf16.mxu0 0
    %126 = vmatpush1.bf16.msra.mxu0 %v105
    %127 = vmatprep.subr.bf16.mxu0 0
    %128 = vmatpush1.bf16.msra.mxu0 %v117
    %129 = vmatprep.subr.bf16.mxu0 0
    %130 = vmatpush1.bf16.msra.mxu0 0
    %131 = vmatprep.subr.bf16.mxu0 0
    %132 = vmatpush1.bf16.msra.mxu0 0
    %133 = vmatprep.subr.bf16.mxu0 0
    %134 = vmatpush1.bf16.msra.mxu0 0
    %135 = vmatprep.subr.bf16.mxu0 0
    %136 = vmatpush1.bf16.msra.mxu0 0
    %137 = vmatprep.subr.bf16.mxu0 0
    %138 = vmatpush1.bf16.msra.mxu0 0
    %139 = vmatprep.subr.bf16.mxu0 0
    %140 = vmatpush1.bf16.msra.mxu0 0
    %141 = vmatprep.subr.bf16.mxu0 0
    %142 = vmatpush1.bf16.msra.mxu0 0
    %143 = vmatprep.subr.bf16.mxu0 0
    %144 = vmatpush1.bf16.msra.mxu0 0
    %145 = vmatprep.subr.bf16.mxu0 0
    %146 = vmatpush1.bf16.msra.mxu0 0
    %147 = vmatprep.subr.bf16.mxu0 0
    %148 = vmatpush1.bf16.msra.mxu0 0
    %149 = vmatprep.subr.bf16.mxu0 0
    %150 = vmatpush1.bf16.msra.mxu0 0
    %151 = vmatprep.mubr.bf16.mxu0 0
    %152 = vmatmul.mubr.bf16.gmra.mrb[0].mxu0 %v113
    %v153 = vpop.f32.mrb[0].mxu0
    %v154 = vadd.f32 0.0, %v153
    %v155 = vpop.f32.mrb[0].mxu0
    %v156 = vpop.f32.mrb[0].mxu0
    %v157 = vpop.f32.mrb[0].mxu0
    %158 = vdwg.mxu0
    %v168 = vunpack.c.l.b16 %v64
    %v169 = vunpack.c.l.b16 %v65
    %v170 = vunpack.c.l.b16 %v66
    %v171 = vunpack.c.l.b16 %v67
    %v172 = vunpack.c.l.b16 %v68
    %v173 = vunpack.c.l.b16 %v69
    %v174 = vunpack.c.l.b16 %v70
    %v175 = vunpack.c.l.b16 %v71
    %v176 = vunpack.c.l.b16 %v72
    %v177 = vpack.c.b16 %v169, %v168
    %v178 = vpack.c.b16 %v171, %v170
    %v179 = vpack.c.b16 %v173, %v172
    %v180 = vpack.c.b16 %v175, %v174
    %v181 = vpack.c.b16 %v176, %v176
    %v187 = vsel %vm111, %v63, 0
    %v190 = vsel %vm115, %v181, 0
    %192 = vmatprep.subr.bf16.mxu0 0
    %193 = vmatpush1.bf16.msra.mxu0 %v177
    %194 = vmatprep.subr.bf16.mxu0 0
    %195 = vmatpush1.bf16.msra.mxu0 %v178
    %196 = vmatprep.subr.bf16.mxu0 0
    %197 = vmatpush1.bf16.msra.mxu0 %v179
    %198 = vmatprep.subr.bf16.mxu0 0
    %199 = vmatpush1.bf16.msra.mxu0 %v180
    %200 = vmatprep.subr.bf16.mxu0 0
    %201 = vmatpush1.bf16.msra.mxu0 %v190
    %202 = vmatprep.subr.bf16.mxu0 0
    %203 = vmatpush1.bf16.msra.mxu0 0
    %204 = vmatprep.subr.bf16.mxu0 0
    %205 = vmatpush1.bf16.msra.mxu0 0
    %206 = vmatprep.subr.bf16.mxu0 0
    %207 = vmatpush1.bf16.msra.mxu0 0
    %208 = vmatprep.subr.bf16.mxu0 0
    %209 = vmatpush1.bf16.msra.mxu0 0
    %210 = vmatprep.subr.bf16.mxu0 0
    %211 = vmatpush1.bf16.msra.mxu0 0
    %212 = vmatprep.subr.bf16.mxu0 0
    %213 = vmatpush1.bf16.msra.mxu0 0
    %214 = vmatprep.subr.bf16.mxu0 0
    %215 = vmatpush1.bf16.msra.mxu0 0
    %216 = vmatprep.subr.bf16.mxu0 0
    %217 = vmatpush1.bf16.msra.mxu0 0
    %218 = vmatprep.subr.bf16.mxu0 0
    %219 = vmatpush1.bf16.msra.mxu0 0
    %220 = vmatprep.subr.bf16.mxu0 0
    %221 = vmatpush1.bf16.msra.mxu0 0
    %222 = vmatprep.subr.bf16.mxu0 0
    %223 = vmatpush1.bf16.msra.mxu0 0
    %224 = vmatprep.mubr.bf16.mxu0 0
    %225 = vmatmul.mubr.bf16.gmra.mrb[0].mxu0 %v187
    %v226 = vpop.f32.mrb[0].mxu0
    %v227 = vadd.f32 %v154, %v226
    %v228 = vpop.f32.mrb[0].mxu0
    %v229 = vpop.f32.mrb[0].mxu0
    %v230 = vpop.f32.mrb[0].mxu0
    %231 = vdwg.mxu0
    %v232 = vld [vmem:[%s0] sm:$0xf]
    %v233 = vld [vmem:[%s0 + $0x4] sm:$0x1]
    %s234 = scalar_lea.vmem %s2, 72
    %v235 = vld [vmem:[%s234] sm:$0xf]
    %v236 = vld [vmem:[%s234 + $0x4] sm:$0xf]
    %v237 = vld [vmem:[%s234 + $0x8] sm:$0xf]
    %v238 = vld [vmem:[%s234 + $0xc] sm:$0xf]
    %v239 = vld [vmem:[%s234 + $0x10] sm:$0xf]
    %v240 = vld [vmem:[%s234 + $0x14] sm:$0xf]
    %v241 = vld [vmem:[%s234 + $0x18] sm:$0xf]
    %v242 = vld [vmem:[%s234 + $0x1c] sm:$0xf]
    %v243 = vld [vmem:[%s234 + $0x20] sm:$0xf]
    %v246 = vunpack.c.l.b16 %v232
    %v247 = vunpack.c.l.b16 %v233
    %v248 = vpack.c.b16 %v247, %v246
    %v250 = vshrl.u32 %v248, 16
    %v252 = vshll.u32 %v248, 16
    %v254 = vrot.slane %v252, 1
    %v255 = vor.u32 %v250, %v254
    %v265 = vunpack.c.l.b16 %v235
    %v266 = vunpack.c.l.b16 %v236
    %v267 = vunpack.c.l.b16 %v237
    %v268 = vunpack.c.l.b16 %v238
    %v269 = vunpack.c.l.b16 %v239
    %v270 = vunpack.c.l.b16 %v240
    %v271 = vunpack.c.l.b16 %v241
    %v272 = vunpack.c.l.b16 %v242
    %v273 = vunpack.c.l.b16 %v243
    %v274 = vpack.c.b16 %v266, %v265
    %v275 = vpack.c.b16 %v268, %v267
    %v276 = vpack.c.b16 %v270, %v269
    %v277 = vpack.c.b16 %v272, %v271
    %v278 = vpack.c.b16 %v273, %v273
    %v284 = vsel %vm111, %v255, 0
    %v287 = vsel %vm115, %v278, 0
    %289 = vmatprep.subr.bf16.mxu0 0
    %290 = vmatpush1.bf16.msra.mxu0 %v274
    %291 = vmatprep.subr.bf16.mxu0 0
    %292 = vmatpush1.bf16.msra.mxu0 %v275
    %293 = vmatprep.subr.bf16.mxu0 0
    %294 = vmatpush1.bf16.msra.mxu0 %v276
    %295 = vmatprep.subr.bf16.mxu0 0
    %296 = vmatpush1.bf16.msra.mxu0 %v277
    %297 = vmatprep.subr.bf16.mxu0 0
    %298 = vmatpush1.bf16.msra.mxu0 %v287
    %299 = vmatprep.subr.bf16.mxu0 0
    %300 = vmatpush1.bf16.msra.mxu0 0
    %301 = vmatprep.subr.bf16.mxu0 0
    %302 = vmatpush1.bf16.msra.mxu0 0
    %303 = vmatprep.subr.bf16.mxu0 0
    %304 = vmatpush1.bf16.msra.mxu0 0
    %305 = vmatprep.subr.bf16.mxu0 0
    %306 = vmatpush1.bf16.msra.mxu0 0
    %307 = vmatprep.subr.bf16.mxu0 0
    %308 = vmatpush1.bf16.msra.mxu0 0
    %309 = vmatprep.subr.bf16.mxu0 0
    %310 = vmatpush1.bf16.msra.mxu0 0
    %311 = vmatprep.subr.bf16.mxu0 0
    %312 = vmatpush1.bf16.msra.mxu0 0
    %313 = vmatprep.subr.bf16.mxu0 0
    %314 = vmatpush1.bf16.msra.mxu0 0
    %315 = vmatprep.subr.bf16.mxu0 0
    %316 = vmatpush1.bf16.msra.mxu0 0
    %317 = vmatprep.subr.bf16.mxu0 0
    %318 = vmatpush1.bf16.msra.mxu0 0
    %319 = vmatprep.subr.bf16.mxu0 0
    %320 = vmatpush1.bf16.msra.mxu0 0
    %321 = vmatprep.mubr.bf16.mxu0 0
    %322 = vmatmul.mubr.bf16.gmra.mrb[0].mxu0 %v284
    %v323 = vpop.f32.mrb[0].mxu0
    %v324 = vadd.f32 0.0, %v323
    %v325 = vpop.f32.mrb[0].mxu0
    %v326 = vpop.f32.mrb[0].mxu0
    %v327 = vpop.f32.mrb[0].mxu0
    %328 = vdwg.mxu0
    %v329 = vadd.f32 %v227, %v324
    %vm330 = vcmask 523264
    %v331 = vsel %vm330, %v329, 0.0
    %332 = vadd.xlane.f32.xlu0 %v331
    %v333 = vpop.xlane.xlu0 %332
    %v334 = vrot.slane %v333, 4
    %v335 = vadd.f32 %v333, %v334
    %v336 = vrot.slane %v335, 2
    %v337 = vadd.f32 %v335, %v336
    %v338 = vrot.slane %v337, 1
    %v339 = vadd.f32 %v337, %v338
    %s340 = vtos %v339
    %s341 = smul.f32 %s340, 0.001953125
    %v342 = vmul.f32 %v329, %v329
    %v343 = vsel %vm330, %v342, 0.0
    %344 = vadd.xlane.f32.xlu0 %v343
    %v345 = vpop.xlane.xlu0 %344
    %v346 = vrot.slane %v345, 4
    %v347 = vadd.f32 %v345, %v346
    %v348 = vrot.slane %v347, 2
    %v349 = vadd.f32 %v347, %v348
    %v350 = vrot.slane %v349, 1
    %v351 = vadd.f32 %v349, %v350
    %s352 = vtos %v351
    %s353 = smul.f32 %s352, 0.001953125
    %s354 = smul.f32 %s341, %s341
    %s355 = ssub.f32 %s353, %s354
    %s356 = smax.f32 %s355, 0.0
    %v357 = vstv %s341
    %v358 = vsub.f32 %v329, %v357
    %s359 = sadd.f32 %s356, 1e-05
    %v360 = vstv %s359
    %v361 = vrsqrt.pop %v360
    %s362 = vtos %v361
    %v363 = vstv %s362
    %v364 = vmul.f32 %v358, %v363
    %v365 = vld [vmem:[%s3] sm:$0x1]
    %v367 = vlaneseq
    %v368 = vshrl.u32 %v367, 7
    %v369 = vsub.s32 0, %v368
    %v370 = vrot.slane %v365, %v369
    %v372 = vmul.f32 %v364, %v370
    %v373 = vld [vmem:[%s4] sm:$0x1]
    %v375 = vlaneseq
    %v376 = vshrl.u32 %v375, 7
    %v377 = vsub.s32 0, %v376
    %v378 = vrot.slane %v373, %v377
    %v380 = vadd.f32 %v372, %v378
    %v381 = vmax.f32 %v380, 0.0
    %v382 = vpack.c.bf16 %v381, %v381
    %v384 = vunpack.c.l.b16 %v382
    %v385 = vpack.c.b16 %v384, %v384
    %v387 = vshrl.u32 %v385, 16
    %v389 = vrot.slane %v387, 7
    %v390 = vshll.u32 %v385, 16
    %v392 = vor.u32 %v389, %v390
    %v393 = vrot.slane %v389, 4
    %vm396 = vcmask 519168
    %vm397 = vmand %vm396, %vm49
    %v398 = vld [vmem:[#allocation2] sm:$0xf]
    %v399 = vsel %vm397, %v392, %v398
    %400 = vst [vmem:[#allocation2] sm:$0xf] %v399
    %vm401 = vcmask 516096
    %vm402 = vmand %vm401, %vm41
    %v403 = vld [vmem:[#allocation2 + $0x4] sm:$0x1]
    %v404 = vsel %vm402, %v393, %v403
    %405 = vst [vmem:[#allocation2 + $0x4] sm:$0x1] %v404
    %v406 = vld [vmem:[#allocation2] sm:$0xf]
    %v407 = vld [vmem:[%s5] sm:$0xf]
    %v408 = vld [vmem:[%s5 + $0x4] sm:$0xf]
    %v409 = vld [vmem:[%s5 + $0x8] sm:$0xf]
    %v410 = vld [vmem:[%s5 + $0xc] sm:$0xf]
    %v411 = vld [vmem:[%s5 + $0x10] sm:$0xf]
    %v412 = vld [vmem:[%s5 + $0x14] sm:$0xf]
    %v413 = vld [vmem:[%s5 + $0x18] sm:$0xf]
    %v414 = vld [vmem:[%s5 + $0x1c] sm:$0xf]
    %v415 = vld [vmem:[%s5 + $0x20] sm:$0xf]
    %v416 = vld [vmem:[%s5 + $0x24] sm:$0xf]
    %v417 = vld [vmem:[#allocation2 + $0x4] sm:$0x1]
    %s418 = scalar_lea.vmem %s5, 40
    %v419 = vld [vmem:[%s418] sm:$0xf]
    %v420 = vld [vmem:[%s418 + $0x4] sm:$0xf]
    %v421 = vld [vmem:[%s418 + $0x8] sm:$0xf]
    %v422 = vld [vmem:[%s418 + $0xc] sm:$0xf]
    %v423 = vld [vmem:[%s418 + $0x10] sm:$0xf]
    %v424 = vld [vmem:[%s418 + $0x14] sm:$0xf]
    %v425 = vld [vmem:[%s418 + $0x18] sm:$0xf]
    %v426 = vld [vmem:[%s418 + $0x1c] sm:$0xf]
    %v427 = vld [vmem:[%s418 + $0x20] sm:$0xf]
    %v428 = vld [vmem:[%s418 + $0x24] sm:$0xf]
    %v431 = vunpack.c.l.b16 %v406
    %v432 = vunpack.c.l.b16 %v417
    %v433 = vpack.c.b16 %v432, %v431
    %v435 = vshrl.u32 %v433, 16
    %v437 = vshll.u32 %v433, 16
    %v439 = vrot.slane %v437, 1
    %v440 = vor.u32 %v435, %v439
    %v451 = vunpack.c.l.b16 %v419
    %v452 = vunpack.c.l.b16 %v420
    %v453 = vunpack.c.l.b16 %v421
    %v454 = vunpack.c.l.b16 %v422
    %v455 = vunpack.c.l.b16 %v423
    %v456 = vunpack.c.l.b16 %v424
    %v457 = vunpack.c.l.b16 %v425
    %v458 = vunpack.c.l.b16 %v426
    %v459 = vunpack.c.l.b16 %v427
    %v460 = vunpack.c.l.b16 %v428
    %v461 = vpack.c.b16 %v452, %v451
    %v462 = vpack.c.b16 %v454, %v453
    %v463 = vpack.c.b16 %v456, %v455
    %v464 = vpack.c.b16 %v458, %v457
    %v465 = vpack.c.b16 %v460, %v459
    %vm471 = vcmask 654336
    %v473 = vsel %vm471, %v440, 0
    %475 = vmatprep.subr.bf16.mxu0 0
    %476 = vmatpush1.bf16.msra.mxu0 %v461
    %477 = vmatprep.subr.bf16.mxu0 0
    %478 = vmatpush1.bf16.msra.mxu0 %v462
    %479 = vmatprep.subr.bf16.mxu0 0
    %480 = vmatpush1.bf16.msra.mxu0 %v463
    %481 = vmatprep.subr.bf16.mxu0 0
    %482 = vmatpush1.bf16.msra.mxu0 %v464
    %483 = vmatprep.subr.bf16.mxu0 0
    %484 = vmatpush1.bf16.msra.mxu0 %v465
    %485 = vmatprep.subr.bf16.mxu0 0
    %486 = vmatpush1.bf16.msra.mxu0 0
    %487 = vmatprep.subr.bf16.mxu0 0
    %488 = vmatpush1.bf16.msra.mxu0 0
    %489 = vmatprep.subr.bf16.mxu0 0
    %490 = vmatpush1.bf16.msra.mxu0 0
    %491 = vmatprep.subr.bf16.mxu0 0
    %492 = vmatpush1.bf16.msra.mxu0 0
    %493 = vmatprep.subr.bf16.mxu0 0
    %494 = vmatpush1.bf16.msra.mxu0 0
    %495 = vmatprep.subr.bf16.mxu0 0
    %496 = vmatpush1.bf16.msra.mxu0 0
    %497 = vmatprep.subr.bf16.mxu0 0
    %498 = vmatpush1.bf16.msra.mxu0 0
    %499 = vmatprep.subr.bf16.mxu0 0
    %500 = vmatpush1.bf16.msra.mxu0 0
    %501 = vmatprep.subr.bf16.mxu0 0
    %502 = vmatpush1.bf16.msra.mxu0 0
    %503 = vmatprep.subr.bf16.mxu0 0
    %504 = vmatpush1.bf16.msra.mxu0 0
    %505 = vmatprep.subr.bf16.mxu0 0
    %506 = vmatpush1.bf16.msra.mxu0 0
    %507 = vmatprep.mubr.bf16.mxu0 0
    %508 = vmatmul.mubr.bf16.gmra.mrb[0].mxu0 %v473
    %v509 = vpop.f32.mrb[0].mxu0
    %v510 = vadd.f32 0.0, %v509
    %v511 = vpop.f32.mrb[0].mxu0
    %v512 = vpop.f32.mrb[0].mxu0
    %v513 = vpop.f32.mrb[0].mxu0
    %514 = vdwg.mxu0
    %v525 = vunpack.c.l.b16 %v407
    %v526 = vunpack.c.l.b16 %v408
    %v527 = vunpack.c.l.b16 %v409
    %v528 = vunpack.c.l.b16 %v410
    %v529 = vunpack.c.l.b16 %v411
    %v530 = vunpack.c.l.b16 %v412
    %v531 = vunpack.c.l.b16 %v413
    %v532 = vunpack.c.l.b16 %v414
    %v533 = vunpack.c.l.b16 %v415
    %v534 = vunpack.c.l.b16 %v416
    %v535 = vpack.c.b16 %v526, %v525
    %v536 = vpack.c.b16 %v528, %v527
    %v537 = vpack.c.b16 %v530, %v529
    %v538 = vpack.c.b16 %v532, %v531
    %v539 = vpack.c.b16 %v534, %v533
    %v546 = vsel %vm471, %v406, 0
    %548 = vmatprep.subr.bf16.mxu0 0
    %549 = vmatpush1.bf16.msra.mxu0 %v535
    %550 = vmatprep.subr.bf16.mxu0 0
    %551 = vmatpush1.bf16.msra.mxu0 %v536
    %552 = vmatprep.subr.bf16.mxu0 0
    %553 = vmatpush1.bf16.msra.mxu0 %v537
    %554 = vmatprep.subr.bf16.mxu0 0
    %555 = vmatpush1.bf16.msra.mxu0 %v538
    %556 = vmatprep.subr.bf16.mxu0 0
    %557 = vmatpush1.bf16.msra.mxu0 %v539
    %558 = vmatprep.subr.bf16.mxu0 0
    %559 = vmatpush1.bf16.msra.mxu0 0
    %560 = vmatprep.subr.bf16.mxu0 0
    %561 = vmatpush1.bf16.msra.mxu0 0
    %562 = vmatprep.subr.bf16.mxu0 0
    %563 = vmatpush1.bf16.msra.mxu0 0
    %564 = vmatprep.subr.bf16.mxu0 0
    %565 = vmatpush1.bf16.msra.mxu0 0
    %566 = vmatprep.subr.bf16.mxu0 0
    %567 = vmatpush1.bf16.msra.mxu0 0
    %568 = vmatprep.subr.bf16.mxu0 0
    %569 = vmatpush1.bf16.msra.mxu0 0
    %570 = vmatprep.subr.bf16.mxu0 0
    %571 = vmatpush1.bf16.msra.mxu0 0
    %572 = vmatprep.subr.bf16.mxu0 0
    %573 = vmatpush1.bf16.msra.mxu0 0
    %574 = vmatprep.subr.bf16.mxu0 0
    %575 = vmatpush1.bf16.msra.mxu0 0
    %576 = vmatprep.subr.bf16.mxu0 0
    %577 = vmatpush1.bf16.msra.mxu0 0
    %578 = vmatprep.subr.bf16.mxu0 0
    %579 = vmatpush1.bf16.msra.mxu0 0
    %580 = vmatprep.mubr.bf16.mxu0 0
    %581 = vmatmul.mubr.bf16.gmra.mrb[0].mxu0 %v546
    %v582 = vpop.f32.mrb[0].mxu0
    %v583 = vadd.f32 %v510, %v582
    %v584 = vpop.f32.mrb[0].mxu0
    %v585 = vpop.f32.mrb[0].mxu0
    %v586 = vpop.f32.mrb[0].mxu0
    %587 = vdwg.mxu0
    %v588 = vld [vmem:[#allocation2] sm:$0xe]
    %s589 = scalar_lea.vmem %s5, 80
    %v590 = vld [vmem:[%s589] sm:$0xf]
    %v591 = vld [vmem:[%s589 + $0x4] sm:$0xf]
    %v592 = vld [vmem:[%s589 + $0x8] sm:$0xf]
    %v593 = vld [vmem:[%s589 + $0xc] sm:$0xf]
    %v594 = vld [vmem:[%s589 + $0x10] sm:$0xf]
    %v595 = vld [vmem:[%s589 + $0x14] sm:$0xf]
    %v596 = vld [vmem:[%s589 + $0x18] sm:$0xf]
    %v597 = vld [vmem:[%s589 + $0x1c] sm:$0xf]
    %v598 = vld [vmem:[%s589 + $0x20] sm:$0xf]
    %v599 = vld [vmem:[%s589 + $0x24] sm:$0xf]
    %v601 = vunpack.c.l.b16 %v588
    %v602 = vpack.c.b16 %v432, %v601
    %v603 = vrot.slane %v602, 1
    %v614 = vunpack.c.l.b16 %v590
    %v615 = vunpack.c.l.b16 %v591
    %v616 = vunpack.c.l.b16 %v592
    %v617 = vunpack.c.l.b16 %v593
    %v618 = vunpack.c.l.b16 %v594
    %v619 = vunpack.c.l.b16 %v595
    %v620 = vunpack.c.l.b16 %v596
    %v621 = vunpack.c.l.b16 %v597
    %v622 = vunpack.c.l.b16 %v598
    %v623 = vunpack.c.l.b16 %v599
    %v624 = vpack.c.b16 %v615, %v614
    %v625 = vpack.c.b16 %v617, %v616
    %v626 = vpack.c.b16 %v619, %v618
    %v627 = vpack.c.b16 %v621, %v620
    %v628 = vpack.c.b16 %v623, %v622
    %v635 = vsel %vm471, %v603, 0
    %637 = vmatprep.subr.bf16.mxu0 0
    %638 = vmatpush1.bf16.msra.mxu0 %v624
    %639 = vmatprep.subr.bf16.mxu0 0
    %640 = vmatpush1.bf16.msra.mxu0 %v625
    %641 = vmatprep.subr.bf16.mxu0 0
    %642 = vmatpush1.bf16.msra.mxu0 %v626
    %643 = vmatprep.subr.bf16.mxu0 0
    %644 = vmatpush1.bf16.msra.mxu0 %v627
    %645 = vmatprep.subr.bf16.mxu0 0
    %646 = vmatpush1.bf16.msra.mxu0 %v628
    %647 = vmatprep.subr.bf16.mxu0 0
    %648 = vmatpush1.bf16.msra.mxu0 0
    %649 = vmatprep.subr.bf16.mxu0 0
    %650 = vmatpush1.bf16.msra.mxu0 0
    %651 = vmatprep.subr.bf16.mxu0 0
    %652 = vmatpush1.bf16.msra.mxu0 0
    %653 = vmatprep.subr.bf16.mxu0 0
    %654 = vmatpush1.bf16.msra.mxu0 0
    %655 = vmatprep.subr.bf16.mxu0 0
    %656 = vmatpush1.bf16.msra.mxu0 0
    %657 = vmatprep.subr.bf16.mxu0 0
    %658 = vmatpush1.bf16.msra.mxu0 0
    %659 = vmatprep.subr.bf16.mxu0 0
    %660 = vmatpush1.bf16.msra.mxu0 0
    %661 = vmatprep.subr.bf16.mxu0 0
    %662 = vmatpush1.bf16.msra.mxu0 0
    %663 = vmatprep.subr.bf16.mxu0 0
    %664 = vmatpush1.bf16.msra.mxu0 0
    %665 = vmatprep.subr.bf16.mxu0 0
    %666 = vmatpush1.bf16.msra.mxu0 0
    %667 = vmatprep.subr.bf16.mxu0 0
    %668 = vmatpush1.bf16.msra.mxu0 0
    %669 = vmatprep.mubr.bf16.mxu0 0
    %670 = vmatmul.mubr.bf16.gmra.mrb[0].mxu0 %v635
    %v671 = vpop.f32.mrb[0].mxu0
    %v672 = vadd.f32 0.0, %v671
    %v673 = vpop.f32.mrb[0].mxu0
    %v674 = vpop.f32.mrb[0].mxu0
    %v675 = vpop.f32.mrb[0].mxu0
    %676 = vdwg.mxu0
    %v677 = vadd.f32 %v583, %v672
    %v678 = vsel %vm330, %v677, 0.0
    %679 = vadd.xlane.f32.xlu0 %v678
    %v680 = vpop.xlane.xlu0 %679
    %v681 = vrot.slane %v680, 4
    %v682 = vadd.f32 %v680, %v681
    %v683 = vrot.slane %v682, 2
    %v684 = vadd.f32 %v682, %v683
    %v685 = vrot.slane %v684, 1
    %v686 = vadd.f32 %v684, %v685
    %s687 = vtos %v686
    %s688 = smul.f32 %s687, 0.001953125
    %v689 = vmul.f32 %v677, %v677
    %v690 = vsel %vm330, %v689, 0.0
    %691 = vadd.xlane.f32.xlu0 %v690
    %v692 = vpop.xlane.xlu0 %691
    %v693 = vrot.slane %v692, 4
    %v694 = vadd.f32 %v692, %v693
    %v695 = vrot.slane %v694, 2
    %v696 = vadd.f32 %v694, %v695
    %v697 = vrot.slane %v696, 1
    %v698 = vadd.f32 %v696, %v697
    %s699 = vtos %v698
    %s700 = smul.f32 %s699, 0.001953125
    %s701 = smul.f32 %s688, %s688
    %s702 = ssub.f32 %s700, %s701
    %s703 = smax.f32 %s702, 0.0
    %v704 = vstv %s688
    %v705 = vsub.f32 %v677, %v704
    %s706 = sadd.f32 %s703, 1e-05
    %v707 = vstv %s706
    %v708 = vrsqrt.pop %v707
    %s709 = vtos %v708
    %v710 = vstv %s709
    %v711 = vmul.f32 %v705, %v710
    %v712 = vld [vmem:[%s6] sm:$0x1]
    %v714 = vlaneseq
    %v715 = vshrl.u32 %v714, 7
    %v716 = vsub.s32 0, %v715
    %v717 = vrot.slane %v712, %v716
    %v719 = vmul.f32 %v711, %v717
    %v720 = vld [vmem:[%s7] sm:$0x1]
    %v722 = vlaneseq
    %v723 = vshrl.u32 %v722, 7
    %v724 = vsub.s32 0, %v723
    %v725 = vrot.slane %v720, %v724
    %v727 = vadd.f32 %v719, %v725
    %v728 = vld [vmem:[%s1] sm:$0xf]
    %v729 = vld [vmem:[%s8] sm:$0xf]
    %v730 = vld [vmem:[%s8 + $0x4] sm:$0xf]
    %v731 = vld [vmem:[%s8 + $0x8] sm:$0xf]
    %v732 = vld [vmem:[%s8 + $0xc] sm:$0xf]
    %v733 = vld [vmem:[%s8 + $0x10] sm:$0xf]
    %v734 = vld [vmem:[%s8 + $0x14] sm:$0xf]
    %v735 = vld [vmem:[%s8 + $0x18] sm:$0xf]
    %v736 = vld [vmem:[%s8 + $0x1c] sm:$0xf]
    %v737 = vld [vmem:[%s8 + $0x20] sm:$0xf]
    %v747 = vunpack.c.l.b16 %v729
    %v748 = vunpack.c.l.b16 %v730
    %v749 = vunpack.c.l.b16 %v731
    %v750 = vunpack.c.l.b16 %v732
    %v751 = vunpack.c.l.b16 %v733
    %v752 = vunpack.c.l.b16 %v734
    %v753 = vunpack.c.l.b16 %v735
    %v754 = vunpack.c.l.b16 %v736
    %v755 = vunpack.c.l.b16 %v737
    %v756 = vpack.c.b16 %v748, %v747
    %v757 = vpack.c.b16 %v750, %v749
    %v758 = vpack.c.b16 %v752, %v751
    %v759 = vpack.c.b16 %v754, %v753
    %v760 = vpack.c.b16 %v755, %v755
    %v766 = vsel %vm111, %v728, 0
    %v769 = vsel %vm115, %v760, 0
    %771 = vmatprep.subr.bf16.mxu0 0
    %772 = vmatpush1.bf16.msra.mxu0 %v756
    %773 = vmatprep.subr.bf16.mxu0 0
    %774 = vmatpush1.bf16.msra.mxu0 %v757
    %775 = vmatprep.subr.bf16.mxu0 0
    %776 = vmatpush1.bf16.msra.mxu0 %v758
    %777 = vmatprep.subr.bf16.mxu0 0
    %778 = vmatpush1.bf16.msra.mxu0 %v759
    %779 = vmatprep.subr.bf16.mxu0 0
    %780 = vmatpush1.bf16.msra.mxu0 %v769
    %781 = vmatprep.subr.bf16.mxu0 0
    %782 = vmatpush1.bf16.msra.mxu0 0
    %783 = vmatprep.subr.bf16.mxu0 0
    %784 = vmatpush1.bf16.msra.mxu0 0
    %785 = vmatprep.subr.bf16.mxu0 0
    %786 = vmatpush1.bf16.msra.mxu0 0
    %787 = vmatprep.subr.bf16.mxu0 0
    %788 = vmatpush1.bf16.msra.mxu0 0
    %789 = vmatprep.subr.bf16.mxu0 0
    %790 = vmatpush1.bf16.msra.mxu0 0
    %791 = vmatprep.subr.bf16.mxu0 0
    %792 = vmatpush1.bf16.msra.mxu0 0
    %793 = vmatprep.subr.bf16.mxu0 0
    %794 = vmatpush1.bf16.msra.mxu0 0
    %795 = vmatprep.subr.bf16.mxu0 0
    %796 = vmatpush1.bf16.msra.mxu0 0
    %797 = vmatprep.subr.bf16.mxu0 0
    %798 = vmatpush1.bf16.msra.mxu0 0
    %799 = vmatprep.subr.bf16.mxu0 0
    %800 = vmatpush1.bf16.msra.mxu0 0
    %801 = vmatprep.subr.bf16.mxu0 0
    %802 = vmatpush1.bf16.msra.mxu0 0
    %803 = vmatprep.mubr.bf16.mxu0 0
    %804 = vmatmul.mubr.bf16.gmra.mrb[0].mxu0 %v766
    %v805 = vpop.f32.mrb[0].mxu0
    %v806 = vadd.f32 0.0, %v805
    %v807 = vpop.f32.mrb[0].mxu0
    %v808 = vpop.f32.mrb[0].mxu0
    %v809 = vpop.f32.mrb[0].mxu0
    %810 = vdwg.mxu0
    %v811 = vsel %vm330, %v806, 0.0
    %812 = vadd.xlane.f32.xlu0 %v811
    %v813 = vpop.xlane.xlu0 %812
    %v814 = vrot.slane %v813, 4
    %v815 = vadd.f32 %v813, %v814
    %v816 = vrot.slane %v815, 2
    %v817 = vadd.f32 %v815, %v816
    %v818 = vrot.slane %v817, 1
    %v819 = vadd.f32 %v817, %v818
    %s820 = vtos %v819
    %s821 = smul.f32 %s820, 0.001953125
    %v822 = vmul.f32 %v806, %v806
    %v823 = vsel %vm330, %v822, 0.0
    %824 = vadd.xlane.f32.xlu0 %v823
    %v825 = vpop.xlane.xlu0 %824
    %v826 = vrot.slane %v825, 4
    %v827 = vadd.f32 %v825, %v826
    %v828 = vrot.slane %v827, 2
    %v829 = vadd.f32 %v827, %v828
    %v830 = vrot.slane %v829, 1
    %v831 = vadd.f32 %v829, %v830
    %s832 = vtos %v831
    %s833 = smul.f32 %s832, 0.001953125
    %s834 = smul.f32 %s821, %s821
    %s835 = ssub.f32 %s833, %s834
    %s836 = smax.f32 %s835, 0.0
    %v837 = vstv %s821
    %v838 = vsub.f32 %v806, %v837
    %s839 = sadd.f32 %s836, 1e-05
    %v840 = vstv %s839
    %v841 = vrsqrt.pop %v840
    %s842 = vtos %v841
    %v843 = vstv %s842
    %v844 = vmul.f32 %v838, %v843
    %v845 = vld [vmem:[%s9] sm:$0x1]
    %v847 = vlaneseq
    %v848 = vshrl.u32 %v847, 7
    %v849 = vsub.s32 0, %v848
    %v850 = vrot.slane %v845, %v849
    %v852 = vmul.f32 %v844, %v850
    %v853 = vld [vmem:[%s10] sm:$0x1]
    %v855 = vlaneseq
    %v856 = vshrl.u32 %v855, 7
    %v857 = vsub.s32 0, %v856
    %v858 = vrot.slane %v853, %v857
    %v860 = vadd.f32 %v852, %v858
    %v861 = vadd.f32 %v727, %v860
    %v862 = vmax.f32 %v861, 0.0
    %v863 = vpack.c.bf16 %v862, %v862
    %vm864 = vcmask 519168
    %865 = vst.msk [vmem:[#allocation3] sm:$0xf] %vm864, %v863
    %s866 = scalar_lea.vmem %s0, 8
    %v867 = vld [vmem:[%s866] sm:$0xf]
    %v868 = vld [vmem:[%s2] sm:$0xf]
    %v869 = vld [vmem:[%s2 + $0x4] sm:$0xf]
    %v870 = vld [vmem:[%s2 + $0x8] sm:$0xf]
    %v871 = vld [vmem:[%s2 + $0xc] sm:$0xf]
    %v872 = vld [vmem:[%s2 + $0x10] sm:$0xf]
    %v873 = vld [vmem:[%s2 + $0x14] sm:$0xf]
    %v874 = vld [vmem:[%s2 + $0x18] sm:$0xf]
    %v875 = vld [vmem:[%s2 + $0x1c] sm:$0xf]
    %v876 = vld [vmem:[%s2 + $0x20] sm:$0xf]
    %s877 = scalar_lea.vmem %s1, 8
    %v878 = vld [vmem:[%s877] sm:$0xf]
    %v879 = vld [vmem:[%s74] sm:$0xf]
    %v880 = vld [vmem:[%s74 + $0x4] sm:$0xf]
    %v881 = vld [vmem:[%s74 + $0x8] sm:$0xf]
    %v882 = vld [vmem:[%s74 + $0xc] sm:$0xf]
    %v883 = vld [vmem:[%s74 + $0x10] sm:$0xf]
    %v884 = vld [vmem:[%s74 + $0x14] sm:$0xf]
    %v885 = vld [vmem:[%s74 + $0x18] sm:$0xf]
    %v886 = vld [vmem:[%s74 + $0x1c] sm:$0xf]
    %v887 = vld [vmem:[%s74 + $0x20] sm:$0xf]
    %v897 = vunpack.c.l.b16 %v879
    %v898 = vunpack.c.l.b16 %v880
    %v899 = vunpack.c.l.b16 %v881
    %v900 = vunpack.c.l.b16 %v882
    %v901 = vunpack.c.l.b16 %v883
    %v902 = vunpack.c.l.b16 %v884
    %v903 = vunpack.c.l.b16 %v885
    %v904 = vunpack.c.l.b16 %v886
    %v905 = vunpack.c.l.b16 %v887
    %v906 = vpack.c.b16 %v898, %v897
    %v907 = vpack.c.b16 %v900, %v899
    %v908 = vpack.c.b16 %v902, %v901
    %v909 = vpack.c.b16 %v904, %v903
    %v910 = vpack.c.b16 %v905, %v905
    %v916 = vsel %vm111, %v878, 0
    %v919 = vsel %vm115, %v910, 0
    %921 = vmatprep.subr.bf16.mxu0 0
    %922 = vmatpush1.bf16.msra.mxu0 %v906
    %923 = vmatprep.subr.bf16.mxu0 0
    %924 = vmatpush1.bf16.msra.mxu0 %v907
    %925 = vmatprep.subr.bf16.mxu0 0
    %926 = vmatpush1.bf16.msra.mxu0 %v908
    %927 = vmatprep.subr.bf16.mxu0 0
    %928 = vmatpush1.bf16.msra.mxu0 %v909
    %929 = vmatprep.subr.bf16.mxu0 0
    %930 = vmatpush1.bf16.msra.mxu0 %v919
    %931 = vmatprep.subr.bf16.mxu0 0
    %932 = vmatpush1.bf16.msra.mxu0 0
    %933 = vmatprep.subr.bf16.mxu0 0
    %934 = vmatpush1.bf16.msra.mxu0 0
    %935 = vmatprep.subr.bf16.mxu0 0
    %936 = vmatpush1.bf16.msra.mxu0 0
    %937 = vmatprep.subr.bf16.mxu0 0
    %938 = vmatpush1.bf16.msra.mxu0 0
    %939 = vmatprep.subr.bf16.mxu0 0
    %940 = vmatpush1.bf16.msra.mxu0 0
    %941 = vmatprep.subr.bf16.mxu0 0
    %942 = vmatpush1.bf16.msra.mxu0 0
    %943 = vmatprep.subr.bf16.mxu0 0
    %944 = vmatpush1.bf16.msra.mxu0 0
    %945 = vmatprep.subr.bf16.mxu0 0
    %946 = vmatpush1.bf16.msra.mxu0 0
    %947 = vmatprep.subr.bf16.mxu0 0
    %948 = vmatpush1.bf16.msra.mxu0 0
    %949 = vmatprep.subr.bf16.mxu0 0
    %950 = vmatpush1.bf16.msra.mxu0 0
    %951 = vmatprep.subr.bf16.mxu0 0
    %952 = vmatpush1.bf16.msra.mxu0 0
    %953 = vmatprep.mubr.bf16.mxu0 0
    %954 = vmatmul.mubr.bf16.gmra.mrb[0].mxu0 %v916
    %v955 = vpop.f32.mrb[0].mxu0
    %v956 = vadd.f32 0.0, %v955
    %v957 = vpop.f32.mrb[0].mxu0
    %v958 = vpop.f32.mrb[0].mxu0
    %v959 = vpop.f32.mrb[0].mxu0
    %960 = vdwg.mxu0
    %v970 = vunpack.c.l.b16 %v868
    %v971 = vunpack.c.l.b16 %v869
    %v972 = vunpack.c.l.b16 %v870
    %v973 = vunpack.c.l.b16 %v871
    %v974 = vunpack.c.l.b16 %v872
    %v975 = vunpack.c.l.b16 %v873
    %v976 = vunpack.c.l.b16 %v874
    %v977 = vunpack.c.l.b16 %v875
    %v978 = vunpack.c.l.b16 %v876
    %v979 = vpack.c.b16 %v971, %v970
    %v980 = vpack.c.b16 %v973, %v972
    %v981 = vpack.c.b16 %v975, %v974
    %v982 = vpack.c.b16 %v977, %v976
    %v983 = vpack.c.b16 %v978, %v978
    %v989 = vsel %vm111, %v867, 0
    %v992 = vsel %vm115, %v983, 0
    %994 = vmatprep.subr.bf16.mxu0 0
    %995 = vmatpush1.bf16.msra.mxu0 %v979
    %996 = vmatprep.subr.bf16.mxu0 0
    %997 = vmatpush1.bf16.msra.mxu0 %v980
    %998 = vmatprep.subr.bf16.mxu0 0
    %999 = vmatpush1.bf16.msra.mxu0 %v981
    %1000 = vmatprep.subr.bf16.mxu0 0
    %1001 = vmatpush1.bf16.msra.mxu0 %v982
    %1002 = vmatprep.subr.bf16.mxu0 0
    %1003 = vmatpush1.bf16.msra.mxu0 %v992
    %1004 = vmatprep.subr.bf16.mxu0 0
    %1005 = vmatpush1.bf16.msra.mxu0 0
    %1006 = vmatprep.subr.bf16.mxu0 0
    %1007 = vmatpush1.bf16.msra.mxu0 0
    %1008 = vmatprep.subr.bf16.mxu0 0
    %1009 = vmatpush1.bf16.msra.mxu0 0
    %1010 = vmatprep.subr.bf16.mxu0 0
    %1011 = vmatpush1.bf16.msra.mxu0 0
    %1012 = vmatprep.subr.bf16.mxu0 0
    %1013 = vmatpush1.bf16.msra.mxu0 0
    %1014 = vmatprep.subr.bf16.mxu0 0
    %1015 = vmatpush1.bf16.msra.mxu0 0
    %1016 = vmatprep.subr.bf16.mxu0 0
    %1017 = vmatpush1.bf16.msra.mxu0 0
    %1018 = vmatprep.subr.bf16.mxu0 0
    %1019 = vmatpush1.bf16.msra.mxu0 0
    %1020 = vmatprep.subr.bf16.mxu0 0
    %1021 = vmatpush1.bf16.msra.mxu0 0
    %1022 = vmatprep.subr.bf16.mxu0 0
    %1023 = vmatpush1.bf16.msra.mxu0 0
    %1024 = vmatprep.subr.bf16.mxu0 0
    %1025 = vmatpush1.bf16.msra.mxu0 0
    %1026 = vmatprep.mubr.bf16.mxu0 0
    %1027 = vmatmul.mubr.bf16.gmra.mrb[0].mxu0 %v989
    %v1028 = vpop.f32.mrb[0].mxu0
    %v1029 = vadd.f32 %v956, %v1028
    %v1030 = vpop.f32.mrb[0].mxu0
    %v1031 = vpop.f32.mrb[0].mxu0
    %v1032 = vpop.f32.mrb[0].mxu0
    %1033 = vdwg.mxu0
    %v1034 = vld [vmem:[%s866] sm:$0xf]
    %v1035 = vld [vmem:[%s866 + $0x4] sm:$0x1]
    %v1036 = vld [vmem:[%s234] sm:$0xf]
    %v1037 = vld [vmem:[%s234 + $0x4] sm:$0xf]
    %v1038 = vld [vmem:[%s234 + $0x8] sm:$0xf]
    %v1039 = vld [vmem:[%s234 + $0xc] sm:$0xf]
    %v1040 = vld [vmem:[%s234 + $0x10] sm:$0xf]
    %v1041 = vld [vmem:[%s234 + $0x14] sm:$0xf]
    %v1042 = vld [vmem:[%s234 + $0x18] sm:$0xf]
    %v1043 = vld [vmem:[%s234 + $0x1c] sm:$0xf]
    %v1044 = vld [vmem:[%s234 + $0x20] sm:$0xf]
    %v1047 = vunpack.c.l.b16 %v1034
    %v1048 = vunpack.c.l.b16 %v1035
    %v1049 = vpack.c.b16 %v1048, %v1047
    %v1051 = vshrl.u32 %v1049, 16
    %v1053 = vshll.u32 %v1049, 16
    %v1055 = vrot.slane %v1053, 1
    %v1056 = vor.u32 %v1051, %v1055
    %v1066 = vunpack.c.l.b16 %v1036
    %v1067 = vunpack.c.l.b16 %v1037
    %v1068 = vunpack.c.l.b16 %v1038
    %v1069 = vunpack.c.l.b16 %v1039
    %v1070 = vunpack.c.l.b16 %v1040
    %v1071 = vunpack.c.l.b16 %v1041
    %v1072 = vunpack.c.l.b16 %v1042
    %v1073 = vunpack.c.l.b16 %v1043
    %v1074 = vunpack.c.l.b16 %v1044
    %v1075 = vpack.c.b16 %v1067, %v1066
    %v1076 = vpack.c.b16 %v1069, %v1068
    %v1077 = vpack.c.b16 %v1071, %v1070
    %v1078 = vpack.c.b16 %v1073, %v1072
    %v1079 = vpack.c.b16 %v1074, %v1074
    %v1085 = vsel %vm111, %v1056, 0
    %v1088 = vsel %vm115, %v1079, 0
    %1090 = vmatprep.subr.bf16.mxu0 0
    %1091 = vmatpush1.bf16.msra.mxu0 %v1075
    %1092 = vmatprep.subr.bf16.mxu0 0
    %1093 = vmatpush1.bf16.msra.mxu0 %v1076
    %1094 = vmatprep.subr.bf16.mxu0 0
    %1095 = vmatpush1.bf16.msra.mxu0 %v1077
    %1096 = vmatprep.subr.bf16.mxu0 0
    %1097 = vmatpush1.bf16.msra.mxu0 %v1078
    %1098 = vmatprep.subr.bf16.mxu0 0
    %1099 = vmatpush1.bf16.msra.mxu0 %v1088
    %1100 = vmatprep.subr.bf16.mxu0 0
    %1101 = vmatpush1.bf16.msra.mxu0 0
    %1102 = vmatprep.subr.bf16.mxu0 0
    %1103 = vmatpush1.bf16.msra.mxu0 0
    %1104 = vmatprep.subr.bf16.mxu0 0
    %1105 = vmatpush1.bf16.msra.mxu0 0
    %1106 = vmatprep.subr.bf16.mxu0 0
    %1107 = vmatpush1.bf16.msra.mxu0 0
    %1108 = vmatprep.subr.bf16.mxu0 0
    %1109 = vmatpush1.bf16.msra.mxu0 0
    %1110 = vmatprep.subr.bf16.mxu0 0
    %1111 = vmatpush1.bf16.msra.mxu0 0
    %1112 = vmatprep.subr.bf16.mxu0 0
    %1113 = vmatpush1.bf16.msra.mxu0 0
    %1114 = vmatprep.subr.bf16.mxu0 0
    %1115 = vmatpush1.bf16.msra.mxu0 0
    %1116 = vmatprep.subr.bf16.mxu0 0
    %1117 = vmatpush1.bf16.msra.mxu0 0
    %1118 = vmatprep.subr.bf16.mxu0 0
    %1119 = vmatpush1.bf16.msra.mxu0 0
    %1120 = vmatprep.subr.bf16.mxu0 0
    %1121 = vmatpush1.bf16.msra.mxu0 0
    %1122 = vmatprep.mubr.bf16.mxu0 0
    %1123 = vmatmul.mubr.bf16.gmra.mrb[0].mxu0 %v1085
    %v1124 = vpop.f32.mrb[0].mxu0
    %v1125 = vadd.f32 0.0, %v1124
    %v1126 = vpop.f32.mrb[0].mxu0
    %v1127 = vpop.f32.mrb[0].mxu0
    %v1128 = vpop.f32.mrb[0].mxu0
    %1129 = vdwg.mxu0
    %v1130 = vadd.f32 %v1029, %v1125
    %v1131 = vsel %vm330, %v1130, 0.0
    %1132 = vadd.xlane.f32.xlu0 %v1131
    %v1133 = vpop.xlane.xlu0 %1132
    %v1134 = vrot.slane %v1133, 4
    %v1135 = vadd.f32 %v1133, %v1134
    %v1136 = vrot.slane %v1135, 2
    %v1137 = vadd.f32 %v1135, %v1136
    %v1138 = vrot.slane %v1137, 1
    %v1139 = vadd.f32 %v1137, %v1138
    %s1140 = vtos %v1139
    %s1141 = smul.f32 %s1140, 0.001953125
    %v1142 = vmul.f32 %v1130, %v1130
    %v1143 = vsel %vm330, %v1142, 0.0
    %1144 = vadd.xlane.f32.xlu0 %v1143
    %v1145 = vpop.xlane.xlu0 %1144
    %v1146 = vrot.slane %v1145, 4
    %v1147 = vadd.f32 %v1145, %v1146
    %v1148 = vrot.slane %v1147, 2
    %v1149 = vadd.f32 %v1147, %v1148
    %v1150 = vrot.slane %v1149, 1
    %v1151 = vadd.f32 %v1149, %v1150
    %s1152 = vtos %v1151
    %s1153 = smul.f32 %s1152, 0.001953125
    %s1154 = smul.f32 %s1141, %s1141
    %s1155 = ssub.f32 %s1153, %s1154
    %s1156 = smax.f32 %s1155, 0.0
    %v1157 = vstv %s1141
    %v1158 = vsub.f32 %v1130, %v1157
    %s1159 = sadd.f32 %s1156, 1e-05
    %v1160 = vstv %s1159
    %v1161 = vrsqrt.pop %v1160
    %s1162 = vtos %v1161
    %v1163 = vstv %s1162
    %v1164 = vmul.f32 %v1158, %v1163
    %v1165 = vld [vmem:[%s3] sm:$0x1]
    %v1167 = vlaneseq
    %v1168 = vshrl.u32 %v1167, 7
    %v1169 = vsub.s32 0, %v1168
    %v1170 = vrot.slane %v1165, %v1169
    %v1172 = vmul.f32 %v1164, %v1170
    %v1173 = vld [vmem:[%s4] sm:$0x1]
    %v1175 = vlaneseq
    %v1176 = vshrl.u32 %v1175, 7
    %v1177 = vsub.s32 0, %v1176
    %v1178 = vrot.slane %v1173, %v1177
    %v1180 = vadd.f32 %v1172, %v1178
    %v1181 = vmax.f32 %v1180, 0.0
    %v1182 = vpack.c.bf16 %v1181, %v1181
    %v1184 = vunpack.c.l.b16 %v1182
    %v1185 = vpack.c.b16 %v1184, %v1184
    %v1187 = vshrl.u32 %v1185, 16
    %v1189 = vrot.slane %v1187, 7
    %v1190 = vshll.u32 %v1185, 16
    %v1192 = vor.u32 %v1189, %v1190
    %v1193 = vrot.slane %v1189, 4
    %s1196 = scalar_lea.vmem [#allocation2], 8
    %v1197 = vld [vmem:[%s1196] sm:$0xf]
    %v1198 = vsel %vm397, %v1192, %v1197
    %1199 = vst [vmem:[%s1196] sm:$0xf] %v1198
    %v1200 = vld [vmem:[%s1196 + $0x4] sm:$0x1]
    %v1201 = vsel %vm402, %v1193, %v1200
    %1202 = vst [vmem:[%s1196 + $0x4] sm:$0x1] %v1201
    %v1203 = vld [vmem:[%s1196] sm:$0xf]
    %v1204 = vld [vmem:[%s5] sm:$0xf]
    %v1205 = vld [vmem:[%s5 + $0x4] sm:$0xf]
    %v1206 = vld [vmem:[%s5 + $0x8] sm:$0xf]
    %v1207 = vld [vmem:[%s5 + $0xc] sm:$0xf]
    %v1208 = vld [vmem:[%s5 + $0x10] sm:$0xf]
    %v1209 = vld [vmem:[%s5 + $0x14] sm:$0xf]
    %v1210 = vld [vmem:[%s5 + $0x18] sm:$0xf]
    %v1211 = vld [vmem:[%s5 + $0x1c] sm:$0xf]
    %v1212 = vld [vmem:[%s5 + $0x20] sm:$0xf]
    %v1213 = vld [vmem:[%s5 + $0x24] sm:$0xf]
    %v1214 = vld [vmem:[%s1196 + $0x4] sm:$0x1]
    %v1215 = vld [vmem:[%s418] sm:$0xf]
    %v1216 = vld [vmem:[%s418 + $0x4] sm:$0xf]
    %v1217 = vld [vmem:[%s418 + $0x8] sm:$0xf]
    %v1218 = vld [vmem:[%s418 + $0xc] sm:$0xf]
    %v1219 = vld [vmem:[%s418 + $0x10] sm:$0xf]
    %v1220 = vld [vmem:[%s418 + $0x14] sm:$0xf]
    %v1221 = vld [vmem:[%s418 + $0x18] sm:$0xf]
    %v1222 = vld [vmem:[%s418 + $0x1c] sm:$0xf]
    %v1223 = vld [vmem:[%s418 + $0x20] sm:$0xf]
    %v1224 = vld [vmem:[%s418 + $0x24] sm:$0xf]
    %v1227 = vunpack.c.l.b16 %v1203
    %v1228 = vunpack.c.l.b16 %v1214
    %v1229 = vpack.c.b16 %v1228, %v1227
    %v1231 = vshrl.u32 %v1229, 16
    %v1233 = vshll.u32 %v1229, 16
    %v1235 = vrot.slane %v1233, 1
    %v1236 = vor.u32 %v1231, %v1235
    %v1247 = vunpack.c.l.b16 %v1215
    %v1248 = vunpack.c.l.b16 %v1216
    %v1249 = vunpack.c.l.b16 %v1217
    %v1250 = vunpack.c.l.b16 %v1218
    %v1251 = vunpack.c.l.b16 %v1219
    %v1252 = vunpack.c.l.b16 %v1220
    %v1253 = vunpack.c.l.b16 %v1221
    %v1254 = vunpack.c.l.b16 %v1222
    %v1255 = vunpack.c.l.b16 %v1223
    %v1256 = vunpack.c.l.b16 %v1224
    %v1257 = vpack.c.b16 %v1248, %v1247
    %v1258 = vpack.c.b16 %v1250, %v1249
    %v1259 = vpack.c.b16 %v1252, %v1251
    %v1260 = vpack.c.b16 %v1254, %v1253
    %v1261 = vpack.c.b16 %v1256, %v1255
    %v1268 = vsel %vm471, %v1236, 0
    %1270 = vmatprep.subr.bf16.mxu0 0
    %1271 = vmatpush1.bf16.msra.mxu0 %v1257
    %1272 = vmatprep.subr.bf16.mxu0 0
    %1273 = vmatpush1.bf16.msra.mxu0 %v1258
    %1274 = vmatprep.subr.bf16.mxu0 0
    %1275 = vmatpush1.bf16.msra.mxu0 %v1259
    %1276 = vmatprep.subr.bf16.mxu0 0
    %1277 = vmatpush1.bf16.msra.mxu0 %v1260
    %1278 = vmatprep.subr.bf16.mxu0 0
    %1279 = vmatpush1.bf16.msra.mxu0 %v1261
    %1280 = vmatprep.subr.bf16.mxu0 0
    %1281 = vmatpush1.bf16.msra.mxu0 0
    %1282 = vmatprep.subr.bf16.mxu0 0
    %1283 = vmatpush1.bf16.msra.mxu0 0
    %1284 = vmatprep.subr.bf16.mxu0 0
    %1285 = vmatpush1.bf16.msra.mxu0 0
    %1286 = vmatprep.subr.bf16.mxu0 0
    %1287 = vmatpush1.bf16.msra.mxu0 0
    %1288 = vmatprep.subr.bf16.mxu0 0
    %1289 = vmatpush1.bf16.msra.mxu0 0
    %1290 = vmatprep.subr.bf16.mxu0 0
    %1291 = vmatpush1.bf16.msra.mxu0 0
    %1292 = vmatprep.subr.bf16.mxu0 0
    %1293 = vmatpush1.bf16.msra.mxu0 0
    %1294 = vmatprep.subr.bf16.mxu0 0
    %1295 = vmatpush1.bf16.msra.mxu0 0
    %1296 = vmatprep.subr.bf16.mxu0 0
    %1297 = vmatpush1.bf16.msra.mxu0 0
    %1298 = vmatprep.subr.bf16.mxu0 0
    %1299 = vmatpush1.bf16.msra.mxu0 0
    %1300 = vmatprep.subr.bf16.mxu0 0
    %1301 = vmatpush1.bf16.msra.mxu0 0
    %1302 = vmatprep.mubr.bf16.mxu0 0
    %1303 = vmatmul.mubr.bf16.gmra.mrb[0].mxu0 %v1268
    %v1304 = vpop.f32.mrb[0].mxu0
    %v1305 = vadd.f32 0.0, %v1304
    %v1306 = vpop.f32.mrb[0].mxu0
    %v1307 = vpop.f32.mrb[0].mxu0
    %v1308 = vpop.f32.mrb[0].mxu0
    %1309 = vdwg.mxu0
    %v1320 = vunpack.c.l.b16 %v1204
    %v1321 = vunpack.c.l.b16 %v1205
    %v1322 = vunpack.c.l.b16 %v1206
    %v1323 = vunpack.c.l.b16 %v1207
    %v1324 = vunpack.c.l.b16 %v1208
    %v1325 = vunpack.c.l.b16 %v1209
    %v1326 = vunpack.c.l.b16 %v1210
    %v1327 = vunpack.c.l.b16 %v1211
    %v1328 = vunpack.c.l.b16 %v1212
    %v1329 = vunpack.c.l.b16 %v1213
    %v1330 = vpack.c.b16 %v1321, %v1320
    %v1331 = vpack.c.b16 %v1323, %v1322
    %v1332 = vpack.c.b16 %v1325, %v1324
    %v1333 = vpack.c.b16 %v1327, %v1326
    %v1334 = vpack.c.b16 %v1329, %v1328
    %v1341 = vsel %vm471, %v1203, 0
    %1343 = vmatprep.subr.bf16.mxu0 0
    %1344 = vmatpush1.bf16.msra.mxu0 %v1330
    %1345 = vmatprep.subr.bf16.mxu0 0
    %1346 = vmatpush1.bf16.msra.mxu0 %v1331
    %1347 = vmatprep.subr.bf16.mxu0 0
    %1348 = vmatpush1.bf16.msra.mxu0 %v1332
    %1349 = vmatprep.subr.bf16.mxu0 0
    %1350 = vmatpush1.bf16.msra.mxu0 %v1333
    %1351 = vmatprep.subr.bf16.mxu0 0
    %1352 = vmatpush1.bf16.msra.mxu0 %v1334
    %1353 = vmatprep.subr.bf16.mxu0 0
    %1354 = vmatpush1.bf16.msra.mxu0 0
    %1355 = vmatprep.subr.bf16.mxu0 0
    %1356 = vmatpush1.bf16.msra.mxu0 0
    %1357 = vmatprep.subr.bf16.mxu0 0
    %1358 = vmatpush1.bf16.msra.mxu0 0
    %1359 = vmatprep.subr.bf16.mxu0 0
    %1360 = vmatpush1.bf16.msra.mxu0 0
    %1361 = vmatprep.subr.bf16.mxu0 0
    %1362 = vmatpush1.bf16.msra.mxu0 0
    %1363 = vmatprep.subr.bf16.mxu0 0
    %1364 = vmatpush1.bf16.msra.mxu0 0
    %1365 = vmatprep.subr.bf16.mxu0 0
    %1366 = vmatpush1.bf16.msra.mxu0 0
    %1367 = vmatprep.subr.bf16.mxu0 0
    %1368 = vmatpush1.bf16.msra.mxu0 0
    %1369 = vmatprep.subr.bf16.mxu0 0
    %1370 = vmatpush1.bf16.msra.mxu0 0
    %1371 = vmatprep.subr.bf16.mxu0 0
    %1372 = vmatpush1.bf16.msra.mxu0 0
    %1373 = vmatprep.subr.bf16.mxu0 0
    %1374 = vmatpush1.bf16.msra.mxu0 0
    %1375 = vmatprep.mubr.bf16.mxu0 0
    %1376 = vmatmul.mubr.bf16.gmra.mrb[0].mxu0 %v1341
    %v1377 = vpop.f32.mrb[0].mxu0
    %v1378 = vadd.f32 %v1305, %v1377
    %v1379 = vpop.f32.mrb[0].mxu0
    %v1380 = vpop.f32.mrb[0].mxu0
    %v1381 = vpop.f32.mrb[0].mxu0
    %1382 = vdwg.mxu0
    %v1383 = vld [vmem:[%s1196] sm:$0xe]
    %v1384 = vld [vmem:[%s589] sm:$0xf]
    %v1385 = vld [vmem:[%s589 + $0x4] sm:$0xf]
    %v1386 = vld [vmem:[%s589 + $0x8] sm:$0xf]
    %v1387 = vld [vmem:[%s589 + $0xc] sm:$0xf]
    %v1388 = vld [vmem:[%s589 + $0x10] sm:$0xf]
    %v1389 = vld [vmem:[%s589 + $0x14] sm:$0xf]
    %v1390 = vld [vmem:[%s589 + $0x18] sm:$0xf]
    %v1391 = vld [vmem:[%s589 + $0x1c] sm:$0xf]
    %v1392 = vld [vmem:[%s589 + $0x20] sm:$0xf]
    %v1393 = vld [vmem:[%s589 + $0x24] sm:$0xf]
    %v1395 = vunpack.c.l.b16 %v1383
    %v1396 = vpack.c.b16 %v1228, %v1395
    %v1397 = vrot.slane %v1396, 1
    %v1408 = vunpack.c.l.b16 %v1384
    %v1409 = vunpack.c.l.b16 %v1385
    %v1410 = vunpack.c.l.b16 %v1386
    %v1411 = vunpack.c.l.b16 %v1387
    %v1412 = vunpack.c.l.b16 %v1388
    %v1413 = vunpack.c.l.b16 %v1389
    %v1414 = vunpack.c.l.b16 %v1390
    %v1415 = vunpack.c.l.b16 %v1391
    %v1416 = vunpack.c.l.b16 %v1392
    %v1417 = vunpack.c.l.b16 %v1393
    %v1418 = vpack.c.b16 %v1409, %v1408
    %v1419 = vpack.c.b16 %v1411, %v1410
    %v1420 = vpack.c.b16 %v1413, %v1412
    %v1421 = vpack.c.b16 %v1415, %v1414
    %v1422 = vpack.c.b16 %v1417, %v1416
    %v1429 = vsel %vm471, %v1397, 0
    %1431 = vmatprep.subr.bf16.mxu0 0
    %1432 = vmatpush1.bf16.msra.mxu0 %v1418
    %1433 = vmatprep.subr.bf16.mxu0 0
    %1434 = vmatpush1.bf16.msra.mxu0 %v1419
    %1435 = vmatprep.subr.bf16.mxu0 0
    %1436 = vmatpush1.bf16.msra.mxu0 %v1420
    %1437 = vmatprep.subr.bf16.mxu0 0
    %1438 = vmatpush1.bf16.msra.mxu0 %v1421
    %1439 = vmatprep.subr.bf16.mxu0 0
    %1440 = vmatpush1.bf16.msra.mxu0 %v1422
    %1441 = vmatprep.subr.bf16.mxu0 0
    %1442 = vmatpush1.bf16.msra.mxu0 0
    %1443 = vmatprep.subr.bf16.mxu0 0
    %1444 = vmatpush1.bf16.msra.mxu0 0
    %1445 = vmatprep.subr.bf16.mxu0 0
    %1446 = vmatpush1.bf16.msra.mxu0 0
    %1447 = vmatprep.subr.bf16.mxu0 0
    %1448 = vmatpush1.bf16.msra.mxu0 0
    %1449 = vmatprep.subr.bf16.mxu0 0
    %1450 = vmatpush1.bf16.msra.mxu0 0
    %1451 = vmatprep.subr.bf16.mxu0 0
    %1452 = vmatpush1.bf16.msra.mxu0 0
    %1453 = vmatprep.subr.bf16.mxu0 0
    %1454 = vmatpush1.bf16.msra.mxu0 0
    %1455 = vmatprep.subr.bf16.mxu0 0
    %1456 = vmatpush1.bf16.msra.mxu0 0
    %1457 = vmatprep.subr.bf16.mxu0 0
    %1458 = vmatpush1.bf16.msra.mxu0 0
    %1459 = vmatprep.subr.bf16.mxu0 0
    %1460 = vmatpush1.bf16.msra.mxu0 0
    %1461 = vmatprep.subr.bf16.mxu0 0
    %1462 = vmatpush1.bf16.msra.mxu0 0
    %1463 = vmatprep.mubr.bf16.mxu0 0
    %1464 = vmatmul.mubr.bf16.gmra.mrb[0].mxu0 %v1429
    %v1465 = vpop.f32.mrb[0].mxu0
    %v1466 = vadd.f32 0.0, %v1465
    %v1467 = vpop.f32.mrb[0].mxu0
    %v1468 = vpop.f32.mrb[0].mxu0
    %v1469 = vpop.f32.mrb[0].mxu0
    %1470 = vdwg.mxu0
    %v1471 = vadd.f32 %v1378, %v1466
    %v1472 = vsel %vm330, %v1471, 0.0
    %1473 = vadd.xlane.f32.xlu0 %v1472
    %v1474 = vpop.xlane.xlu0 %1473
    %v1475 = vrot.slane %v1474, 4
    %v1476 = vadd.f32 %v1474, %v1475
    %v1477 = vrot.slane %v1476, 2
    %v1478 = vadd.f32 %v1476, %v1477
    %v1479 = vrot.slane %v1478, 1
    %v1480 = vadd.f32 %v1478, %v1479
    %s1481 = vtos %v1480
    %s1482 = smul.f32 %s1481, 0.001953125
    %v1483 = vmul.f32 %v1471, %v1471
    %v1484 = vsel %vm330, %v1483, 0.0
    %1485 = vadd.xlane.f32.xlu0 %v1484
    %v1486 = vpop.xlane.xlu0 %1485
    %v1487 = vrot.slane %v1486, 4
    %v1488 = vadd.f32 %v1486, %v1487
    %v1489 = vrot.slane %v1488, 2
    %v1490 = vadd.f32 %v1488, %v1489
    %v1491 = vrot.slane %v1490, 1
    %v1492 = vadd.f32 %v1490, %v1491
    %s1493 = vtos %v1492
    %s1494 = smul.f32 %s1493, 0.001953125
    %s1495 = smul.f32 %s1482, %s1482
    %s1496 = ssub.f32 %s1494, %s1495
    %s1497 = smax.f32 %s1496, 0.0
    %v1498 = vstv %s1482
    %v1499 = vsub.f32 %v1471, %v1498
    %s1500 = sadd.f32 %s1497, 1e-05
    %v1501 = vstv %s1500
    %v1502 = vrsqrt.pop %v1501
    %s1503 = vtos %v1502
    %v1504 = vstv %s1503
    %v1505 = vmul.f32 %v1499, %v1504
    %v1506 = vld [vmem:[%s6] sm:$0x1]
    %v1508 = vlaneseq
    %v1509 = vshrl.u32 %v1508, 7
    %v1510 = vsub.s32 0, %v1509
    %v1511 = vrot.slane %v1506, %v1510
    %v1513 = vmul.f32 %v1505, %v1511
    %v1514 = vld [vmem:[%s7] sm:$0x1]
    %v1516 = vlaneseq
    %v1517 = vshrl.u32 %v1516, 7
    %v1518 = vsub.s32 0, %v1517
    %v1519 = vrot.slane %v1514, %v1518
    %v1521 = vadd.f32 %v1513, %v1519
    %v1522 = vld [vmem:[%s877] sm:$0xf]
    %v1523 = vld [vmem:[%s8] sm:$0xf]
    %v1524 = vld [vmem:[%s8 + $0x4] sm:$0xf]
    %v1525 = vld [vmem:[%s8 + $0x8] sm:$0xf]
    %v1526 = vld [vmem:[%s8 + $0xc] sm:$0xf]
    %v1527 = vld [vmem:[%s8 + $0x10] sm:$0xf]
    %v1528 = vld [vmem:[%s8 + $0x14] sm:$0xf]
    %v1529 = vld [vmem:[%s8 + $0x18] sm:$0xf]
    %v1530 = vld [vmem:[%s8 + $0x1c] sm:$0xf]
    %v1531 = vld [vmem:[%s8 + $0x20] sm:$0xf]
    %v1541 = vunpack.c.l.b16 %v1523
    %v1542 = vunpack.c.l.b16 %v1524
    %v1543 = vunpack.c.l.b16 %v1525
    %v1544 = vunpack.c.l.b16 %v1526
    %v1545 = vunpack.c.l.b16 %v1527
    %v1546 = vunpack.c.l.b16 %v1528
    %v1547 = vunpack.c.l.b16 %v1529
    %v1548 = vunpack.c.l.b16 %v1530
    %v1549 = vunpack.c.l.b16 %v1531
    %v1550 = vpack.c.b16 %v1542, %v1541
    %v1551 = vpack.c.b16 %v1544, %v1543
    %v1552 = vpack.c.b16 %v1546, %v1545
    %v1553 = vpack.c.b16 %v1548, %v1547
    %v1554 = vpack.c.b16 %v1549, %v1549
    %v1560 = vsel %vm111, %v1522, 0
    %v1563 = vsel %vm115, %v1554, 0
    %1565 = vmatprep.subr.bf16.mxu0 0
    %1566 = vmatpush1.bf16.msra.mxu0 %v1550
    %1567 = vmatprep.subr.bf16.mxu0 0
    %1568 = vmatpush1.bf16.msra.mxu0 %v1551
    %1569 = vmatprep.subr.bf16.mxu0 0
    %1570 = vmatpush1.bf16.msra.mxu0 %v1552
    %1571 = vmatprep.subr.bf16.mxu0 0
    %1572 = vmatpush1.bf16.msra.mxu0 %v1553
    %1573 = vmatprep.subr.bf16.mxu0 0
    %1574 = vmatpush1.bf16.msra.mxu0 %v1563
    %1575 = vmatprep.subr.bf16.mxu0 0
    %1576 = vmatpush1.bf16.msra.mxu0 0
    %1577 = vmatprep.subr.bf16.mxu0 0
    %1578 = vmatpush1.bf16.msra.mxu0 0
    %1579 = vmatprep.subr.bf16.mxu0 0
    %1580 = vmatpush1.bf16.msra.mxu0 0
    %1581 = vmatprep.subr.bf16.mxu0 0
    %1582 = vmatpush1.bf16.msra.mxu0 0
    %1583 = vmatprep.subr.bf16.mxu0 0
    %1584 = vmatpush1.bf16.msra.mxu0 0
    %1585 = vmatprep.subr.bf16.mxu0 0
    %1586 = vmatpush1.bf16.msra.mxu0 0
    %1587 = vmatprep.subr.bf16.mxu0 0
    %1588 = vmatpush1.bf16.msra.mxu0 0
    %1589 = vmatprep.subr.bf16.mxu0 0
    %1590 = vmatpush1.bf16.msra.mxu0 0
    %1591 = vmatprep.subr.bf16.mxu0 0
    %1592 = vmatpush1.bf16.msra.mxu0 0
    %1593 = vmatprep.subr.bf16.mxu0 0
    %1594 = vmatpush1.bf16.msra.mxu0 0
    %1595 = vmatprep.subr.bf16.mxu0 0
    %1596 = vmatpush1.bf16.msra.mxu0 0
    %1597 = vmatprep.mubr.bf16.mxu0 0
    %1598 = vmatmul.mubr.bf16.gmra.mrb[0].mxu0 %v1560
    %v1599 = vpop.f32.mrb[0].mxu0
    %v1600 = vadd.f32 0.0, %v1599
    %v1601 = vpop.f32.mrb[0].mxu0
    %v1602 = vpop.f32.mrb[0].mxu0
    %v1603 = vpop.f32.mrb[0].mxu0
    %1604 = vdwg.mxu0
    %v1605 = vsel %vm330, %v1600, 0.0
    %1606 = vadd.xlane.f32.xlu0 %v1605
    %v1607 = vpop.xlane.xlu0 %1606
    %v1608 = vrot.slane %v1607, 4
    %v1609 = vadd.f32 %v1607, %v1608
    %v1610 = vrot.slane %v1609, 2
    %v1611 = vadd.f32 %v1609, %v1610
    %v1612 = vrot.slane %v1611, 1
    %v1613 = vadd.f32 %v1611, %v1612
    %s1614 = vtos %v1613
    %s1615 = smul.f32 %s1614, 0.001953125
    %v1616 = vmul.f32 %v1600, %v1600
    %v1617 = vsel %vm330, %v1616, 0.0
    %1618 = vadd.xlane.f32.xlu0 %v1617
    %v1619 = vpop.xlane.xlu0 %1618
    %v1620 = vrot.slane %v1619, 4
    %v1621 = vadd.f32 %v1619, %v1620
    %v1622 = vrot.slane %v1621, 2
    %v1623 = vadd.f32 %v1621, %v1622
    %v1624 = vrot.slane %v1623, 1
    %v1625 = vadd.f32 %v1623, %v1624
    %s1626 = vtos %v1625
    %s1627 = smul.f32 %s1626, 0.001953125
    %s1628 = smul.f32 %s1615, %s1615
    %s1629 = ssub.f32 %s1627, %s1628
    %s1630 = smax.f32 %s1629, 0.0
    %v1631 = vstv %s1615
    %v1632 = vsub.f32 %v1600, %v1631
    %s1633 = sadd.f32 %s1630, 1e-05
    %v1634 = vstv %s1633
    %v1635 = vrsqrt.pop %v1634
    %s1636 = vtos %v1635
    %v1637 = vstv %s1636
    %v1638 = vmul.f32 %v1632, %v1637
    %v1639 = vld [vmem:[%s9] sm:$0x1]
    %v1641 = vlaneseq
    %v1642 = vshrl.u32 %v1641, 7
    %v1643 = vsub.s32 0, %v1642
    %v1644 = vrot.slane %v1639, %v1643
    %v1646 = vmul.f32 %v1638, %v1644
    %v1647 = vld [vmem:[%s10] sm:$0x1]
    %v1649 = vlaneseq
    %v1650 = vshrl.u32 %v1649, 7
    %v1651 = vsub.s32 0, %v1650
    %v1652 = vrot.slane %v1647, %v1651
    %v1654 = vadd.f32 %v1646, %v1652
    %v1655 = vadd.f32 %v1521, %v1654
    %v1656 = vmax.f32 %v1655, 0.0
    %v1657 = vpack.c.bf16 %v1656, %v1656
    %s1658 = scalar_lea.vmem [#allocation3], 4
    %1659 = vst.msk [vmem:[%s1658] sm:$0xf] %vm864, %v1657
    // Predicated region
    $region46: #{tpu_custom_call.1} parent=1 // pred_check
      _
    $region47: #{tpu_custom_call.1} parent=1 // pred_check_branch
      %1661 = sbr.rel (0) target = $region49
    $region48: #{tpu_custom_call.1} parent=1 // pred_region
      %s1663 = ssub.s32 128, 128
      %1664 = vsyncadd [#allocation4], %s1663
      %s1665 = sshll.u32 [#allocation3], 4
      %s1666 = int_to_ptr.vmem [resolvable:$true] %s1665
      %1671 = dma.vmem_to_hbm [thread:$0]  %s1666, 128, %s11, [#allocation4], 64, 64, 4
    $region49: #{tpu_custom_call.1} parent=1 // pred_fallthru
      _
    // Predicated region
    $region50: #{tpu_custom_call.1} parent=1 // pred_check
      _
    $region51: #{tpu_custom_call.1} parent=1 // pred_check_branch
      %1673 = sbr.rel (0) target = $region53
    $region52: #{tpu_custom_call.1} parent=1 // pred_region
      %1674 = dma.done [#allocation4], 128
    $region53: #{tpu_custom_call.1} parent=1 // pred_fallthru
      _
    %1675 = vsyncpa [#allocation4], 1

// kernel: tpu_custom_call.1
$region0: #{tpu_custom_call.1}
  #allocation0 [shape = 'u32[]', space=smem, size = 0x4, offset = 0x4, fixed_abs, tag = 'smem constant byte address 0x4 - core index']
  #allocation1 [shape = 'u32[144,128]{1,0:T(1,128)}', space=vmem, size = 0x12000, scoped, tag = 'internal scratch']
  #allocation2 [shape = 'bf16[2,10,80]{2,1,0:T(8,128)(2,1)}', space=vmem, size = 0x2000, scoped, tag = 'scratch operand']
  %s0 = inlined_call_operand.vmem [shape: bf16[2,9,72], index: 0, kind: input, shape index: {}]
  %s1 = inlined_call_operand.vmem [shape: bf16[2,9,72], index: 1, kind: input, shape index: {}]
  %s2 = inlined_call_operand.vmem [shape: bf16[3,72,64], index: 2, kind: input, shape index: {}]
  %s3 = inlined_call_operand.vmem [shape: f32[1,64], index: 3, kind: input, shape index: {}]
  %s4 = inlined_call_operand.vmem [shape: f32[1,64], index: 4, kind: input, shape index: {}]
  %s5 = inlined_call_operand.vmem [shape: bf16[3,80,64], index: 5, kind: input, shape index: {}]
  %s6 = inlined_call_operand.vmem [shape: f32[1,64], index: 6, kind: input, shape index: {}]
  %s7 = inlined_call_operand.vmem [shape: f32[1,64], index: 7, kind: input, shape index: {}]
  %s8 = inlined_call_operand.vmem [shape: bf16[72,64], index: 8, kind: input, shape index: {}]
  %s9 = inlined_call_operand.vmem [shape: f32[1,64], index: 9, kind: input, shape index: {}]
  %s10 = inlined_call_operand.vmem [shape: f32[1,64], index: 10, kind: input, shape index: {}]
  %s11 = inlined_call_operand.hbm [shape: bf16[2,8,64], index: 11, kind: output, shape index: {}]
  %s12 = sld [smem:[#allocation0]]
  $region54: #{tpu_custom_call.1} parent=0
    _
  %s14 = ssub.s32 1, %s12
  %s15 = scalar_select 0, %s14, %s12
  $region1: #{tpu_custom_call.1} parent=0
    #allocation3 [shape = 'u8[4096]{0}', space=vmem, size = 0x1000, scoped, tag = 'output window, operand 0, single buffered']
    #allocation4 [shape = 's32[1]{0}', space=sflag, size = 0x4, scoped, tag = 'scoped memory for tpu_custom_call.1']
    %16 = vsyncpa [#allocation4], 0
    // Predicated region
    $region2: #{tpu_custom_call.1} parent=1 // pred_check
      _
    $region3: #{tpu_custom_call.1} parent=1 // pred_check_branch
      %18 = sbr.rel (0) target = $region5
    $region4: #{tpu_custom_call.1} parent=1 // pred_region
      _
    $region5: #{tpu_custom_call.1} parent=1 // pred_fallthru
      _
    // Predicated region
    $region6: #{tpu_custom_call.1} parent=1 // pred_check
      _
    $region7: #{tpu_custom_call.1} parent=1 // pred_check_branch
      %20 = sbr.rel (0) target = $region9
    $region8: #{tpu_custom_call.1} parent=1 // pred_region
      _
    $region9: #{tpu_custom_call.1} parent=1 // pred_fallthru
      _
    // Predicated region
    $region10: #{tpu_custom_call.1} parent=1 // pred_check
      _
    $region11: #{tpu_custom_call.1} parent=1 // pred_check_branch
      %22 = sbr.rel (0) target = $region13
    $region12: #{tpu_custom_call.1} parent=1 // pred_region
      _
    $region13: #{tpu_custom_call.1} parent=1 // pred_fallthru
      _
    // Predicated region
    $region14: #{tpu_custom_call.1} parent=1 // pred_check
      _
    $region15: #{tpu_custom_call.1} parent=1 // pred_check_branch
      %24 = sbr.rel (0) target = $region17
    $region16: #{tpu_custom_call.1} parent=1 // pred_region
      _
    $region17: #{tpu_custom_call.1} parent=1 // pred_fallthru
      _
    // Predicated region
    $region18: #{tpu_custom_call.1} parent=1 // pred_check
      _
    $region19: #{tpu_custom_call.1} parent=1 // pred_check_branch
      %26 = sbr.rel (0) target = $region21
    $region20: #{tpu_custom_call.1} parent=1 // pred_region
      _
    $region21: #{tpu_custom_call.1} parent=1 // pred_fallthru
      _
    // Predicated region
    $region22: #{tpu_custom_call.1} parent=1 // pred_check
      _
    $region23: #{tpu_custom_call.1} parent=1 // pred_check_branch
      %28 = sbr.rel (0) target = $region25
    $region24: #{tpu_custom_call.1} parent=1 // pred_region
      _
    $region25: #{tpu_custom_call.1} parent=1 // pred_fallthru
      _
    // Predicated region
    $region26: #{tpu_custom_call.1} parent=1 // pred_check
      _
    $region27: #{tpu_custom_call.1} parent=1 // pred_check_branch
      %30 = sbr.rel (0) target = $region29
    $region28: #{tpu_custom_call.1} parent=1 // pred_region
      _
    $region29: #{tpu_custom_call.1} parent=1 // pred_fallthru
      _
    // Predicated region
    $region30: #{tpu_custom_call.1} parent=1 // pred_check
      _
    $region31: #{tpu_custom_call.1} parent=1 // pred_check_branch
      %32 = sbr.rel (0) target = $region33
    $region32: #{tpu_custom_call.1} parent=1 // pred_region
      _
    $region33: #{tpu_custom_call.1} parent=1 // pred_fallthru
      _
    // Predicated region
    $region34: #{tpu_custom_call.1} parent=1 // pred_check
      _
    $region35: #{tpu_custom_call.1} parent=1 // pred_check_branch
      %34 = sbr.rel (0) target = $region37
    $region36: #{tpu_custom_call.1} parent=1 // pred_region
      _
    $region37: #{tpu_custom_call.1} parent=1 // pred_fallthru
      _
    // Predicated region
    $region38: #{tpu_custom_call.1} parent=1 // pred_check
      _
    $region39: #{tpu_custom_call.1} parent=1 // pred_check_branch
      %36 = sbr.rel (0) target = $region41
    $region40: #{tpu_custom_call.1} parent=1 // pred_region
      _
    $region41: #{tpu_custom_call.1} parent=1 // pred_fallthru
      _
    // Predicated region
    $region42: #{tpu_custom_call.1} parent=1 // pred_check
      _
    $region43: #{tpu_custom_call.1} parent=1 // pred_check_branch
      %38 = sbr.rel (0) target = $region45
    $region44: #{tpu_custom_call.1} parent=1 // pred_region
      _
    $region45: #{tpu_custom_call.1} parent=1 // pred_fallthru
      _
    %vm40 = vcmask 647168
    %vm41 = vsmask.f32 256
    %vm42 = vmand %vm40, %vm41
    %v43 = vld [vmem:[#allocation2] sm:$0x1]
    %v44 = vsel %vm42, 0, %v43
    %45 = vst [vmem:[#allocation2] sm:$0x1] %v44
    %v46 = vld [vmem:[#allocation2 + $0x8] sm:$0x1]
    %v47 = vsel %vm42, 0, %v46
    %48 = vst [vmem:[#allocation2 + $0x8] sm:$0x1] %v47
    %vm49 = vsmask.f32 7938
    %vm50 = vmand %vm40, %vm49
    %v51 = vld [vmem:[#allocation2 + $0x4] sm:$0x1]
    %v52 = vsel %vm50, 0, %v51
    %53 = vst [vmem:[#allocation2 + $0x4] sm:$0x1] %v52
    %v54 = vld [vmem:[#allocation2 + $0xc] sm:$0x1]
    %v55 = vsel %vm50, 0, %v54
    %56 = vst [vmem:[#allocation2 + $0xc] sm:$0x1] %v55
    %vm57 = vcmask 650752
    %58 = vst.msk [vmem:[#allocation2] sm:$0xf] %vm57, 0
    %vm59 = vcmask 647680
    %60 = vst.msk [vmem:[#allocation2 + $0x4] sm:$0x1] %vm59, 0
    %61 = vst.msk [vmem:[#allocation2 + $0x8] sm:$0xf] %vm57, 0
    %62 = vst.msk [vmem:[#allocation2 + $0xc] sm:$0x1] %vm59, 0
    %v63 = vld [vmem:[%s0] sm:$0xf]
    %v64 = vld [vmem:[%s2] sm:$0xf]
    %v65 = vld [vmem:[%s2 + $0x4] sm:$0xf]
    %v66 = vld [vmem:[%s2 + $0x8] sm:$0xf]
    %v67 = vld [vmem:[%s2 + $0xc] sm:$0xf]
    %v68 = vld [vmem:[%s2 + $0x10] sm:$0xf]
    %v69 = vld [vmem:[%s2 + $0x14] sm:$0xf]
    %v70 = vld [vmem:[%s2 + $0x18] sm:$0xf]
    %v71 = vld [vmem:[%s2 + $0x1c] sm:$0xf]
    %v72 = vld [vmem:[%s2 + $0x20] sm:$0xf]
    %v73 = vld [vmem:[%s1] sm:$0xf]
    %s74 = scalar_lea.vmem %s2, 36
    %v75 = vld [vmem:[%s74] sm:$0xf]
    %v76 = vld [vmem:[%s74 + $0x4] sm:$0xf]
    %v77 = vld [vmem:[%s74 + $0x8] sm:$0xf]
    %v78 = vld [vmem:[%s74 + $0xc] sm:$0xf]
    %v79 = vld [vmem:[%s74 + $0x10] sm:$0xf]
    %v80 = vld [vmem:[%s74 + $0x14] sm:$0xf]
    %v81 = vld [vmem:[%s74 + $0x18] sm:$0xf]
    %v82 = vld [vmem:[%s74 + $0x1c] sm:$0xf]
    %v83 = vld [vmem:[%s74 + $0x20] sm:$0xf]
    %v93 = vunpack.c.l.b16 %v75
    %v94 = vunpack.c.l.b16 %v76
    %v95 = vunpack.c.l.b16 %v77
    %v96 = vunpack.c.l.b16 %v78
    %v97 = vunpack.c.l.b16 %v79
    %v98 = vunpack.c.l.b16 %v80
    %v99 = vunpack.c.l.b16 %v81
    %v100 = vunpack.c.l.b16 %v82
    %v101 = vunpack.c.l.b16 %v83
    %v102 = vpack.c.b16 %v94, %v93
    %v103 = vpack.c.b16 %v96, %v95
    %v104 = vpack.c.b16 %v98, %v97
    %v105 = vpack.c.b16 %v100, %v99
    %v106 = vpack.c.b16 %v101, %v101
    %vm111 = vcmask 588800
    %v113 = vsel %vm111, %v73, 0
    %vm115 = vcmask 1043456
    %v117 = vsel %vm115, %v106, 0
    %119 = vmatprep.subr.bf16.mxu0 0
    %120 = vmatpush1.bf16.msra.mxu0 %v102
    %121 = vmatprep.subr.bf16.mxu0 0
    %122 = vmatpush1.bf16.msra.mxu0 %v103
    %123 = vmatprep.subr.bf16.mxu0 0
    %124 = vmatpush1.bf16.msra.mxu0 %v104
    %125 = vmatprep.subr.bf16.mxu0 0
    %126 = vmatpush1.bf16.msra.mxu0 %v105
    %127 = vmatprep.subr.bf16.mxu0 0
    %128 = vmatpush1.bf16.msra.mxu0 %v117
    %129 = vmatprep.subr.bf16.mxu0 0
    %130 = vmatpush1.bf16.msra.mxu0 0
    %131 = vmatprep.subr.bf16.mxu0 0
    %132 = vmatpush1.bf16.msra.mxu0 0
    %133 = vmatprep.subr.bf16.mxu0 0
    %134 = vmatpush1.bf16.msra.mxu0 0
    %135 = vmatprep.subr.bf16.mxu0 0
    %136 = vmatpush1.bf16.msra.mxu0 0
    %137 = vmatprep.subr.bf16.mxu0 0
    %138 = vmatpush1.bf16.msra.mxu0 0
    %139 = vmatprep.subr.bf16.mxu0 0
    %140 = vmatpush1.bf16.msra.mxu0 0
    %141 = vmatprep.subr.bf16.mxu0 0
    %142 = vmatpush1.bf16.msra.mxu0 0
    %143 = vmatprep.subr.bf16.mxu0 0
    %144 = vmatpush1.bf16.msra.mxu0 0
    %145 = vmatprep.subr.bf16.mxu0 0
    %146 = vmatpush1.bf16.msra.mxu0 0
    %147 = vmatprep.subr.bf16.mxu0 0
    %148 = vmatpush1.bf16.msra.mxu0 0
    %149 = vmatprep.subr.bf16.mxu0 0
    %150 = vmatpush1.bf16.msra.mxu0 0
    %151 = vmatprep.mubr.bf16.mxu0 0
    %152 = vmatmul.mubr.bf16.gmra.mrb[0].mxu0 %v113
    %v153 = vpop.f32.mrb[0].mxu0
    %v154 = vadd.f32 0.0, %v153
    %v155 = vpop.f32.mrb[0].mxu0
    %v156 = vpop.f32.mrb[0].mxu0
    %v157 = vpop.f32.mrb[0].mxu0
    %158 = vdwg.mxu0
    %v168 = vunpack.c.l.b16 %v64
    %v169 = vunpack.c.l.b16 %v65
    %v170 = vunpack.c.l.b16 %v66
    %v171 = vunpack.c.l.b16 %v67
    %v172 = vunpack.c.l.b16 %v68
    %v173 = vunpack.c.l.b16 %v69
    %v174 = vunpack.c.l.b16 %v70
    %v175 = vunpack.c.l.b16 %v71
    %v176 = vunpack.c.l.b16 %v72
    %v177 = vpack.c.b16 %v169, %v168
    %v178 = vpack.c.b16 %v171, %v170
    %v179 = vpack.c.b16 %v173, %v172
    %v180 = vpack.c.b16 %v175, %v174
    %v181 = vpack.c.b16 %v176, %v176
    %v187 = vsel %vm111, %v63, 0
    %v190 = vsel %vm115, %v181, 0
    %192 = vmatprep.subr.bf16.mxu0 0
    %193 = vmatpush1.bf16.msra.mxu0 %v177
    %194 = vmatprep.subr.bf16.mxu0 0
    %195 = vmatpush1.bf16.msra.mxu0 %v178
    %196 = vmatprep.subr.bf16.mxu0 0
    %197 = vmatpush1.bf16.msra.mxu0 %v179
    %198 = vmatprep.subr.bf16.mxu0 0
    %199 = vmatpush1.bf16.msra.mxu0 %v180
    %200 = vmatprep.subr.bf16.mxu0 0
    %201 = vmatpush1.bf16.msra.mxu0 %v190
    %202 = vmatprep.subr.bf16.mxu0 0
    %203 = vmatpush1.bf16.msra.mxu0 0
    %204 = vmatprep.subr.bf16.mxu0 0
    %205 = vmatpush1.bf16.msra.mxu0 0
    %206 = vmatprep.subr.bf16.mxu0 0
    %207 = vmatpush1.bf16.msra.mxu0 0
    %208 = vmatprep.subr.bf16.mxu0 0
    %209 = vmatpush1.bf16.msra.mxu0 0
    %210 = vmatprep.subr.bf16.mxu0 0
    %211 = vmatpush1.bf16.msra.mxu0 0
    %212 = vmatprep.subr.bf16.mxu0 0
    %213 = vmatpush1.bf16.msra.mxu0 0
    %214 = vmatprep.subr.bf16.mxu0 0
    %215 = vmatpush1.bf16.msra.mxu0 0
    %216 = vmatprep.subr.bf16.mxu0 0
    %217 = vmatpush1.bf16.msra.mxu0 0
    %218 = vmatprep.subr.bf16.mxu0 0
    %219 = vmatpush1.bf16.msra.mxu0 0
    %220 = vmatprep.subr.bf16.mxu0 0
    %221 = vmatpush1.bf16.msra.mxu0 0
    %222 = vmatprep.subr.bf16.mxu0 0
    %223 = vmatpush1.bf16.msra.mxu0 0
    %224 = vmatprep.mubr.bf16.mxu0 0
    %225 = vmatmul.mubr.bf16.gmra.mrb[0].mxu0 %v187
    %v226 = vpop.f32.mrb[0].mxu0
    %v227 = vadd.f32 %v154, %v226
    %v228 = vpop.f32.mrb[0].mxu0
    %v229 = vpop.f32.mrb[0].mxu0
    %v230 = vpop.f32.mrb[0].mxu0
    %231 = vdwg.mxu0
    %v232 = vld [vmem:[%s0] sm:$0xf]
    %v233 = vld [vmem:[%s0 + $0x4] sm:$0x1]
    %s234 = scalar_lea.vmem %s2, 72
    %v235 = vld [vmem:[%s234] sm:$0xf]
    %v236 = vld [vmem:[%s234 + $0x4] sm:$0xf]
    %v237 = vld [vmem:[%s234 + $0x8] sm:$0xf]
    %v238 = vld [vmem:[%s234 + $0xc] sm:$0xf]
    %v239 = vld [vmem:[%s234 + $0x10] sm:$0xf]
    %v240 = vld [vmem:[%s234 + $0x14] sm:$0xf]
    %v241 = vld [vmem:[%s234 + $0x18] sm:$0xf]
    %v242 = vld [vmem:[%s234 + $0x1c] sm:$0xf]
    %v243 = vld [vmem:[%s234 + $0x20] sm:$0xf]
    %v246 = vunpack.c.l.b16 %v232
    %v247 = vunpack.c.l.b16 %v233
    %v248 = vpack.c.b16 %v247, %v246
    %v250 = vshrl.u32 %v248, 16
    %v252 = vshll.u32 %v248, 16
    %v254 = vrot.slane %v252, 1
    %v255 = vor.u32 %v250, %v254
    %v265 = vunpack.c.l.b16 %v235
    %v266 = vunpack.c.l.b16 %v236
    %v267 = vunpack.c.l.b16 %v237
    %v268 = vunpack.c.l.b16 %v238
    %v269 = vunpack.c.l.b16 %v239
    %v270 = vunpack.c.l.b16 %v240
    %v271 = vunpack.c.l.b16 %v241
    %v272 = vunpack.c.l.b16 %v242
    %v273 = vunpack.c.l.b16 %v243
    %v274 = vpack.c.b16 %v266, %v265
    %v275 = vpack.c.b16 %v268, %v267
    %v276 = vpack.c.b16 %v270, %v269
    %v277 = vpack.c.b16 %v272, %v271
    %v278 = vpack.c.b16 %v273, %v273
    %v284 = vsel %vm111, %v255, 0
    %v287 = vsel %vm115, %v278, 0
    %289 = vmatprep.subr.bf16.mxu0 0
    %290 = vmatpush1.bf16.msra.mxu0 %v274
    %291 = vmatprep.subr.bf16.mxu0 0
    %292 = vmatpush1.bf16.msra.mxu0 %v275
    %293 = vmatprep.subr.bf16.mxu0 0
    %294 = vmatpush1.bf16.msra.mxu0 %v276
    %295 = vmatprep.subr.bf16.mxu0 0
    %296 = vmatpush1.bf16.msra.mxu0 %v277
    %297 = vmatprep.subr.bf16.mxu0 0
    %298 = vmatpush1.bf16.msra.mxu0 %v287
    %299 = vmatprep.subr.bf16.mxu0 0
    %300 = vmatpush1.bf16.msra.mxu0 0
    %301 = vmatprep.subr.bf16.mxu0 0
    %302 = vmatpush1.bf16.msra.mxu0 0
    %303 = vmatprep.subr.bf16.mxu0 0
    %304 = vmatpush1.bf16.msra.mxu0 0
    %305 = vmatprep.subr.bf16.mxu0 0
    %306 = vmatpush1.bf16.msra.mxu0 0
    %307 = vmatprep.subr.bf16.mxu0 0
    %308 = vmatpush1.bf16.msra.mxu0 0
    %309 = vmatprep.subr.bf16.mxu0 0
    %310 = vmatpush1.bf16.msra.mxu0 0
    %311 = vmatprep.subr.bf16.mxu0 0
    %312 = vmatpush1.bf16.msra.mxu0 0
    %313 = vmatprep.subr.bf16.mxu0 0
    %314 = vmatpush1.bf16.msra.mxu0 0
    %315 = vmatprep.subr.bf16.mxu0 0
    %316 = vmatpush1.bf16.msra.mxu0 0
    %317 = vmatprep.subr.bf16.mxu0 0
    %318 = vmatpush1.bf16.msra.mxu0 0
    %319 = vmatprep.subr.bf16.mxu0 0
    %320 = vmatpush1.bf16.msra.mxu0 0
    %321 = vmatprep.mubr.bf16.mxu0 0
    %322 = vmatmul.mubr.bf16.gmra.mrb[0].mxu0 %v284
    %v323 = vpop.f32.mrb[0].mxu0
    %v324 = vadd.f32 0.0, %v323
    %v325 = vpop.f32.mrb[0].mxu0
    %v326 = vpop.f32.mrb[0].mxu0
    %v327 = vpop.f32.mrb[0].mxu0
    %328 = vdwg.mxu0
    %v329 = vadd.f32 %v227, %v324
    %vm330 = vcmask 523264
    %v331 = vsel %vm330, %v329, 0.0
    %332 = vadd.xlane.f32.xlu0 %v331
    %v333 = vpop.xlane.xlu0 %332
    %v334 = vrot.slane %v333, 4
    %v335 = vadd.f32 %v333, %v334
    %v336 = vrot.slane %v335, 2
    %v337 = vadd.f32 %v335, %v336
    %v338 = vrot.slane %v337, 1
    %v339 = vadd.f32 %v337, %v338
    %s340 = vtos %v339
    %s341 = smul.f32 %s340, 0.001953125
    %v342 = vmul.f32 %v329, %v329
    %v343 = vsel %vm330, %v342, 0.0
    %344 = vadd.xlane.f32.xlu0 %v343
    %v345 = vpop.xlane.xlu0 %344
    %v346 = vrot.slane %v345, 4
    %v347 = vadd.f32 %v345, %v346
    %v348 = vrot.slane %v347, 2
    %v349 = vadd.f32 %v347, %v348
    %v350 = vrot.slane %v349, 1
    %v351 = vadd.f32 %v349, %v350
    %s352 = vtos %v351
    %s353 = smul.f32 %s352, 0.001953125
    %s354 = smul.f32 %s341, %s341
    %s355 = ssub.f32 %s353, %s354
    %s356 = smax.f32 %s355, 0.0
    %v357 = vstv %s341
    %v358 = vsub.f32 %v329, %v357
    %s359 = sadd.f32 %s356, 1e-05
    %v360 = vstv %s359
    %v361 = vrsqrt.pop %v360
    %s362 = vtos %v361
    %v363 = vstv %s362
    %v364 = vmul.f32 %v358, %v363
    %v365 = vld [vmem:[%s3] sm:$0x1]
    %v367 = vlaneseq
    %v368 = vshrl.u32 %v367, 7
    %v369 = vsub.s32 0, %v368
    %v370 = vrot.slane %v365, %v369
    %v372 = vmul.f32 %v364, %v370
    %v373 = vld [vmem:[%s4] sm:$0x1]
    %v375 = vlaneseq
    %v376 = vshrl.u32 %v375, 7
    %v377 = vsub.s32 0, %v376
    %v378 = vrot.slane %v373, %v377
    %v380 = vadd.f32 %v372, %v378
    %v381 = vmax.f32 %v380, 0.0
    %v382 = vpack.c.bf16 %v381, %v381
    %v384 = vunpack.c.l.b16 %v382
    %v385 = vpack.c.b16 %v384, %v384
    %v387 = vshrl.u32 %v385, 16
    %v389 = vrot.slane %v387, 7
    %v390 = vshll.u32 %v385, 16
    %v392 = vor.u32 %v389, %v390
    %v393 = vrot.slane %v389, 4
    %vm396 = vcmask 519168
    %vm397 = vmand %vm396, %vm49
    %v398 = vld [vmem:[#allocation2] sm:$0xf]
    %v399 = vsel %vm397, %v392, %v398
    %400 = vst [vmem:[#allocation2] sm:$0xf] %v399
    %vm401 = vcmask 516096
    %vm402 = vmand %vm401, %vm41
    %v403 = vld [vmem:[#allocation2 + $0x4] sm:$0x1]
    %v404 = vsel %vm402, %v393, %v403
    %405 = vst [vmem:[#allocation2 + $0x4] sm:$0x1] %v404
    %v406 = vld [vmem:[#allocation2] sm:$0xf]
    %v407 = vld [vmem:[%s5] sm:$0xf]
    %v408 = vld [vmem:[%s5 + $0x4] sm:$0xf]
    %v409 = vld [vmem:[%s5 + $0x8] sm:$0xf]
    %v410 = vld [vmem:[%s5 + $0xc] sm:$0xf]
    %v411 = vld [vmem:[%s5 + $0x10] sm:$0xf]
    %v412 = vld [vmem:[%s5 + $0x14] sm:$0xf]
    %v413 = vld [vmem:[%s5 + $0x18] sm:$0xf]
    %v414 = vld [vmem:[%s5 + $0x1c] sm:$0xf]
    %v415 = vld [vmem:[%s5 + $0x20] sm:$0xf]
    %v416 = vld [vmem:[%s5 + $0x24] sm:$0xf]
    %v417 = vld [vmem:[#allocation2 + $0x4] sm:$0x1]
    %s418 = scalar_lea.vmem %s5, 40
    %v419 = vld [vmem:[%s418] sm:$0xf]
    %v420 = vld [vmem:[%s418 + $0x4] sm:$0xf]
    %v421 = vld [vmem:[%s418 + $0x8] sm:$0xf]
    %v422 = vld [vmem:[%s418 + $0xc] sm:$0xf]
    %v423 = vld [vmem:[%s418 + $0x10] sm:$0xf]
    %v424 = vld [vmem:[%s418 + $0x14] sm:$0xf]
    %v425 = vld [vmem:[%s418 + $0x18] sm:$0xf]
    %v426 = vld [vmem:[%s418 + $0x1c] sm:$0xf]
    %v427 = vld [vmem:[%s418 + $0x20] sm:$0xf]
    %v428 = vld [vmem:[%s418 + $0x24] sm:$0xf]
    %v431 = vunpack.c.l.b16 %v406
    %v432 = vunpack.c.l.b16 %v417
    %v433 = vpack.c.b16 %v432, %v431
    %v435 = vshrl.u32 %v433, 16
    %v437 = vshll.u32 %v433, 16
    %v439 = vrot.slane %v437, 1
    %v440 = vor.u32 %v435, %v439
    %v451 = vunpack.c.l.b16 %v419
    %v452 = vunpack.c.l.b16 %v420
    %v453 = vunpack.c.l.b16 %v421
    %v454 = vunpack.c.l.b16 %v422
    %v455 = vunpack.c.l.b16 %v423
    %v456 = vunpack.c.l.b16 %v424
    %v457 = vunpack.c.l.b16 %v425
    %v458 = vunpack.c.l.b16 %v426
    %v459 = vunpack.c.l.b16 %v427
    %v460 = vunpack.c.l.b16 %v428
    %v461 = vpack.c.b16 %v452, %v451
    %v462 = vpack.c.b16 %v454, %v453
    %v463 = vpack.c.b16 %v456, %v455
    %v464 = vpack.c.b16 %v458, %v457
    %v465 = vpack.c.b16 %v460, %v459
    %vm471 = vcmask 654336
    %v473 = vsel %vm471, %v440, 0
    %475 = vmatprep.subr.bf16.mxu0 0
    %476 = vmatpush1.bf16.msra.mxu0 %v461
    %477 = vmatprep.subr.bf16.mxu0 0
    %478 = vmatpush1.bf16.msra.mxu0 %v462
    %479 = vmatprep.subr.bf16.mxu0 0
    %480 = vmatpush1.bf16.msra.mxu0 %v463
    %481 = vmatprep.subr.bf16.mxu0 0
    %482 = vmatpush1.bf16.msra.mxu0 %v464
    %483 = vmatprep.subr.bf16.mxu0 0
    %484 = vmatpush1.bf16.msra.mxu0 %v465
    %485 = vmatprep.subr.bf16.mxu0 0
    %486 = vmatpush1.bf16.msra.mxu0 0
    %487 = vmatprep.subr.bf16.mxu0 0
    %488 = vmatpush1.bf16.msra.mxu0 0
    %489 = vmatprep.subr.bf16.mxu0 0
    %490 = vmatpush1.bf16.msra.mxu0 0
    %491 = vmatprep.subr.bf16.mxu0 0
    %492 = vmatpush1.bf16.msra.mxu0 0
    %493 = vmatprep.subr.bf16.mxu0 0
    %494 = vmatpush1.bf16.msra.mxu0 0
    %495 = vmatprep.subr.bf16.mxu0 0
    %496 = vmatpush1.bf16.msra.mxu0 0
    %497 = vmatprep.subr.bf16.mxu0 0
    %498 = vmatpush1.bf16.msra.mxu0 0
    %499 = vmatprep.subr.bf16.mxu0 0
    %500 = vmatpush1.bf16.msra.mxu0 0
    %501 = vmatprep.subr.bf16.mxu0 0
    %502 = vmatpush1.bf16.msra.mxu0 0
    %503 = vmatprep.subr.bf16.mxu0 0
    %504 = vmatpush1.bf16.msra.mxu0 0
    %505 = vmatprep.subr.bf16.mxu0 0
    %506 = vmatpush1.bf16.msra.mxu0 0
    %507 = vmatprep.mubr.bf16.mxu0 0
    %508 = vmatmul.mubr.bf16.gmra.mrb[0].mxu0 %v473
    %v509 = vpop.f32.mrb[0].mxu0
    %v510 = vadd.f32 0.0, %v509
    %v511 = vpop.f32.mrb[0].mxu0
    %v512 = vpop.f32.mrb[0].mxu0
    %v513 = vpop.f32.mrb[0].mxu0
    %514 = vdwg.mxu0
    %v525 = vunpack.c.l.b16 %v407
    %v526 = vunpack.c.l.b16 %v408
    %v527 = vunpack.c.l.b16 %v409
    %v528 = vunpack.c.l.b16 %v410
    %v529 = vunpack.c.l.b16 %v411
    %v530 = vunpack.c.l.b16 %v412
    %v531 = vunpack.c.l.b16 %v413
    %v532 = vunpack.c.l.b16 %v414
    %v533 = vunpack.c.l.b16 %v415
    %v534 = vunpack.c.l.b16 %v416
    %v535 = vpack.c.b16 %v526, %v525
    %v536 = vpack.c.b16 %v528, %v527
    %v537 = vpack.c.b16 %v530, %v529
    %v538 = vpack.c.b16 %v532, %v531
    %v539 = vpack.c.b16 %v534, %v533
    %v546 = vsel %vm471, %v406, 0
    %548 = vmatprep.subr.bf16.mxu0 0
    %549 = vmatpush1.bf16.msra.mxu0 %v535
    %550 = vmatprep.subr.bf16.mxu0 0
    %551 = vmatpush1.bf16.msra.mxu0 %v536
    %552 = vmatprep.subr.bf16.mxu0 0
    %553 = vmatpush1.bf16.msra.mxu0 %v537
    %554 = vmatprep.subr.bf16.mxu0 0
    %555 = vmatpush1.bf16.msra.mxu0 %v538
    %556 = vmatprep.subr.bf16.mxu0 0
    %557 = vmatpush1.bf16.msra.mxu0 %v539
    %558 = vmatprep.subr.bf16.mxu0 0
    %559 = vmatpush1.bf16.msra.mxu0 0
    %560 = vmatprep.subr.bf16.mxu0 0
    %561 = vmatpush1.bf16.msra.mxu0 0
    %562 = vmatprep.subr.bf16.mxu0 0
    %563 = vmatpush1.bf16.msra.mxu0 0
    %564 = vmatprep.subr.bf16.mxu0 0
    %565 = vmatpush1.bf16.msra.mxu0 0
    %566 = vmatprep.subr.bf16.mxu0 0
    %567 = vmatpush1.bf16.msra.mxu0 0
    %568 = vmatprep.subr.bf16.mxu0 0
    %569 = vmatpush1.bf16.msra.mxu0 0
    %570 = vmatprep.subr.bf16.mxu0 0
    %571 = vmatpush1.bf16.msra.mxu0 0
    %572 = vmatprep.subr.bf16.mxu0 0
    %573 = vmatpush1.bf16.msra.mxu0 0
    %574 = vmatprep.subr.bf16.mxu0 0
    %575 = vmatpush1.bf16.msra.mxu0 0
    %576 = vmatprep.subr.bf16.mxu0 0
    %577 = vmatpush1.bf16.msra.mxu0 0
    %578 = vmatprep.subr.bf16.mxu0 0
    %579 = vmatpush1.bf16.msra.mxu0 0
    %580 = vmatprep.mubr.bf16.mxu0 0
    %581 = vmatmul.mubr.bf16.gmra.mrb[0].mxu0 %v546
    %v582 = vpop.f32.mrb[0].mxu0
    %v583 = vadd.f32 %v510, %v582
    %v584 = vpop.f32.mrb[0].mxu0
    %v585 = vpop.f32.mrb[0].mxu0
    %v586 = vpop.f32.mrb[0].mxu0
    %587 = vdwg.mxu0
    %v588 = vld [vmem:[#allocation2] sm:$0xe]
    %s589 = scalar_lea.vmem %s5, 80
    %v590 = vld [vmem:[%s589] sm:$0xf]
    %v591 = vld [vmem:[%s589 + $0x4] sm:$0xf]
    %v592 = vld [vmem:[%s589 + $0x8] sm:$0xf]
    %v593 = vld [vmem:[%s589 + $0xc] sm:$0xf]
    %v594 = vld [vmem:[%s589 + $0x10] sm:$0xf]
    %v595 = vld [vmem:[%s589 + $0x14] sm:$0xf]
    %v596 = vld [vmem:[%s589 + $0x18] sm:$0xf]
    %v597 = vld [vmem:[%s589 + $0x1c] sm:$0xf]
    %v598 = vld [vmem:[%s589 + $0x20] sm:$0xf]
    %v599 = vld [vmem:[%s589 + $0x24] sm:$0xf]
    %v601 = vunpack.c.l.b16 %v588
    %v602 = vpack.c.b16 %v432, %v601
    %v603 = vrot.slane %v602, 1
    %v614 = vunpack.c.l.b16 %v590
    %v615 = vunpack.c.l.b16 %v591
    %v616 = vunpack.c.l.b16 %v592
    %v617 = vunpack.c.l.b16 %v593
    %v618 = vunpack.c.l.b16 %v594
    %v619 = vunpack.c.l.b16 %v595
    %v620 = vunpack.c.l.b16 %v596
    %v621 = vunpack.c.l.b16 %v597
    %v622 = vunpack.c.l.b16 %v598
    %v623 = vunpack.c.l.b16 %v599
    %v624 = vpack.c.b16 %v615, %v614
    %v625 = vpack.c.b16 %v617, %v616
    %v626 = vpack.c.b16 %v619, %v618
    %v627 = vpack.c.b16 %v621, %v620
    %v628 = vpack.c.b16 %v623, %v622
    %v635 = vsel %vm471, %v603, 0
    %637 = vmatprep.subr.bf16.mxu0 0
    %638 = vmatpush1.bf16.msra.mxu0 %v624
    %639 = vmatprep.subr.bf16.mxu0 0
    %640 = vmatpush1.bf16.msra.mxu0 %v625
    %641 = vmatprep.subr.bf16.mxu0 0
    %642 = vmatpush1.bf16.msra.mxu0 %v626
    %643 = vmatprep.subr.bf16.mxu0 0
    %644 = vmatpush1.bf16.msra.mxu0 %v627
    %645 = vmatprep.subr.bf16.mxu0 0
    %646 = vmatpush1.bf16.msra.mxu0 %v628
    %647 = vmatprep.subr.bf16.mxu0 0
    %648 = vmatpush1.bf16.msra.mxu0 0
    %649 = vmatprep.subr.bf16.mxu0 0
    %650 = vmatpush1.bf16.msra.mxu0 0
    %651 = vmatprep.subr.bf16.mxu0 0
    %652 = vmatpush1.bf16.msra.mxu0 0
    %653 = vmatprep.subr.bf16.mxu0 0
    %654 = vmatpush1.bf16.msra.mxu0 0
    %655 = vmatprep.subr.bf16.mxu0 0
    %656 = vmatpush1.bf16.msra.mxu0 0
    %657 = vmatprep.subr.bf16.mxu0 0
    %658 = vmatpush1.bf16.msra.mxu0 0
    %659 = vmatprep.subr.bf16.mxu0 0
    %660 = vmatpush1.bf16.msra.mxu0 0
    %661 = vmatprep.subr.bf16.mxu0 0
    %662 = vmatpush1.bf16.msra.mxu0 0
    %663 = vmatprep.subr.bf16.mxu0 0
    %664 = vmatpush1.bf16.msra.mxu0 0
    %665 = vmatprep.subr.bf16.mxu0 0
    %666 = vmatpush1.bf16.msra.mxu0 0
    %667 = vmatprep.subr.bf16.mxu0 0
    %668 = vmatpush1.bf16.msra.mxu0 0
    %669 = vmatprep.mubr.bf16.mxu0 0
    %670 = vmatmul.mubr.bf16.gmra.mrb[0].mxu0 %v635
    %v671 = vpop.f32.mrb[0].mxu0
    %v672 = vadd.f32 0.0, %v671
    %v673 = vpop.f32.mrb[0].mxu0
    %v674 = vpop.f32.mrb[0].mxu0
    %v675 = vpop.f32.mrb[0].mxu0
    %676 = vdwg.mxu0
    %v677 = vadd.f32 %v583, %v672
    %v678 = vsel %vm330, %v677, 0.0
    %679 = vadd.xlane.f32.xlu0 %v678
    %v680 = vpop.xlane.xlu0 %679
    %v681 = vrot.slane %v680, 4
    %v682 = vadd.f32 %v680, %v681
    %v683 = vrot.slane %v682, 2
    %v684 = vadd.f32 %v682, %v683
    %v685 = vrot.slane %v684, 1
    %v686 = vadd.f32 %v684, %v685
    %s687 = vtos %v686
    %s688 = smul.f32 %s687, 0.001953125
    %v689 = vmul.f32 %v677, %v677
    %v690 = vsel %vm330, %v689, 0.0
    %691 = vadd.xlane.f32.xlu0 %v690
    %v692 = vpop.xlane.xlu0 %691
    %v693 = vrot.slane %v692, 4
    %v694 = vadd.f32 %v692, %v693
    %v695 = vrot.slane %v694, 2
    %v696 = vadd.f32 %v694, %v695
    %v697 = vrot.slane %v696, 1
    %v698 = vadd.f32 %v696, %v697
    %s699 = vtos %v698
    %s700 = smul.f32 %s699, 0.001953125
    %s701 = smul.f32 %s688, %s688
    %s702 = ssub.f32 %s700, %s701
    %s703 = smax.f32 %s702, 0.0
    %v704 = vstv %s688
    %v705 = vsub.f32 %v677, %v704
    %s706 = sadd.f32 %s703, 1e-05
    %v707 = vstv %s706
    %v708 = vrsqrt.pop %v707
    %s709 = vtos %v708
    %v710 = vstv %s709
    %v711 = vmul.f32 %v705, %v710
    %v712 = vld [vmem:[%s6] sm:$0x1]
    %v714 = vlaneseq
    %v715 = vshrl.u32 %v714, 7
    %v716 = vsub.s32 0, %v715
    %v717 = vrot.slane %v712, %v716
    %v719 = vmul.f32 %v711, %v717
    %v720 = vld [vmem:[%s7] sm:$0x1]
    %v722 = vlaneseq
    %v723 = vshrl.u32 %v722, 7
    %v724 = vsub.s32 0, %v723
    %v725 = vrot.slane %v720, %v724
    %v727 = vadd.f32 %v719, %v725
    %v728 = vld [vmem:[%s1] sm:$0xf]
    %v729 = vld [vmem:[%s8] sm:$0xf]
    %v730 = vld [vmem:[%s8 + $0x4] sm:$0xf]
    %v731 = vld [vmem:[%s8 + $0x8] sm:$0xf]
    %v732 = vld [vmem:[%s8 + $0xc] sm:$0xf]
    %v733 = vld [vmem:[%s8 + $0x10] sm:$0xf]
    %v734 = vld [vmem:[%s8 + $0x14] sm:$0xf]
    %v735 = vld [vmem:[%s8 + $0x18] sm:$0xf]
    %v736 = vld [vmem:[%s8 + $0x1c] sm:$0xf]
    %v737 = vld [vmem:[%s8 + $0x20] sm:$0xf]
    %v747 = vunpack.c.l.b16 %v729
    %v748 = vunpack.c.l.b16 %v730
    %v749 = vunpack.c.l.b16 %v731
    %v750 = vunpack.c.l.b16 %v732
    %v751 = vunpack.c.l.b16 %v733
    %v752 = vunpack.c.l.b16 %v734
    %v753 = vunpack.c.l.b16 %v735
    %v754 = vunpack.c.l.b16 %v736
    %v755 = vunpack.c.l.b16 %v737
    %v756 = vpack.c.b16 %v748, %v747
    %v757 = vpack.c.b16 %v750, %v749
    %v758 = vpack.c.b16 %v752, %v751
    %v759 = vpack.c.b16 %v754, %v753
    %v760 = vpack.c.b16 %v755, %v755
    %v766 = vsel %vm111, %v728, 0
    %v769 = vsel %vm115, %v760, 0
    %771 = vmatprep.subr.bf16.mxu0 0
    %772 = vmatpush1.bf16.msra.mxu0 %v756
    %773 = vmatprep.subr.bf16.mxu0 0
    %774 = vmatpush1.bf16.msra.mxu0 %v757
    %775 = vmatprep.subr.bf16.mxu0 0
    %776 = vmatpush1.bf16.msra.mxu0 %v758
    %777 = vmatprep.subr.bf16.mxu0 0
    %778 = vmatpush1.bf16.msra.mxu0 %v759
    %779 = vmatprep.subr.bf16.mxu0 0
    %780 = vmatpush1.bf16.msra.mxu0 %v769
    %781 = vmatprep.subr.bf16.mxu0 0
    %782 = vmatpush1.bf16.msra.mxu0 0
    %783 = vmatprep.subr.bf16.mxu0 0
    %784 = vmatpush1.bf16.msra.mxu0 0
    %785 = vmatprep.subr.bf16.mxu0 0
    %786 = vmatpush1.bf16.msra.mxu0 0
    %787 = vmatprep.subr.bf16.mxu0 0
    %788 = vmatpush1.bf16.msra.mxu0 0
    %789 = vmatprep.subr.bf16.mxu0 0
    %790 = vmatpush1.bf16.msra.mxu0 0
    %791 = vmatprep.subr.bf16.mxu0 0
    %792 = vmatpush1.bf16.msra.mxu0 0
    %793 = vmatprep.subr.bf16.mxu0 0
    %794 = vmatpush1.bf16.msra.mxu0 0
    %795 = vmatprep.subr.bf16.mxu0 0
    %796 = vmatpush1.bf16.msra.mxu0 0
    %797 = vmatprep.subr.bf16.mxu0 0
    %798 = vmatpush1.bf16.msra.mxu0 0
    %799 = vmatprep.subr.bf16.mxu0 0
    %800 = vmatpush1.bf16.msra.mxu0 0
    %801 = vmatprep.subr.bf16.mxu0 0
    %802 = vmatpush1.bf16.msra.mxu0 0
    %803 = vmatprep.mubr.bf16.mxu0 0
    %804 = vmatmul.mubr.bf16.gmra.mrb[0].mxu0 %v766
    %v805 = vpop.f32.mrb[0].mxu0
    %v806 = vadd.f32 0.0, %v805
    %v807 = vpop.f32.mrb[0].mxu0
    %v808 = vpop.f32.mrb[0].mxu0
    %v809 = vpop.f32.mrb[0].mxu0
    %810 = vdwg.mxu0
    %v811 = vsel %vm330, %v806, 0.0
    %812 = vadd.xlane.f32.xlu0 %v811
    %v813 = vpop.xlane.xlu0 %812
    %v814 = vrot.slane %v813, 4
    %v815 = vadd.f32 %v813, %v814
    %v816 = vrot.slane %v815, 2
    %v817 = vadd.f32 %v815, %v816
    %v818 = vrot.slane %v817, 1
    %v819 = vadd.f32 %v817, %v818
    %s820 = vtos %v819
    %s821 = smul.f32 %s820, 0.001953125
    %v822 = vmul.f32 %v806, %v806
    %v823 = vsel %vm330, %v822, 0.0
    %824 = vadd.xlane.f32.xlu0 %v823
    %v825 = vpop.xlane.xlu0 %824
    %v826 = vrot.slane %v825, 4
    %v827 = vadd.f32 %v825, %v826
    %v828 = vrot.slane %v827, 2
    %v829 = vadd.f32 %v827, %v828
    %v830 = vrot.slane %v829, 1
    %v831 = vadd.f32 %v829, %v830
    %s832 = vtos %v831
    %s833 = smul.f32 %s832, 0.001953125
    %s834 = smul.f32 %s821, %s821
    %s835 = ssub.f32 %s833, %s834
    %s836 = smax.f32 %s835, 0.0
    %v837 = vstv %s821
    %v838 = vsub.f32 %v806, %v837
    %s839 = sadd.f32 %s836, 1e-05
    %v840 = vstv %s839
    %v841 = vrsqrt.pop %v840
    %s842 = vtos %v841
    %v843 = vstv %s842
    %v844 = vmul.f32 %v838, %v843
    %v845 = vld [vmem:[%s9] sm:$0x1]
    %v847 = vlaneseq
    %v848 = vshrl.u32 %v847, 7
    %v849 = vsub.s32 0, %v848
    %v850 = vrot.slane %v845, %v849
    %v852 = vmul.f32 %v844, %v850
    %v853 = vld [vmem:[%s10] sm:$0x1]
    %v855 = vlaneseq
    %v856 = vshrl.u32 %v855, 7
    %v857 = vsub.s32 0, %v856
    %v858 = vrot.slane %v853, %v857
    %v860 = vadd.f32 %v852, %v858
    %v861 = vadd.f32 %v727, %v860
    %v862 = vmax.f32 %v861, 0.0
    %v863 = vpack.c.bf16 %v862, %v862
    %vm864 = vcmask 519168
    %865 = vst.msk [vmem:[#allocation3] sm:$0xf] %vm864, %v863
    %s866 = scalar_lea.vmem %s0, 8
    %v867 = vld [vmem:[%s866] sm:$0xf]
    %v868 = vld [vmem:[%s2] sm:$0xf]
    %v869 = vld [vmem:[%s2 + $0x4] sm:$0xf]
    %v870 = vld [vmem:[%s2 + $0x8] sm:$0xf]
    %v871 = vld [vmem:[%s2 + $0xc] sm:$0xf]
    %v872 = vld [vmem:[%s2 + $0x10] sm:$0xf]
    %v873 = vld [vmem:[%s2 + $0x14] sm:$0xf]
    %v874 = vld [vmem:[%s2 + $0x18] sm:$0xf]
    %v875 = vld [vmem:[%s2 + $0x1c] sm:$0xf]
    %v876 = vld [vmem:[%s2 + $0x20] sm:$0xf]
    %s877 = scalar_lea.vmem %s1, 8
    %v878 = vld [vmem:[%s877] sm:$0xf]
    %v879 = vld [vmem:[%s74] sm:$0xf]
    %v880 = vld [vmem:[%s74 + $0x4] sm:$0xf]
    %v881 = vld [vmem:[%s74 + $0x8] sm:$0xf]
    %v882 = vld [vmem:[%s74 + $0xc] sm:$0xf]
    %v883 = vld [vmem:[%s74 + $0x10] sm:$0xf]
    %v884 = vld [vmem:[%s74 + $0x14] sm:$0xf]
    %v885 = vld [vmem:[%s74 + $0x18] sm:$0xf]
    %v886 = vld [vmem:[%s74 + $0x1c] sm:$0xf]
    %v887 = vld [vmem:[%s74 + $0x20] sm:$0xf]
    %v897 = vunpack.c.l.b16 %v879
    %v898 = vunpack.c.l.b16 %v880
    %v899 = vunpack.c.l.b16 %v881
    %v900 = vunpack.c.l.b16 %v882
    %v901 = vunpack.c.l.b16 %v883
    %v902 = vunpack.c.l.b16 %v884
    %v903 = vunpack.c.l.b16 %v885
    %v904 = vunpack.c.l.b16 %v886
    %v905 = vunpack.c.l.b16 %v887
    %v906 = vpack.c.b16 %v898, %v897
    %v907 = vpack.c.b16 %v900, %v899
    %v908 = vpack.c.b16 %v902, %v901
    %v909 = vpack.c.b16 %v904, %v903
    %v910 = vpack.c.b16 %v905, %v905
    %v916 = vsel %vm111, %v878, 0
    %v919 = vsel %vm115, %v910, 0
    %921 = vmatprep.subr.bf16.mxu0 0
    %922 = vmatpush1.bf16.msra.mxu0 %v906
    %923 = vmatprep.subr.bf16.mxu0 0
    %924 = vmatpush1.bf16.msra.mxu0 %v907
    %925 = vmatprep.subr.bf16.mxu0 0
    %926 = vmatpush1.bf16.msra.mxu0 %v908
    %927 = vmatprep.subr.bf16.mxu0 0
    %928 = vmatpush1.bf16.msra.mxu0 %v909
    %929 = vmatprep.subr.bf16.mxu0 0
    %930 = vmatpush1.bf16.msra.mxu0 %v919
    %931 = vmatprep.subr.bf16.mxu0 0
    %932 = vmatpush1.bf16.msra.mxu0 0
    %933 = vmatprep.subr.bf16.mxu0 0
    %934 = vmatpush1.bf16.msra.mxu0 0
    %935 = vmatprep.subr.bf16.mxu0 0
    %936 = vmatpush1.bf16.msra.mxu0 0
    %937 = vmatprep.subr.bf16.mxu0 0
    %938 = vmatpush1.bf16.msra.mxu0 0
    %939 = vmatprep.subr.bf16.mxu0 0
    %940 = vmatpush1.bf16.msra.mxu0 0
    %941 = vmatprep.subr.bf16.mxu0 0
    %942 = vmatpush1.bf16.msra.mxu0 0
    %943 = vmatprep.subr.bf16.mxu0 0
    %944 = vmatpush1.bf16.msra.mxu0 0
    %945 = vmatprep.subr.bf16.mxu0 0
    %946 = vmatpush1.bf16.msra.mxu0 0
    %947 = vmatprep.subr.bf16.mxu0 0
    %948 = vmatpush1.bf16.msra.mxu0 0
    %949 = vmatprep.subr.bf16.mxu0 0
    %950 = vmatpush1.bf16.msra.mxu0 0
    %951 = vmatprep.subr.bf16.mxu0 0
    %952 = vmatpush1.bf16.msra.mxu0 0
    %953 = vmatprep.mubr.bf16.mxu0 0
    %954 = vmatmul.mubr.bf16.gmra.mrb[0].mxu0 %v916
    %v955 = vpop.f32.mrb[0].mxu0
    %v956 = vadd.f32 0.0, %v955
    %v957 = vpop.f32.mrb[0].mxu0
    %v958 = vpop.f32.mrb[0].mxu0
    %v959 = vpop.f32.mrb[0].mxu0
    %960 = vdwg.mxu0
    %v970 = vunpack.c.l.b16 %v868
    %v971 = vunpack.c.l.b16 %v869
    %v972 = vunpack.c.l.b16 %v870
    %v973 = vunpack.c.l.b16 %v871
    %v974 = vunpack.c.l.b16 %v872
    %v975 = vunpack.c.l.b16 %v873
    %v976 = vunpack.c.l.b16 %v874
    %v977 = vunpack.c.l.b16 %v875
    %v978 = vunpack.c.l.b16 %v876
    %v979 = vpack.c.b16 %v971, %v970
    %v980 = vpack.c.b16 %v973, %v972
    %v981 = vpack.c.b16 %v975, %v974
    %v982 = vpack.c.b16 %v977, %v976
    %v983 = vpack.c.b16 %v978, %v978
    %v989 = vsel %vm111, %v867, 0
    %v992 = vsel %vm115, %v983, 0
    %994 = vmatprep.subr.bf16.mxu0 0
    %995 = vmatpush1.bf16.msra.mxu0 %v979
    %996 = vmatprep.subr.bf16.mxu0 0
    %997 = vmatpush1.bf16.msra.mxu0 %v980
    %998 = vmatprep.subr.bf16.mxu0 0
    %999 = vmatpush1.bf16.msra.mxu0 %v981
    %1000 = vmatprep.subr.bf16.mxu0 0
    %1001 = vmatpush1.bf16.msra.mxu0 %v982
    %1002 = vmatprep.subr.bf16.mxu0 0
    %1003 = vmatpush1.bf16.msra.mxu0 %v992
    %1004 = vmatprep.subr.bf16.mxu0 0
    %1005 = vmatpush1.bf16.msra.mxu0 0
    %1006 = vmatprep.subr.bf16.mxu0 0
    %1007 = vmatpush1.bf16.msra.mxu0 0
    %1008 = vmatprep.subr.bf16.mxu0 0
    %1009 = vmatpush1.bf16.msra.mxu0 0
    %1010 = vmatprep.subr.bf16.mxu0 0
    %1011 = vmatpush1.bf16.msra.mxu0 0
    %1012 = vmatprep.subr.bf16.mxu0 0
    %1013 = vmatpush1.bf16.msra.mxu0 0
    %1014 = vmatprep.subr.bf16.mxu0 0
    %1015 = vmatpush1.bf16.msra.mxu0 0
    %1016 = vmatprep.subr.bf16.mxu0 0
    %1017 = vmatpush1.bf16.msra.mxu0 0
    %1018 = vmatprep.subr.bf16.mxu0 0
    %1019 = vmatpush1.bf16.msra.mxu0 0
    %1020 = vmatprep.subr.bf16.mxu0 0
    %1021 = vmatpush1.bf16.msra.mxu0 0
    %1022 = vmatprep.subr.bf16.mxu0 0
    %1023 = vmatpush1.bf16.msra.mxu0 0
    %1024 = vmatprep.subr.bf16.mxu0 0
    %1025 = vmatpush1.bf16.msra.mxu0 0
    %1026 = vmatprep.mubr.bf16.mxu0 0
    %1027 = vmatmul.mubr.bf16.gmra.mrb[0].mxu0 %v989
    %v1028 = vpop.f32.mrb[0].mxu0
    %v1029 = vadd.f32 %v956, %v1028
    %v1030 = vpop.f32.mrb[0].mxu0
    %v1031 = vpop.f32.mrb[0].mxu0
    %v1032 = vpop.f32.mrb[0].mxu0
    %1033 = vdwg.mxu0
    %v1034 = vld [vmem:[%s866] sm:$0xf]
    %v1035 = vld [vmem:[%s866 + $0x4] sm:$0x1]
    %v1036 = vld [vmem:[%s234] sm:$0xf]
    %v1037 = vld [vmem:[%s234 + $0x4] sm:$0xf]
    %v1038 = vld [vmem:[%s234 + $0x8] sm:$0xf]
    %v1039 = vld [vmem:[%s234 + $0xc] sm:$0xf]
    %v1040 = vld [vmem:[%s234 + $0x10] sm:$0xf]
    %v1041 = vld [vmem:[%s234 + $0x14] sm:$0xf]
    %v1042 = vld [vmem:[%s234 + $0x18] sm:$0xf]
    %v1043 = vld [vmem:[%s234 + $0x1c] sm:$0xf]
    %v1044 = vld [vmem:[%s234 + $0x20] sm:$0xf]
    %v1047 = vunpack.c.l.b16 %v1034
    %v1048 = vunpack.c.l.b16 %v1035
    %v1049 = vpack.c.b16 %v1048, %v1047
    %v1051 = vshrl.u32 %v1049, 16
    %v1053 = vshll.u32 %v1049, 16
    %v1055 = vrot.slane %v1053, 1
    %v1056 = vor.u32 %v1051, %v1055
    %v1066 = vunpack.c.l.b16 %v1036
    %v1067 = vunpack.c.l.b16 %v1037
    %v1068 = vunpack.c.l.b16 %v1038
    %v1069 = vunpack.c.l.b16 %v1039
    %v1070 = vunpack.c.l.b16 %v1040
    %v1071 = vunpack.c.l.b16 %v1041
    %v1072 = vunpack.c.l.b16 %v1042
    %v1073 = vunpack.c.l.b16 %v1043
    %v1074 = vunpack.c.l.b16 %v1044
    %v1075 = vpack.c.b16 %v1067, %v1066
    %v1076 = vpack.c.b16 %v1069, %v1068
    %v1077 = vpack.c.b16 %v1071, %v1070
    %v1078 = vpack.c.b16 %v1073, %v1072
    %v1079 = vpack.c.b16 %v1074, %v1074
    %v1085 = vsel %vm111, %v1056, 0
    %v1088 = vsel %vm115, %v1079, 0
    %1090 = vmatprep.subr.bf16.mxu0 0
    %1091 = vmatpush1.bf16.msra.mxu0 %v1075
    %1092 = vmatprep.subr.bf16.mxu0 0
    %1093 = vmatpush1.bf16.msra.mxu0 %v1076
    %1094 = vmatprep.subr.bf16.mxu0 0
    %1095 = vmatpush1.bf16.msra.mxu0 %v1077
    %1096 = vmatprep.subr.bf16.mxu0 0
    %1097 = vmatpush1.bf16.msra.mxu0 %v1078
    %1098 = vmatprep.subr.bf16.mxu0 0
    %1099 = vmatpush1.bf16.msra.mxu0 %v1088
    %1100 = vmatprep.subr.bf16.mxu0 0
    %1101 = vmatpush1.bf16.msra.mxu0 0
    %1102 = vmatprep.subr.bf16.mxu0 0
    %1103 = vmatpush1.bf16.msra.mxu0 0
    %1104 = vmatprep.subr.bf16.mxu0 0
    %1105 = vmatpush1.bf16.msra.mxu0 0
    %1106 = vmatprep.subr.bf16.mxu0 0
    %1107 = vmatpush1.bf16.msra.mxu0 0
    %1108 = vmatprep.subr.bf16.mxu0 0
    %1109 = vmatpush1.bf16.msra.mxu0 0
    %1110 = vmatprep.subr.bf16.mxu0 0
    %1111 = vmatpush1.bf16.msra.mxu0 0
    %1112 = vmatprep.subr.bf16.mxu0 0
    %1113 = vmatpush1.bf16.msra.mxu0 0
    %1114 = vmatprep.subr.bf16.mxu0 0
    %1115 = vmatpush1.bf16.msra.mxu0 0
    %1116 = vmatprep.subr.bf16.mxu0 0
    %1117 = vmatpush1.bf16.msra.mxu0 0
    %1118 = vmatprep.subr.bf16.mxu0 0
    %1119 = vmatpush1.bf16.msra.mxu0 0
    %1120 = vmatprep.subr.bf16.mxu0 0
    %1121 = vmatpush1.bf16.msra.mxu0 0
    %1122 = vmatprep.mubr.bf16.mxu0 0
    %1123 = vmatmul.mubr.bf16.gmra.mrb[0].mxu0 %v1085
    %v1124 = vpop.f32.mrb[0].mxu0
    %v1125 = vadd.f32 0.0, %v1124
    %v1126 = vpop.f32.mrb[0].mxu0
    %v1127 = vpop.f32.mrb[0].mxu0
    %v1128 = vpop.f32.mrb[0].mxu0
    %1129 = vdwg.mxu0
    %v1130 = vadd.f32 %v1029, %v1125
    %v1131 = vsel %vm330, %v1130, 0.0
    %1132 = vadd.xlane.f32.xlu0 %v1131
    %v1133 = vpop.xlane.xlu0 %1132
    %v1134 = vrot.slane %v1133, 4
    %v1135 = vadd.f32 %v1133, %v1134
    %v1136 = vrot.slane %v1135, 2
    %v1137 = vadd.f32 %v1135, %v1136
    %v1138 = vrot.slane %v1137, 1
    %v1139 = vadd.f32 %v1137, %v1138
    %s1140 = vtos %v1139
    %s1141 = smul.f32 %s1140, 0.001953125
    %v1142 = vmul.f32 %v1130, %v1130
    %v1143 = vsel %vm330, %v1142, 0.0
    %1144 = vadd.xlane.f32.xlu0 %v1143
    %v1145 = vpop.xlane.xlu0 %1144
    %v1146 = vrot.slane %v1145, 4
    %v1147 = vadd.f32 %v1145, %v1146
    %v1148 = vrot.slane %v1147, 2
    %v1149 = vadd.f32 %v1147, %v1148
    %v1150 = vrot.slane %v1149, 1
    %v1151 = vadd.f32 %v1149, %v1150
    %s1152 = vtos %v1151
    %s1153 = smul.f32 %s1152, 0.001953125
    %s1154 = smul.f32 %s1141, %s1141
    %s1155 = ssub.f32 %s1153, %s1154
    %s1156 = smax.f32 %s1155, 0.0
    %v1157 = vstv %s1141
    %v1158 = vsub.f32 %v1130, %v1157
    %s1159 = sadd.f32 %s1156, 1e-05
    %v1160 = vstv %s1159
    %v1161 = vrsqrt.pop %v1160
    %s1162 = vtos %v1161
    %v1163 = vstv %s1162
    %v1164 = vmul.f32 %v1158, %v1163
    %v1165 = vld [vmem:[%s3] sm:$0x1]
    %v1167 = vlaneseq
    %v1168 = vshrl.u32 %v1167, 7
    %v1169 = vsub.s32 0, %v1168
    %v1170 = vrot.slane %v1165, %v1169
    %v1172 = vmul.f32 %v1164, %v1170
    %v1173 = vld [vmem:[%s4] sm:$0x1]
    %v1175 = vlaneseq
    %v1176 = vshrl.u32 %v1175, 7
    %v1177 = vsub.s32 0, %v1176
    %v1178 = vrot.slane %v1173, %v1177
    %v1180 = vadd.f32 %v1172, %v1178
    %v1181 = vmax.f32 %v1180, 0.0
    %v1182 = vpack.c.bf16 %v1181, %v1181
    %v1184 = vunpack.c.l.b16 %v1182
    %v1185 = vpack.c.b16 %v1184, %v1184
    %v1187 = vshrl.u32 %v1185, 16
    %v1189 = vrot.slane %v1187, 7
    %v1190 = vshll.u32 %v1185, 16
    %v1192 = vor.u32 %v1189, %v1190
    %v1193 = vrot.slane %v1189, 4
    %s1196 = scalar_lea.vmem [#allocation2], 8
    %v1197 = vld [vmem:[%s1196] sm:$0xf]
    %v1198 = vsel %vm397, %v1192, %v1197
    %1199 = vst [vmem:[%s1196] sm:$0xf] %v1198
    %v1200 = vld [vmem:[%s1196 + $0x4] sm:$0x1]
    %v1201 = vsel %vm402, %v1193, %v1200
    %1202 = vst [vmem:[%s1196 + $0x4] sm:$0x1] %v1201
    %v1203 = vld [vmem:[%s1196] sm:$0xf]
    %v1204 = vld [vmem:[%s5] sm:$0xf]
    %v1205 = vld [vmem:[%s5 + $0x4] sm:$0xf]
    %v1206 = vld [vmem:[%s5 + $0x8] sm:$0xf]
    %v1207 = vld [vmem:[%s5 + $0xc] sm:$0xf]
    %v1208 = vld [vmem:[%s5 + $0x10] sm:$0xf]
    %v1209 = vld [vmem:[%s5 + $0x14] sm:$0xf]
    %v1210 = vld [vmem:[%s5 + $0x18] sm:$0xf]
    %v1211 = vld [vmem:[%s5 + $0x1c] sm:$0xf]
    %v1212 = vld [vmem:[%s5 + $0x20] sm:$0xf]
    %v1213 = vld [vmem:[%s5 + $0x24] sm:$0xf]
    %v1214 = vld [vmem:[%s1196 + $0x4] sm:$0x1]
    %v1215 = vld [vmem:[%s418] sm:$0xf]
    %v1216 = vld [vmem:[%s418 + $0x4] sm:$0xf]
    %v1217 = vld [vmem:[%s418 + $0x8] sm:$0xf]
    %v1218 = vld [vmem:[%s418 + $0xc] sm:$0xf]
    %v1219 = vld [vmem:[%s418 + $0x10] sm:$0xf]
    %v1220 = vld [vmem:[%s418 + $0x14] sm:$0xf]
    %v1221 = vld [vmem:[%s418 + $0x18] sm:$0xf]
    %v1222 = vld [vmem:[%s418 + $0x1c] sm:$0xf]
    %v1223 = vld [vmem:[%s418 + $0x20] sm:$0xf]
    %v1224 = vld [vmem:[%s418 + $0x24] sm:$0xf]
    %v1227 = vunpack.c.l.b16 %v1203
    %v1228 = vunpack.c.l.b16 %v1214
    %v1229 = vpack.c.b16 %v1228, %v1227
    %v1231 = vshrl.u32 %v1229, 16
    %v1233 = vshll.u32 %v1229, 16
    %v1235 = vrot.slane %v1233, 1
    %v1236 = vor.u32 %v1231, %v1235
    %v1247 = vunpack.c.l.b16 %v1215
    %v1248 = vunpack.c.l.b16 %v1216
    %v1249 = vunpack.c.l.b16 %v1217
    %v1250 = vunpack.c.l.b16 %v1218
    %v1251 = vunpack.c.l.b16 %v1219
    %v1252 = vunpack.c.l.b16 %v1220
    %v1253 = vunpack.c.l.b16 %v1221
    %v1254 = vunpack.c.l.b16 %v1222
    %v1255 = vunpack.c.l.b16 %v1223
    %v1256 = vunpack.c.l.b16 %v1224
    %v1257 = vpack.c.b16 %v1248, %v1247
    %v1258 = vpack.c.b16 %v1250, %v1249
    %v1259 = vpack.c.b16 %v1252, %v1251
    %v1260 = vpack.c.b16 %v1254, %v1253
    %v1261 = vpack.c.b16 %v1256, %v1255
    %v1268 = vsel %vm471, %v1236, 0
    %1270 = vmatprep.subr.bf16.mxu0 0
    %1271 = vmatpush1.bf16.msra.mxu0 %v1257
    %1272 = vmatprep.subr.bf16.mxu0 0
    %1273 = vmatpush1.bf16.msra.mxu0 %v1258
    %1274 = vmatprep.subr.bf16.mxu0 0
    %1275 = vmatpush1.bf16.msra.mxu0 %v1259
    %1276 = vmatprep.subr.bf16.mxu0 0
    %1277 = vmatpush1.bf16.msra.mxu0 %v1260
    %1278 = vmatprep.subr.bf16.mxu0 0
    %1279 = vmatpush1.bf16.msra.mxu0 %v1261
    %1280 = vmatprep.subr.bf16.mxu0 0
    %1281 = vmatpush1.bf16.msra.mxu0 0
    %1282 = vmatprep.subr.bf16.mxu0 0
    %1283 = vmatpush1.bf16.msra.mxu0 0
    %1284 = vmatprep.subr.bf16.mxu0 0
    %1285 = vmatpush1.bf16.msra.mxu0 0
    %1286 = vmatprep.subr.bf16.mxu0 0
    %1287 = vmatpush1.bf16.msra.mxu0 0
    %1288 = vmatprep.subr.bf16.mxu0 0
    %1289 = vmatpush1.bf16.msra.mxu0 0
    %1290 = vmatprep.subr.bf16.mxu0 0
    %1291 = vmatpush1.bf16.msra.mxu0 0
    %1292 = vmatprep.subr.bf16.mxu0 0
    %1293 = vmatpush1.bf16.msra.mxu0 0
    %1294 = vmatprep.subr.bf16.mxu0 0
    %1295 = vmatpush1.bf16.msra.mxu0 0
    %1296 = vmatprep.subr.bf16.mxu0 0
    %1297 = vmatpush1.bf16.msra.mxu0 0
    %1298 = vmatprep.subr.bf16.mxu0 0
    %1299 = vmatpush1.bf16.msra.mxu0 0
    %1300 = vmatprep.subr.bf16.mxu0 0
    %1301 = vmatpush1.bf16.msra.mxu0 0
    %1302 = vmatprep.mubr.bf16.mxu0 0
    %1303 = vmatmul.mubr.bf16.gmra.mrb[0].mxu0 %v1268
    %v1304 = vpop.f32.mrb[0].mxu0
    %v1305 = vadd.f32 0.0, %v1304
    %v1306 = vpop.f32.mrb[0].mxu0
    %v1307 = vpop.f32.mrb[0].mxu0
    %v1308 = vpop.f32.mrb[0].mxu0
    %1309 = vdwg.mxu0
    %v1320 = vunpack.c.l.b16 %v1204
    %v1321 = vunpack.c.l.b16 %v1205
    %v1322 = vunpack.c.l.b16 %v1206
    %v1323 = vunpack.c.l.b16 %v1207
    %v1324 = vunpack.c.l.b16 %v1208
    %v1325 = vunpack.c.l.b16 %v1209
    %v1326 = vunpack.c.l.b16 %v1210
    %v1327 = vunpack.c.l.b16 %v1211
    %v1328 = vunpack.c.l.b16 %v1212
    %v1329 = vunpack.c.l.b16 %v1213
    %v1330 = vpack.c.b16 %v1321, %v1320
    %v1331 = vpack.c.b16 %v1323, %v1322
    %v1332 = vpack.c.b16 %v1325, %v1324
    %v1333 = vpack.c.b16 %v1327, %v1326
    %v1334 = vpack.c.b16 %v1329, %v1328
    %v1341 = vsel %vm471, %v1203, 0
    %1343 = vmatprep.subr.bf16.mxu0 0
    %1344 = vmatpush1.bf16.msra.mxu0 %v1330
    %1345 = vmatprep.subr.bf16.mxu0 0
    %1346 = vmatpush1.bf16.msra.mxu0 %v1331
    %1347 = vmatprep.subr.bf16.mxu0 0
    %1348 = vmatpush1.bf16.msra.mxu0 %v1332
    %1349 = vmatprep.subr.bf16.mxu0 0
    %1350 = vmatpush1.bf16.msra.mxu0 %v1333
    %1351 = vmatprep.subr.bf16.mxu0 0
    %1352 = vmatpush1.bf16.msra.mxu0 %v1334
    %1353 = vmatprep.subr.bf16.mxu0 0
    %1354 = vmatpush1.bf16.msra.mxu0 0
    %1355 = vmatprep.subr.bf16.mxu0 0
    %1356 = vmatpush1.bf16.msra.mxu0 0
    %1357 = vmatprep.subr.bf16.mxu0 0
    %1358 = vmatpush1.bf16.msra.mxu0 0
    %1359 = vmatprep.subr.bf16.mxu0 0
    %1360 = vmatpush1.bf16.msra.mxu0 0
    %1361 = vmatprep.subr.bf16.mxu0 0
    %1362 = vmatpush1.bf16.msra.mxu0 0
    %1363 = vmatprep.subr.bf16.mxu0 0
    %1364 = vmatpush1.bf16.msra.mxu0 0
    %1365 = vmatprep.subr.bf16.mxu0 0
    %1366 = vmatpush1.bf16.msra.mxu0 0
    %1367 = vmatprep.subr.bf16.mxu0 0
    %1368 = vmatpush1.bf16.msra.mxu0 0
    %1369 = vmatprep.subr.bf16.mxu0 0
    %1370 = vmatpush1.bf16.msra.mxu0 0
    %1371 = vmatprep.subr.bf16.mxu0 0
    %1372 = vmatpush1.bf16.msra.mxu0 0
    %1373 = vmatprep.subr.bf16.mxu0 0
    %1374 = vmatpush1.bf16.msra.mxu0 0
    %1375 = vmatprep.mubr.bf16.mxu0 0
    %1376 = vmatmul.mubr.bf16.gmra.mrb[0].mxu0 %v1341
    %v1377 = vpop.f32.mrb[0].mxu0
    %v1378 = vadd.f32 %v1305, %v1377
    %v1379 = vpop.f32.mrb[0].mxu0
    %v1380 = vpop.f32.mrb[0].mxu0
    %v1381 = vpop.f32.mrb[0].mxu0
    %1382 = vdwg.mxu0
    %v1383 = vld [vmem:[%s1196] sm:$0xe]
    %v1384 = vld [vmem:[%s589] sm:$0xf]
    %v1385 = vld [vmem:[%s589 + $0x4] sm:$0xf]
    %v1386 = vld [vmem:[%s589 + $0x8] sm:$0xf]
    %v1387 = vld [vmem:[%s589 + $0xc] sm:$0xf]
    %v1388 = vld [vmem:[%s589 + $0x10] sm:$0xf]
    %v1389 = vld [vmem:[%s589 + $0x14] sm:$0xf]
    %v1390 = vld [vmem:[%s589 + $0x18] sm:$0xf]
    %v1391 = vld [vmem:[%s589 + $0x1c] sm:$0xf]
    %v1392 = vld [vmem:[%s589 + $0x20] sm:$0xf]
    %v1393 = vld [vmem:[%s589 + $0x24] sm:$0xf]
    %v1395 = vunpack.c.l.b16 %v1383
    %v1396 = vpack.c.b16 %v1228, %v1395
    %v1397 = vrot.slane %v1396, 1
    %v1408 = vunpack.c.l.b16 %v1384
    %v1409 = vunpack.c.l.b16 %v1385
    %v1410 = vunpack.c.l.b16 %v1386
    %v1411 = vunpack.c.l.b16 %v1387
    %v1412 = vunpack.c.l.b16 %v1388
    %v1413 = vunpack.c.l.b16 %v1389
    %v1414 = vunpack.c.l.b16 %v1390
    %v1415 = vunpack.c.l.b16 %v1391
    %v1416 = vunpack.c.l.b16 %v1392
    %v1417 = vunpack.c.l.b16 %v1393
    %v1418 = vpack.c.b16 %v1409, %v1408
    %v1419 = vpack.c.b16 %v1411, %v1410
    %v1420 = vpack.c.b16 %v1413, %v1412
    %v1421 = vpack.c.b16 %v1415, %v1414
    %v1422 = vpack.c.b16 %v1417, %v1416
    %v1429 = vsel %vm471, %v1397, 0
    %1431 = vmatprep.subr.bf16.mxu0 0
    %1432 = vmatpush1.bf16.msra.mxu0 %v1418
    %1433 = vmatprep.subr.bf16.mxu0 0
    %1434 = vmatpush1.bf16.msra.mxu0 %v1419
    %1435 = vmatprep.subr.bf16.mxu0 0
    %1436 = vmatpush1.bf16.msra.mxu0 %v1420
    %1437 = vmatprep.subr.bf16.mxu0 0
    %1438 = vmatpush1.bf16.msra.mxu0 %v1421
    %1439 = vmatprep.subr.bf16.mxu0 0
    %1440 = vmatpush1.bf16.msra.mxu0 %v1422
    %1441 = vmatprep.subr.bf16.mxu0 0
    %1442 = vmatpush1.bf16.msra.mxu0 0
    %1443 = vmatprep.subr.bf16.mxu0 0
    %1444 = vmatpush1.bf16.msra.mxu0 0
    %1445 = vmatprep.subr.bf16.mxu0 0
    %1446 = vmatpush1.bf16.msra.mxu0 0
    %1447 = vmatprep.subr.bf16.mxu0 0
    %1448 = vmatpush1.bf16.msra.mxu0 0
    %1449 = vmatprep.subr.bf16.mxu0 0
    %1450 = vmatpush1.bf16.msra.mxu0 0
    %1451 = vmatprep.subr.bf16.mxu0 0
    %1452 = vmatpush1.bf16.msra.mxu0 0
    %1453 = vmatprep.subr.bf16.mxu0 0
    %1454 = vmatpush1.bf16.msra.mxu0 0
    %1455 = vmatprep.subr.bf16.mxu0 0
    %1456 = vmatpush1.bf16.msra.mxu0 0
    %1457 = vmatprep.subr.bf16.mxu0 0
    %1458 = vmatpush1.bf16.msra.mxu0 0
    %1459 = vmatprep.subr.bf16.mxu0 0
    %1460 = vmatpush1.bf16.msra.mxu0 0
    %1461 = vmatprep.subr.bf16.mxu0 0
    %1462 = vmatpush1.bf16.msra.mxu0 0
    %1463 = vmatprep.mubr.bf16.mxu0 0
    %1464 = vmatmul.mubr.bf16.gmra.mrb[0].mxu0 %v1429
    %v1465 = vpop.f32.mrb[0].mxu0
    %v1466 = vadd.f32 0.0, %v1465
    %v1467 = vpop.f32.mrb[0].mxu0
    %v1468 = vpop.f32.mrb[0].mxu0
    %v1469 = vpop.f32.mrb[0].mxu0
    %1470 = vdwg.mxu0
    %v1471 = vadd.f32 %v1378, %v1466
    %v1472 = vsel %vm330, %v1471, 0.0
    %1473 = vadd.xlane.f32.xlu0 %v1472
    %v1474 = vpop.xlane.xlu0 %1473
    %v1475 = vrot.slane %v1474, 4
    %v1476 = vadd.f32 %v1474, %v1475
    %v1477 = vrot.slane %v1476, 2
    %v1478 = vadd.f32 %v1476, %v1477
    %v1479 = vrot.slane %v1478, 1
    %v1480 = vadd.f32 %v1478, %v1479
    %s1481 = vtos %v1480
    %s1482 = smul.f32 %s1481, 0.001953125
    %v1483 = vmul.f32 %v1471, %v1471
    %v1484 = vsel %vm330, %v1483, 0.0
    %1485 = vadd.xlane.f32.xlu0 %v1484
    %v1486 = vpop.xlane.xlu0 %1485
    %v1487 = vrot.slane %v1486, 4
    %v1488 = vadd.f32 %v1486, %v1487
    %v1489 = vrot.slane %v1488, 2
    %v1490 = vadd.f32 %v1488, %v1489
    %v1491 = vrot.slane %v1490, 1
    %v1492 = vadd.f32 %v1490, %v1491
    %s1493 = vtos %v1492
    %s1494 = smul.f32 %s1493, 0.001953125
    %s1495 = smul.f32 %s1482, %s1482
    %s1496 = ssub.f32 %s1494, %s1495
    %s1497 = smax.f32 %s1496, 0.0
    %v1498 = vstv %s1482
    %v1499 = vsub.f32 %v1471, %v1498
    %s1500 = sadd.f32 %s1497, 1e-05
    %v1501 = vstv %s1500
    %v1502 = vrsqrt.pop %v1501
    %s1503 = vtos %v1502
    %v1504 = vstv %s1503
    %v1505 = vmul.f32 %v1499, %v1504
    %v1506 = vld [vmem:[%s6] sm:$0x1]
    %v1508 = vlaneseq
    %v1509 = vshrl.u32 %v1508, 7
    %v1510 = vsub.s32 0, %v1509
    %v1511 = vrot.slane %v1506, %v1510
    %v1513 = vmul.f32 %v1505, %v1511
    %v1514 = vld [vmem:[%s7] sm:$0x1]
    %v1516 = vlaneseq
    %v1517 = vshrl.u32 %v1516, 7
    %v1518 = vsub.s32 0, %v1517
    %v1519 = vrot.slane %v1514, %v1518
    %v1521 = vadd.f32 %v1513, %v1519
    %v1522 = vld [vmem:[%s877] sm:$0xf]
    %v1523 = vld [vmem:[%s8] sm:$0xf]
    %v1524 = vld [vmem:[%s8 + $0x4] sm:$0xf]
    %v1525 = vld [vmem:[%s8 + $0x8] sm:$0xf]
    %v1526 = vld [vmem:[%s8 + $0xc] sm:$0xf]
    %v1527 = vld [vmem:[%s8 + $0x10] sm:$0xf]
    %v1528 = vld [vmem:[%s8 + $0x14] sm:$0xf]
    %v1529 = vld [vmem:[%s8 + $0x18] sm:$0xf]
    %v1530 = vld [vmem:[%s8 + $0x1c] sm:$0xf]
    %v1531 = vld [vmem:[%s8 + $0x20] sm:$0xf]
    %v1541 = vunpack.c.l.b16 %v1523
    %v1542 = vunpack.c.l.b16 %v1524
    %v1543 = vunpack.c.l.b16 %v1525
    %v1544 = vunpack.c.l.b16 %v1526
    %v1545 = vunpack.c.l.b16 %v1527
    %v1546 = vunpack.c.l.b16 %v1528
    %v1547 = vunpack.c.l.b16 %v1529
    %v1548 = vunpack.c.l.b16 %v1530
    %v1549 = vunpack.c.l.b16 %v1531
    %v1550 = vpack.c.b16 %v1542, %v1541
    %v1551 = vpack.c.b16 %v1544, %v1543
    %v1552 = vpack.c.b16 %v1546, %v1545
    %v1553 = vpack.c.b16 %v1548, %v1547
    %v1554 = vpack.c.b16 %v1549, %v1549
    %v1560 = vsel %vm111, %v1522, 0
    %v1563 = vsel %vm115, %v1554, 0
    %1565 = vmatprep.subr.bf16.mxu0 0
    %1566 = vmatpush1.bf16.msra.mxu0 %v1550
    %1567 = vmatprep.subr.bf16.mxu0 0
    %1568 = vmatpush1.bf16.msra.mxu0 %v1551
    %1569 = vmatprep.subr.bf16.mxu0 0
    %1570 = vmatpush1.bf16.msra.mxu0 %v1552
    %1571 = vmatprep.subr.bf16.mxu0 0
    %1572 = vmatpush1.bf16.msra.mxu0 %v1553
    %1573 = vmatprep.subr.bf16.mxu0 0
    %1574 = vmatpush1.bf16.msra.mxu0 %v1563
    %1575 = vmatprep.subr.bf16.mxu0 0
    %1576 = vmatpush1.bf16.msra.mxu0 0
    %1577 = vmatprep.subr.bf16.mxu0 0
    %1578 = vmatpush1.bf16.msra.mxu0 0
    %1579 = vmatprep.subr.bf16.mxu0 0
    %1580 = vmatpush1.bf16.msra.mxu0 0
    %1581 = vmatprep.subr.bf16.mxu0 0
    %1582 = vmatpush1.bf16.msra.mxu0 0
    %1583 = vmatprep.subr.bf16.mxu0 0
    %1584 = vmatpush1.bf16.msra.mxu0 0
    %1585 = vmatprep.subr.bf16.mxu0 0
    %1586 = vmatpush1.bf16.msra.mxu0 0
    %1587 = vmatprep.subr.bf16.mxu0 0
    %1588 = vmatpush1.bf16.msra.mxu0 0
    %1589 = vmatprep.subr.bf16.mxu0 0
    %1590 = vmatpush1.bf16.msra.mxu0 0
    %1591 = vmatprep.subr.bf16.mxu0 0
    %1592 = vmatpush1.bf16.msra.mxu0 0
    %1593 = vmatprep.subr.bf16.mxu0 0
    %1594 = vmatpush1.bf16.msra.mxu0 0
    %1595 = vmatprep.subr.bf16.mxu0 0
    %1596 = vmatpush1.bf16.msra.mxu0 0
    %1597 = vmatprep.mubr.bf16.mxu0 0
    %1598 = vmatmul.mubr.bf16.gmra.mrb[0].mxu0 %v1560
    %v1599 = vpop.f32.mrb[0].mxu0
    %v1600 = vadd.f32 0.0, %v1599
    %v1601 = vpop.f32.mrb[0].mxu0
    %v1602 = vpop.f32.mrb[0].mxu0
    %v1603 = vpop.f32.mrb[0].mxu0
    %1604 = vdwg.mxu0
    %v1605 = vsel %vm330, %v1600, 0.0
    %1606 = vadd.xlane.f32.xlu0 %v1605
    %v1607 = vpop.xlane.xlu0 %1606
    %v1608 = vrot.slane %v1607, 4
    %v1609 = vadd.f32 %v1607, %v1608
    %v1610 = vrot.slane %v1609, 2
    %v1611 = vadd.f32 %v1609, %v1610
    %v1612 = vrot.slane %v1611, 1
    %v1613 = vadd.f32 %v1611, %v1612
    %s1614 = vtos %v1613
    %s1615 = smul.f32 %s1614, 0.001953125
    %v1616 = vmul.f32 %v1600, %v1600
    %v1617 = vsel %vm330, %v1616, 0.0
    %1618 = vadd.xlane.f32.xlu0 %v1617
    %v1619 = vpop.xlane.xlu0 %1618
    %v1620 = vrot.slane %v1619, 4
    %v1621 = vadd.f32 %v1619, %v1620
    %v1622 = vrot.slane %v1621, 2
    %v1623 = vadd.f32 %v1621, %v1622
    %v1624 = vrot.slane %v1623, 1
    %v1625 = vadd.f32 %v1623, %v1624
    %s1626 = vtos %v1625
    %s1627 = smul.f32 %s1626, 0.001953125
    %s1628 = smul.f32 %s1615, %s1615
    %s1629 = ssub.f32 %s1627, %s1628
    %s1630 = smax.f32 %s1629, 0.0
    %v1631 = vstv %s1615
    %v1632 = vsub.f32 %v1600, %v1631
    %s1633 = sadd.f32 %s1630, 1e-05
    %v1634 = vstv %s1633
    %v1635 = vrsqrt.pop %v1634
    %s1636 = vtos %v1635
    %v1637 = vstv %s1636
    %v1638 = vmul.f32 %v1632, %v1637
    %v1639 = vld [vmem:[%s9] sm:$0x1]
    %v1641 = vlaneseq
    %v1642 = vshrl.u32 %v1641, 7
    %v1643 = vsub.s32 0, %v1642
    %v1644 = vrot.slane %v1639, %v1643
    %v1646 = vmul.f32 %v1638, %v1644
    %v1647 = vld [vmem:[%s10] sm:$0x1]
    %v1649 = vlaneseq
    %v1650 = vshrl.u32 %v1649, 7
    %v1651 = vsub.s32 0, %v1650
    %v1652 = vrot.slane %v1647, %v1651
    %v1654 = vadd.f32 %v1646, %v1652
    %v1655 = vadd.f32 %v1521, %v1654
    %v1656 = vmax.f32 %v1655, 0.0
    %v1657 = vpack.c.bf16 %v1656, %v1656
    %s1658 = scalar_lea.vmem [#allocation3], 4
    %1659 = vst.msk [vmem:[%s1658] sm:$0xf] %vm864, %v1657
    // Predicated region
    $region46: #{tpu_custom_call.1} parent=1 // pred_check
      _
    $region47: #{tpu_custom_call.1} parent=1 // pred_check_branch
      %1661 = sbr.rel (0) target = $region49
    $region48: #{tpu_custom_call.1} parent=1 // pred_region
      %s1663 = ssub.s32 128, 128
      %1664 = vsyncadd [#allocation4], %s1663
      %s1665 = sshll.u32 [#allocation3], 4
      %s1666 = int_to_ptr.vmem [resolvable:$true] %s1665
      %1671 = dma.vmem_to_hbm [thread:$0]  %s1666, 128, %s11, [#allocation4], 64, 64, 4
    $region49: #{tpu_custom_call.1} parent=1 // pred_fallthru
      _
    // Predicated region
    $region50: #{tpu_custom_call.1} parent=1 // pred_check
      _
    $region51: #{tpu_custom_call.1} parent=1 // pred_check_branch
      %1673 = sbr.rel (0) target = $region53
    $region52: #{tpu_custom_call.1} parent=1 // pred_region
      %1674 = dma.done [#allocation4], 128
    $region53: #{tpu_custom_call.1} parent=1 // pred_fallthru
      _
    %1675 = vsyncpa [#allocation4], 1

</llo_original>
